<compile_context>
chip_gen: v7x
topology: tpu7x:2x2x1
jax: 0.10.0
libtpu: 0.0.40
codegen_flags: <defaults>
</compile_context>

<pallas_src>
import jax
import jax.numpy as jnp
from jax.experimental import pallas as pl
from jax.experimental.pallas import tpu as pltpu

IN_DIM = 1690
IN_PAD = 1792          # 14 * 128: full-width MXU K passes for layer 1
H1, H2 = 512, 256
H3 = 64
H3_PAD = 128           # lane-dense h3 / full-width K for layer 4
OUT_DIM = 10
OUT_PAD = 128          # lane-dense output tile; sliced back to 10 in wrapper


def _round_up(n, m):
    return ((n + m - 1) // m) * m


def _choose_tb(B):
    """Batch-tile size: multiple of 8 (sublane), <=512 rows, and whenever the
    batch allows it split into >=2 grid steps so v7x megacore can shard it."""
    if B <= 8:
        return _round_up(max(B, 1), 8)
    half = _round_up((B + 1) // 2, 8)   # at least two steps
    return min(512, half)


def mlp_kernel(x_ref, w1_ref, b1_ref, w2_ref, b2_ref, w3_ref, b3_ref,
               w4_ref, b4_ref, out_ref):
    # One batch tile per grid step. Weights/biases are VMEM-resident across
    # the whole grid (their index_maps always return block (0, 0)).
    x = x_ref[...]                                              # (TB, IN_PAD) bf16

    h1 = jnp.dot(x, w1_ref[...], preferred_element_type=jnp.float32) + b1_ref[...]
    h1 = jnp.maximum(h1, 0.0).astype(jnp.bfloat16)              # ReLU (dropout = identity)

    h2 = jnp.dot(h1, w2_ref[...], preferred_element_type=jnp.float32) + b2_ref[...]
    h2 = jnp.maximum(h2, 0.0).astype(jnp.bfloat16)

    h3 = jnp.dot(h2, w3_ref[...], preferred_element_type=jnp.float32) + b3_ref[...]
    h3 = jnp.maximum(h3, 0.0).astype(jnp.bfloat16)              # (TB, H3_PAD), padded cols are 0

    logits = jnp.dot(h3, w4_ref[...], preferred_element_type=jnp.float32) + b4_ref[...]
    out_ref[...] = logits.astype(out_ref.dtype)                 # (TB, OUT_PAD)


def prepare_params(params):
    """One-time prep: cast weights to bf16 and zero-pad to MXU-friendly shapes.

    Call once and reuse the result for every mlp_forward call; this keeps the
    per-call path free of weight cast/pad HBM traffic.
    """
    (w1, b1), (w2, b2), (w3, b3), (w4, b4) = params

    w1_p = jnp.pad(w1.astype(jnp.bfloat16), ((0, IN_PAD - IN_DIM), (0, 0)))      # (1792, 512)
    w2_b = w2.astype(jnp.bfloat16)                                               # (512, 256)
    w3_p = jnp.pad(w3.astype(jnp.bfloat16), ((0, 0), (0, H3_PAD - H3)))          # (256, 128)
    w4_p = jnp.pad(w4.astype(jnp.bfloat16),
                   ((0, H3_PAD - H3), (0, OUT_PAD - OUT_DIM)))                   # (128, 128)

    b1_f = b1.astype(jnp.float32)                                                # (1, 512)
    b2_f = b2.astype(jnp.float32)                                                # (1, 256)
    b3_p = jnp.pad(b3.astype(jnp.float32), ((0, 0), (0, H3_PAD - H3)))           # (1, 128)
    b4_p = jnp.pad(b4.astype(jnp.float32), ((0, 0), (0, OUT_PAD - OUT_DIM)))     # (1, 128)

    return (w1_p, b1_f, w2_b, b2_f, w3_p, b3_p, w4_p, b4_p)


def mlp_forward(x, prepared_params):
    """x: (B, 13, 130) or (B, 1690). prepared_params: output of prepare_params.
    Returns (B, 10) f32 logits."""
    B = x.shape[0]
    x2d = x.reshape(B, -1)
    assert x2d.shape[1] == IN_DIM, f"expected {IN_DIM} features, got {x2d.shape[1]}"

    TB = _choose_tb(B)
    B_pad = _round_up(B, TB)
    grid = (B_pad // TB,)

    (w1_p, b1_f, w2_b, b2_f, w3_p, b3_p, w4_p, b4_p) = prepared_params

    # bf16 input, padded in one fused pad (rows to B_pad, features to IN_PAD).
    x_p = jnp.pad(x2d.astype(jnp.bfloat16),
                  ((0, B_pad - B), (0, IN_PAD - IN_DIM)))

    # Weight/bias specs always map to block (0, 0): resident across grid steps.
    resident = lambda shape: pl.BlockSpec(shape, lambda i: (0, 0))
    in_specs = [
        pl.BlockSpec((TB, IN_PAD), lambda i: (i, 0)),   # x tile streams per step
        resident((IN_PAD, H1)),  resident((1, H1)),
        resident((H1, H2)),      resident((1, H2)),
        resident((H2, H3_PAD)),  resident((1, H3_PAD)),
        resident((H3_PAD, OUT_PAD)), resident((1, OUT_PAD)),
    ]
    out_specs = pl.BlockSpec((TB, OUT_PAD), lambda i: (i, 0))

    flops = 2 * B_pad * (IN_PAD * H1 + H1 * H2 + H2 * H3_PAD + H3_PAD * OUT_PAD)
    weight_bytes = 2 * (IN_PAD * H1 + H1 * H2 + H2 * H3_PAD + H3_PAD * OUT_PAD)   # bf16
    bias_bytes = 4 * (H1 + H2 + H3_PAD + OUT_PAD)
    io_bytes = B_pad * (IN_PAD * 2 + OUT_PAD * 4)
    cost = pl.CostEstimate(flops=flops, transcendentals=0,
                           bytes_accessed=weight_bytes + bias_bytes + io_bytes)

    out_padded = pl.pallas_call(
        mlp_kernel,
        out_shape=jax.ShapeDtypeStruct((B_pad, OUT_PAD), jnp.float32),
        grid=grid,
        in_specs=in_specs,
        out_specs=out_specs,
        compiler_params=pltpu.CompilerParams(
            dimension_semantics=("parallel",),   # megacore split of batch on v7x
            vmem_limit_bytes=32 << 20,           # footprint <~12 MiB even at TB=512
        ),
        cost_estimate=cost,
    )(x_p, w1_p, b1_f, w2_b, b2_f, w3_p, b3_p, w4_p, b4_p)

    return out_padded[:B, :OUT_DIM]


def init_params(key):
    """Deterministic init. Weights stored as (in, out); biases as (1, out)."""
    dims = [(IN_DIM, H1), (H1, H2), (H2, H3), (H3, OUT_DIM)]
    params = []
    for i, (din, dout) in enumerate(dims):
        kw, kb = jax.random.split(jax.random.fold_in(key, i))
        bound = 1.0 / jnp.sqrt(din)             # matches nn.Linear default init
        w = jax.random.uniform(kw, (din, dout), jnp.float32, -bound, bound)
        b = jax.random.uniform(kb, (1, dout), jnp.float32, -bound, bound)
        params.append((w, b))
    return params


def reference_forward(x, params):
    """Pure-JAX f32 reference (eval-mode dropout = identity)."""
    B = x.shape[0]
    h = x.reshape(B, -1).astype(jnp.float32)
    for i, (w, b) in enumerate(params):
        h = h @ w + b
        if i < len(params) - 1:
            h = jnp.maximum(h, 0.0)
    return h


if __name__ == "__main__":
    key = jax.random.PRNGKey(0)
    kx, kp = jax.random.split(key)

    # Small MFCC-style input: batch=2, 13 coeffs x 130 frames -> 1690 features.
    x = jax.random.normal(kx, (2, 13, 130), dtype=jnp.float32)
    params = init_params(kp)

    # One-time parameter prep (cast/pad hoisted out of the per-call path).
    prepared = jax.tree_util.tree_map(jax.block_until_ready, prepare_params(params))

    out = mlp_forward(x, prepared)
    out = jax.block_until_ready(out)

    ref = reference_forward(x, params)
    assert out.shape == (2, 10), out.shape
    # bf16 weights/activations vs f32 reference -> loosened tolerance.
    assert jnp.allclose(out, ref, atol=5e-2, rtol=5e-2), "mismatch vs reference"

    # Also exercise the multi-tile path (grid >= 2) to check batch tiling.
    xb = jax.random.normal(jax.random.fold_in(kx, 1), (37, 13, 130), dtype=jnp.float32)
    outb = jax.block_until_ready(mlp_forward(xb, prepared))
    refb = reference_forward(xb, params)
    assert outb.shape == (37, 10), outb.shape
    assert jnp.allclose(outb, refb, atol=5e-2, rtol=5e-2), "mismatch vs reference (batched)"

    print("KERNEL_OK")
</pallas_src>

<mosaic_0001>
module attributes {stable_mosaic.version = 11 : i64} {
  func.func @mlp_kernel(%arg0: i32, %arg1: memref<8x1792xbf16, #tpu.memory_space<vmem>>, %arg2: memref<1792x512xbf16, #tpu.memory_space<vmem>>, %arg3: memref<1x512xf32, #tpu.memory_space<vmem>>, %arg4: memref<512x256xbf16, #tpu.memory_space<vmem>>, %arg5: memref<1x256xf32, #tpu.memory_space<vmem>>, %arg6: memref<256x128xbf16, #tpu.memory_space<vmem>>, %arg7: memref<1x128xf32, #tpu.memory_space<vmem>>, %arg8: memref<128x128xbf16, #tpu.memory_space<vmem>>, %arg9: memref<1x128xf32, #tpu.memory_space<vmem>>, %arg10: memref<8x128xf32, #tpu.memory_space<vmem>>) attributes {dimension_semantics = [#tpu.dimension_semantics<parallel>], iteration_bounds = array<i64: 1>, scalar_prefetch = 0 : i64, scratch_operands = 0 : i64, tpu.core_type = #tpu.core_type<tc>, window_params = [{transform_indices = @transform_0, window_bounds = array<i64: 8, 1792>}, {pipeline_mode = #tpu.pipeline_mode<synchronous>, transform_indices = @transform_1, window_bounds = array<i64: 1792, 512>}, {pipeline_mode = #tpu.pipeline_mode<synchronous>, transform_indices = @transform_2, window_bounds = array<i64: 1, 512>}, {pipeline_mode = #tpu.pipeline_mode<synchronous>, transform_indices = @transform_3, window_bounds = array<i64: 512, 256>}, {pipeline_mode = #tpu.pipeline_mode<synchronous>, transform_indices = @transform_4, window_bounds = array<i64: 1, 256>}, {pipeline_mode = #tpu.pipeline_mode<synchronous>, transform_indices = @transform_5, window_bounds = array<i64: 256, 128>}, {pipeline_mode = #tpu.pipeline_mode<synchronous>, transform_indices = @transform_6, window_bounds = array<i64: 1, 128>}, {pipeline_mode = #tpu.pipeline_mode<synchronous>, transform_indices = @transform_7, window_bounds = array<i64: 128, 128>}, {pipeline_mode = #tpu.pipeline_mode<synchronous>, transform_indices = @transform_8, window_bounds = array<i64: 1, 128>}, {transform_indices = @transform_9, window_bounds = array<i64: 8, 128>}]} {
    %c0 = arith.constant 0 : index
    %c0_0 = arith.constant 0 : index
    %0 = vector.load %arg1[%c0, %c0_0] : memref<8x1792xbf16, #tpu.memory_space<vmem>>, vector<8x1792xbf16>
    %c0_1 = arith.constant 0 : index
    %c0_2 = arith.constant 0 : index
    %1 = vector.load %arg2[%c0_1, %c0_2] : memref<1792x512xbf16, #tpu.memory_space<vmem>>, vector<1792x512xbf16>
    %cst = arith.constant dense<0.000000e+00> : vector<8x512xf32>
    %2 = tpu.matmul %0, %1, %cst {dimension_numbers = #tpu.dot_dimension_numbers<[1], [0], [0], [1], [0, 0, 1, 1], [], []>} : vector<8x1792xbf16>, vector<1792x512xbf16>, vector<8x512xf32> -> vector<8x512xf32>
    %c0_3 = arith.constant 0 : index
    %c0_4 = arith.constant 0 : index
    %3 = vector.load %arg3[%c0_3, %c0_4] : memref<1x512xf32, #tpu.memory_space<vmem>>, vector<1x512xf32>
    %4 = vector.broadcast %3 : vector<1x512xf32> to vector<8x512xf32>
    %5 = arith.addf %2, %4 : vector<8x512xf32>
    %cst_5 = arith.constant 0.000000e+00 : f32
    %6 = vector.broadcast %cst_5 : f32 to vector<8x512xf32>
    %7 = arith.maximumf %5, %6 : vector<8x512xf32>
    %8 = arith.truncf %7 : vector<8x512xf32> to vector<8x512xbf16>
    %c0_6 = arith.constant 0 : index
    %c0_7 = arith.constant 0 : index
    %9 = vector.load %arg4[%c0_6, %c0_7] : memref<512x256xbf16, #tpu.memory_space<vmem>>, vector<512x256xbf16>
    %cst_8 = arith.constant dense<0.000000e+00> : vector<8x256xf32>
    %10 = tpu.matmul %8, %9, %cst_8 {dimension_numbers = #tpu.dot_dimension_numbers<[1], [0], [0], [1], [0, 0, 1, 1], [], []>} : vector<8x512xbf16>, vector<512x256xbf16>, vector<8x256xf32> -> vector<8x256xf32>
    %c0_9 = arith.constant 0 : index
    %c0_10 = arith.constant 0 : index
    %11 = vector.load %arg5[%c0_9, %c0_10] : memref<1x256xf32, #tpu.memory_space<vmem>>, vector<1x256xf32>
    %12 = vector.broadcast %11 : vector<1x256xf32> to vector<8x256xf32>
    %13 = arith.addf %10, %12 : vector<8x256xf32>
    %cst_11 = arith.constant 0.000000e+00 : f32
    %14 = vector.broadcast %cst_11 : f32 to vector<8x256xf32>
    %15 = arith.maximumf %13, %14 : vector<8x256xf32>
    %16 = arith.truncf %15 : vector<8x256xf32> to vector<8x256xbf16>
    %c0_12 = arith.constant 0 : index
    %c0_13 = arith.constant 0 : index
    %17 = vector.load %arg6[%c0_12, %c0_13] : memref<256x128xbf16, #tpu.memory_space<vmem>>, vector<256x128xbf16>
    %cst_14 = arith.constant dense<0.000000e+00> : vector<8x128xf32>
    %18 = tpu.matmul %16, %17, %cst_14 {dimension_numbers = #tpu.dot_dimension_numbers<[1], [0], [0], [1], [0, 0, 1, 1], [], []>} : vector<8x256xbf16>, vector<256x128xbf16>, vector<8x128xf32> -> vector<8x128xf32>
    %c0_15 = arith.constant 0 : index
    %c0_16 = arith.constant 0 : index
    %19 = vector.load %arg7[%c0_15, %c0_16] : memref<1x128xf32, #tpu.memory_space<vmem>>, vector<1x128xf32>
    %20 = vector.broadcast %19 : vector<1x128xf32> to vector<8x128xf32>
    %21 = arith.addf %18, %20 : vector<8x128xf32>
    %cst_17 = arith.constant 0.000000e+00 : f32
    %22 = vector.broadcast %cst_17 : f32 to vector<8x128xf32>
    %23 = arith.maximumf %21, %22 : vector<8x128xf32>
    %24 = arith.truncf %23 : vector<8x128xf32> to vector<8x128xbf16>
    %c0_18 = arith.constant 0 : index
    %c0_19 = arith.constant 0 : index
    %25 = vector.load %arg8[%c0_18, %c0_19] : memref<128x128xbf16, #tpu.memory_space<vmem>>, vector<128x128xbf16>
    %cst_20 = arith.constant dense<0.000000e+00> : vector<8x128xf32>
    %26 = tpu.matmul %24, %25, %cst_20 {dimension_numbers = #tpu.dot_dimension_numbers<[1], [0], [0], [1], [0, 0, 1, 1], [], []>} : vector<8x128xbf16>, vector<128x128xbf16>, vector<8x128xf32> -> vector<8x128xf32>
    %c0_21 = arith.constant 0 : index
    %c0_22 = arith.constant 0 : index
    %27 = vector.load %arg9[%c0_21, %c0_22] : memref<1x128xf32, #tpu.memory_space<vmem>>, vector<1x128xf32>
    %28 = vector.broadcast %27 : vector<1x128xf32> to vector<8x128xf32>
    %29 = arith.addf %26, %28 : vector<8x128xf32>
    %c0_23 = arith.constant 0 : index
    %c0_24 = arith.constant 0 : index
    %30 = vector.load %arg10[%c0_23, %c0_24] : memref<8x128xf32, #tpu.memory_space<vmem>>, vector<8x128xf32>
    tpu.vector_store %arg10[%c0_23, %c0_24], %29 {strides = array<i32>} : memref<8x128xf32, #tpu.memory_space<vmem>>, vector<8x128xf32>,
    return
  }
  func.func @transform_0(%arg0: i32) -> (i32, i32) {
    %c0_i32 = arith.constant 0 : i32
    %c0_i32_0 = arith.constant 0 : i32
    return %arg0, %c0_i32 : i32, i32
  }
  func.func @transform_1(%arg0: i32) -> (i32, i32) {
    %c0_i32 = arith.constant 0 : i32
    %c0_i32_0 = arith.constant 0 : i32
    %c0_i32_1 = arith.constant 0 : i32
    return %c0_i32, %c0_i32_0 : i32, i32
  }
  func.func @transform_2(%arg0: i32) -> (i32, i32) {
    %c0_i32 = arith.constant 0 : i32
    %c0_i32_0 = arith.constant 0 : i32
    %c0_i32_1 = arith.constant 0 : i32
    return %c0_i32, %c0_i32_0 : i32, i32
  }
  func.func @transform_3(%arg0: i32) -> (i32, i32) {
    %c0_i32 = arith.constant 0 : i32
    %c0_i32_0 = arith.constant 0 : i32
    %c0_i32_1 = arith.constant 0 : i32
    return %c0_i32, %c0_i32_0 : i32, i32
  }
  func.func @transform_4(%arg0: i32) -> (i32, i32) {
    %c0_i32 = arith.constant 0 : i32
    %c0_i32_0 = arith.constant 0 : i32
    %c0_i32_1 = arith.constant 0 : i32
    return %c0_i32, %c0_i32_0 : i32, i32
  }
  func.func @transform_5(%arg0: i32) -> (i32, i32) {
    %c0_i32 = arith.constant 0 : i32
    %c0_i32_0 = arith.constant 0 : i32
    %c0_i32_1 = arith.constant 0 : i32
    return %c0_i32, %c0_i32_0 : i32, i32
  }
  func.func @transform_6(%arg0: i32) -> (i32, i32) {
    %c0_i32 = arith.constant 0 : i32
    %c0_i32_0 = arith.constant 0 : i32
    %c0_i32_1 = arith.constant 0 : i32
    return %c0_i32, %c0_i32_0 : i32, i32
  }
  func.func @transform_7(%arg0: i32) -> (i32, i32) {
    %c0_i32 = arith.constant 0 : i32
    %c0_i32_0 = arith.constant 0 : i32
    %c0_i32_1 = arith.constant 0 : i32
    return %c0_i32, %c0_i32_0 : i32, i32
  }
  func.func @transform_8(%arg0: i32) -> (i32, i32) {
    %c0_i32 = arith.constant 0 : i32
    %c0_i32_0 = arith.constant 0 : i32
    %c0_i32_1 = arith.constant 0 : i32
    return %c0_i32, %c0_i32_0 : i32, i32
  }
  func.func @transform_9(%arg0: i32) -> (i32, i32) {
    %c0_i32 = arith.constant 0 : i32
    %c0_i32_0 = arith.constant 0 : i32
    return %arg0, %c0_i32 : i32, i32
  }
}

</mosaic_0001>

<llo_original>
// kernel: tpu_custom_call.1
$region0: #{tpu_custom_call.1}
  #allocation0 [shape = 'u32[]', space=smem, size = 0x4, offset = 0x4, fixed_abs, tag = 'smem constant byte address 0x4 - core index']
  #allocation1 [shape = 'u32[144,128]{1,0:T(1,128)}', space=vmem, size = 0x12000, scoped, tag = 'internal scratch']
  %s0 = inlined_call_operand.hbm [shape: bf16[8,1792], index: 0, kind: input, shape index: {}]
  %s1 = inlined_call_operand.hbm [shape: bf16[1792,512], index: 1, kind: input, shape index: {}]
  %s2 = inlined_call_operand.hbm [shape: f32[1,512], index: 2, kind: input, shape index: {}]
  %s3 = inlined_call_operand.hbm [shape: bf16[512,256], index: 3, kind: input, shape index: {}]
  %s4 = inlined_call_operand.hbm [shape: f32[1,256], index: 4, kind: input, shape index: {}]
  %s5 = inlined_call_operand.hbm [shape: bf16[256,128], index: 5, kind: input, shape index: {}]
  %s6 = inlined_call_operand.hbm [shape: f32[1,128], index: 6, kind: input, shape index: {}]
  %s7 = inlined_call_operand.hbm [shape: bf16[128,128], index: 7, kind: input, shape index: {}]
  %s8 = inlined_call_operand.hbm [shape: f32[1,128], index: 8, kind: input, shape index: {}]
  %s9 = inlined_call_operand.hbm [shape: f32[8,128], index: 9, kind: output, shape index: {}]
  %s10 = sld [smem:[#allocation0]]
  $region82: #{tpu_custom_call.1} parent=0
    _
  %s12 = ssub.s32 1, %s10
  %s13 = scalar_select 0, %s12, %s10
  $region1: #{tpu_custom_call.1} parent=0
    #allocation2 [shape = 'u8[28672]{0}', space=vmem, size = 0x7000, scoped, tag = 'input window, operand 0, single buffered']
    #allocation3 [shape = 's32[1]{0}', space=sflag, size = 0x4, scoped, tag = 'scoped memory for tpu_custom_call.1']
    #allocation4 [shape = 's32[1]{0}', space=sflag, size = 0x4, scoped, tag = 'scoped memory for tpu_custom_call.1']
    #allocation5 [shape = 'u8[1835008]{0}', space=vmem, size = 0x1c0000, scoped, tag = 'input window, operand 1, single buffered']
    #allocation6 [shape = 's32[1]{0}', space=sflag, size = 0x4, scoped, tag = 'scoped memory for tpu_custom_call.1']
    #allocation7 [shape = 'u8[2048]{0}', space=vmem, size = 0x800, scoped, tag = 'input window, operand 2, single buffered']
    #allocation8 [shape = 'u8[262144]{0}', space=vmem, size = 0x40000, scoped, tag = 'input window, operand 3, single buffered']
    #allocation9 [shape = 's32[1]{0}', space=sflag, size = 0x4, scoped, tag = 'scoped memory for tpu_custom_call.1']
    #allocation10 [shape = 'u8[1024]{0}', space=vmem, size = 0x400, scoped, tag = 'input window, operand 4, single buffered']
    #allocation11 [shape = 'u8[65536]{0}', space=vmem, size = 0x10000, scoped, tag = 'input window, operand 5, single buffered']
    #allocation12 [shape = 's32[1]{0}', space=sflag, size = 0x4, scoped, tag = 'scoped memory for tpu_custom_call.1']
    #allocation13 [shape = 'u8[512]{0}', space=vmem, size = 0x400, scoped, tag = 'input window, operand 6, single buffered']
    #allocation14 [shape = 'u8[32768]{0}', space=vmem, size = 0x8000, scoped, tag = 'input window, operand 7, single buffered']
    #allocation15 [shape = 's32[1]{0}', space=sflag, size = 0x4, scoped, tag = 'scoped memory for tpu_custom_call.1']
    #allocation16 [shape = 'u8[512]{0}', space=vmem, size = 0x400, scoped, tag = 'input window, operand 8, single buffered']
    #allocation17 [shape = 'u8[4096]{0}', space=vmem, size = 0x1000, scoped, tag = 'output window, operand 0, single buffered']
    %14 = vsyncpa [#allocation3], 0
    %15 = vsyncpa [#allocation6], 0
    %16 = vsyncpa [#allocation9], 0
    %17 = vsyncpa [#allocation12], 0
    %18 = vsyncpa [#allocation15], 0
    %19 = vsyncpa [#allocation4], 0
    // Predicated region
    $region2: #{tpu_custom_call.1} parent=1 // pred_check
      _
    $region3: #{tpu_custom_call.1} parent=1 // pred_check_branch
      %21 = sbr.rel (0) target = $region5
    $region4: #{tpu_custom_call.1} parent=1 // pred_region
      %s23 = ssub.s32 896, 896
      %24 = vsyncadd [#allocation3], %s23
      %s26 = sshll.u32 [#allocation2], 4
      %s27 = int_to_ptr.vmem [resolvable:$true] %s26
      %29 = dma.hbm_to_vmem [thread:$0]  %s0, 896, %s27, [#allocation3]
    $region5: #{tpu_custom_call.1} parent=1 // pred_fallthru
      _
    // Predicated region
    $region6: #{tpu_custom_call.1} parent=1 // pred_check
      _
    $region7: #{tpu_custom_call.1} parent=1 // pred_check_branch
      %31 = sbr.rel (0) target = $region9
    $region8: #{tpu_custom_call.1} parent=1 // pred_region
      %s33 = ssub.s32 57344, 57344
      %34 = vsyncadd [#allocation6], %s33
      %s35 = sshll.u32 [#allocation5], 4
      %s36 = int_to_ptr.vmem [resolvable:$true] %s35
      %41 = dma.hbm_to_vmem [thread:$0]  %s1, 57344, %s36, [#allocation6], 256, 256, 16
    $region9: #{tpu_custom_call.1} parent=1 // pred_fallthru
      _
    // Predicated region
    $region10: #{tpu_custom_call.1} parent=1 // pred_check
      _
    $region11: #{tpu_custom_call.1} parent=1 // pred_check_branch
      %43 = sbr.rel (0) target = $region13
    $region12: #{tpu_custom_call.1} parent=1 // pred_region
      %s45 = ssub.s32 64, 64
      %46 = vsyncadd [#allocation6], %s45
      %s48 = sshll.u32 [#allocation7], 4
      %s49 = int_to_ptr.vmem [resolvable:$true] %s48
      %51 = dma.hbm_to_vmem [thread:$0]  %s2, 64, %s49, [#allocation6]
    $region13: #{tpu_custom_call.1} parent=1 // pred_fallthru
      _
    // Predicated region
    $region14: #{tpu_custom_call.1} parent=1 // pred_check
      _
    $region15: #{tpu_custom_call.1} parent=1 // pred_check_branch
      %53 = sbr.rel (0) target = $region17
    $region16: #{tpu_custom_call.1} parent=1 // pred_region
      %s55 = ssub.s32 8192, 8192
      %56 = vsyncadd [#allocation9], %s55
      %s57 = sshll.u32 [#allocation8], 4
      %s58 = int_to_ptr.vmem [resolvable:$true] %s57
      %63 = dma.hbm_to_vmem [thread:$0]  %s3, 8192, %s58, [#allocation9], 128, 128, 8
    $region17: #{tpu_custom_call.1} parent=1 // pred_fallthru
      _
    // Predicated region
    $region18: #{tpu_custom_call.1} parent=1 // pred_check
      _
    $region19: #{tpu_custom_call.1} parent=1 // pred_check_branch
      %65 = sbr.rel (0) target = $region21
    $region20: #{tpu_custom_call.1} parent=1 // pred_region
      %s67 = ssub.s32 32, 32
      %68 = vsyncadd [#allocation9], %s67
      %s70 = sshll.u32 [#allocation10], 4
      %s71 = int_to_ptr.vmem [resolvable:$true] %s70
      %73 = dma.hbm_to_vmem [thread:$0]  %s4, 32, %s71, [#allocation9]
    $region21: #{tpu_custom_call.1} parent=1 // pred_fallthru
      _
    // Predicated region
    $region22: #{tpu_custom_call.1} parent=1 // pred_check
      _
    $region23: #{tpu_custom_call.1} parent=1 // pred_check_branch
      %75 = sbr.rel (0) target = $region25
    $region24: #{tpu_custom_call.1} parent=1 // pred_region
      %s77 = ssub.s32 2048, 2048
      %78 = vsyncadd [#allocation12], %s77
      %s79 = sshll.u32 [#allocation11], 4
      %s80 = int_to_ptr.vmem [resolvable:$true] %s79
      %85 = dma.hbm_to_vmem [thread:$0]  %s5, 2048, %s80, [#allocation12], 64, 64, 4
    $region25: #{tpu_custom_call.1} parent=1 // pred_fallthru
      _
    // Predicated region
    $region26: #{tpu_custom_call.1} parent=1 // pred_check
      _
    $region27: #{tpu_custom_call.1} parent=1 // pred_check_branch
      %87 = sbr.rel (0) target = $region29
    $region28: #{tpu_custom_call.1} parent=1 // pred_region
      %s89 = ssub.s32 16, 16
      %90 = vsyncadd [#allocation12], %s89
      %s92 = sshll.u32 [#allocation13], 4
      %s93 = int_to_ptr.vmem [resolvable:$true] %s92
      %95 = dma.hbm_to_vmem [thread:$0]  %s6, 16, %s93, [#allocation12]
    $region29: #{tpu_custom_call.1} parent=1 // pred_fallthru
      _
    // Predicated region
    $region30: #{tpu_custom_call.1} parent=1 // pred_check
      _
    $region31: #{tpu_custom_call.1} parent=1 // pred_check_branch
      %97 = sbr.rel (0) target = $region33
    $region32: #{tpu_custom_call.1} parent=1 // pred_region
      %s99 = ssub.s32 1024, 1024
      %100 = vsyncadd [#allocation15], %s99
      %s101 = sshll.u32 [#allocation14], 4
      %s102 = int_to_ptr.vmem [resolvable:$true] %s101
      %107 = dma.hbm_to_vmem [thread:$0]  %s7, 1024, %s102, [#allocation15], 64, 64, 4
    $region33: #{tpu_custom_call.1} parent=1 // pred_fallthru
      _
    // Predicated region
    $region34: #{tpu_custom_call.1} parent=1 // pred_check
      _
    $region35: #{tpu_custom_call.1} parent=1 // pred_check_branch
      %109 = sbr.rel (0) target = $region37
    $region36: #{tpu_custom_call.1} parent=1 // pred_region
      %s111 = ssub.s32 16, 16
      %112 = vsyncadd [#allocation15], %s111
      %s114 = sshll.u32 [#allocation16], 4
      %s115 = int_to_ptr.vmem [resolvable:$true] %s114
      %117 = dma.hbm_to_vmem [thread:$0]  %s8, 16, %s115, [#allocation15]
    $region37: #{tpu_custom_call.1} parent=1 // pred_fallthru
      _
    // Predicated region
    $region38: #{tpu_custom_call.1} parent=1 // pred_check
      _
    $region39: #{tpu_custom_call.1} parent=1 // pred_check_branch
      %119 = sbr.rel (0) target = $region41
    $region40: #{tpu_custom_call.1} parent=1 // pred_region
      %120 = dma.done [#allocation3], 896
    $region41: #{tpu_custom_call.1} parent=1 // pred_fallthru
      _
    // Predicated region
    $region42: #{tpu_custom_call.1} parent=1 // pred_check
      _
    $region43: #{tpu_custom_call.1} parent=1 // pred_check_branch
      %122 = sbr.rel (0) target = $region45
    $region44: #{tpu_custom_call.1} parent=1 // pred_region
      %123 = dma.done [#allocation6], 57344
    $region45: #{tpu_custom_call.1} parent=1 // pred_fallthru
      _
    // Predicated region
    $region46: #{tpu_custom_call.1} parent=1 // pred_check
      _
    $region47: #{tpu_custom_call.1} parent=1 // pred_check_branch
      %125 = sbr.rel (0) target = $region49
    $region48: #{tpu_custom_call.1} parent=1 // pred_region
      %126 = dma.done [#allocation6], 64
    $region49: #{tpu_custom_call.1} parent=1 // pred_fallthru
      _
    // Predicated region
    $region50: #{tpu_custom_call.1} parent=1 // pred_check
      _
    $region51: #{tpu_custom_call.1} parent=1 // pred_check_branch
      %128 = sbr.rel (0) target = $region53
    $region52: #{tpu_custom_call.1} parent=1 // pred_region
      %129 = dma.done [#allocation9], 8192
    $region53: #{tpu_custom_call.1} parent=1 // pred_fallthru
      _
    // Predicated region
    $region54: #{tpu_custom_call.1} parent=1 // pred_check
      _
    $region55: #{tpu_custom_call.1} parent=1 // pred_check_branch
      %131 = sbr.rel (0) target = $region57
    $region56: #{tpu_custom_call.1} parent=1 // pred_region
      %132 = dma.done [#allocation9], 32
    $region57: #{tpu_custom_call.1} parent=1 // pred_fallthru
      _
    // Predicated region
    $region58: #{tpu_custom_call.1} parent=1 // pred_check
      _
    $region59: #{tpu_custom_call.1} parent=1 // pred_check_branch
      %134 = sbr.rel (0) target = $region61
    $region60: #{tpu_custom_call.1} parent=1 // pred_region
      %135 = dma.done [#allocation12], 2048
    $region61: #{tpu_custom_call.1} parent=1 // pred_fallthru
      _
    // Predicated region
    $region62: #{tpu_custom_call.1} parent=1 // pred_check
      _
    $region63: #{tpu_custom_call.1} parent=1 // pred_check_branch
      %137 = sbr.rel (0) target = $region65
    $region64: #{tpu_custom_call.1} parent=1 // pred_region
      %138 = dma.done [#allocation12], 16
    $region65: #{tpu_custom_call.1} parent=1 // pred_fallthru
      _
    // Predicated region
    $region66: #{tpu_custom_call.1} parent=1 // pred_check
      _
    $region67: #{tpu_custom_call.1} parent=1 // pred_check_branch
      %140 = sbr.rel (0) target = $region69
    $region68: #{tpu_custom_call.1} parent=1 // pred_region
      %141 = dma.done [#allocation15], 1024
    $region69: #{tpu_custom_call.1} parent=1 // pred_fallthru
      _
    // Predicated region
    $region70: #{tpu_custom_call.1} parent=1 // pred_check
      _
    $region71: #{tpu_custom_call.1} parent=1 // pred_check_branch
      %143 = sbr.rel (0) target = $region73
    $region72: #{tpu_custom_call.1} parent=1 // pred_region
      %144 = dma.done [#allocation15], 16
    $region73: #{tpu_custom_call.1} parent=1 // pred_fallthru
      _
    %v146 = vld [vmem:[#allocation2] sm:$0xff]
    %v147 = vld [vmem:[#allocation2 + $0x8] sm:$0xff]
    %v148 = vld [vmem:[#allocation2 + $0x10] sm:$0xff]
    %v149 = vld [vmem:[#allocation2 + $0x18] sm:$0xff]
    %v150 = vld [vmem:[#allocation2 + $0x20] sm:$0xff]
    %v151 = vld [vmem:[#allocation2 + $0x28] sm:$0xff]
    %v152 = vld [vmem:[#allocation2 + $0x30] sm:$0xff]
    %v153 = vld [vmem:[#allocation5] sm:$0xff]
    %v154 = vld [vmem:[#allocation5 + $0x8] sm:$0xff]
    %v155 = vld [vmem:[#allocation5 + $0x10] sm:$0xff]
    %v156 = vld [vmem:[#allocation5 + $0x18] sm:$0xff]
    %v157 = vld [vmem:[#allocation5 + $0x20] sm:$0xff]
    %v158 = vld [vmem:[#allocation5 + $0x28] sm:$0xff]
    %v159 = vld [vmem:[#allocation5 + $0x30] sm:$0xff]
    %v160 = vld [vmem:[#allocation5 + $0x38] sm:$0xff]
    %v161 = vld [vmem:[#allocation5 + $0x40] sm:$0xff]
    %v162 = vld [vmem:[#allocation5 + $0x48] sm:$0xff]
    %v163 = vld [vmem:[#allocation5 + $0x50] sm:$0xff]
    %v164 = vld [vmem:[#allocation5 + $0x58] sm:$0xff]
    %v165 = vld [vmem:[#allocation5 + $0x60] sm:$0xff]
    %v166 = vld [vmem:[#allocation5 + $0x68] sm:$0xff]
    %v167 = vld [vmem:[#allocation5 + $0x70] sm:$0xff]
    %v168 = vld [vmem:[#allocation5 + $0x78] sm:$0xff]
    %v169 = vld [vmem:[#allocation5 + $0x80] sm:$0xff]
    %v170 = vld [vmem:[#allocation5 + $0x88] sm:$0xff]
    %v171 = vld [vmem:[#allocation5 + $0x90] sm:$0xff]
    %v172 = vld [vmem:[#allocation5 + $0x98] sm:$0xff]
    %v173 = vld [vmem:[#allocation5 + $0xa0] sm:$0xff]
    %v174 = vld [vmem:[#allocation5 + $0xa8] sm:$0xff]
    %v175 = vld [vmem:[#allocation5 + $0xb0] sm:$0xff]
    %v176 = vld [vmem:[#allocation5 + $0xb8] sm:$0xff]
    %v177 = vld [vmem:[#allocation5 + $0xc0] sm:$0xff]
    %v178 = vld [vmem:[#allocation5 + $0xc8] sm:$0xff]
    %v179 = vld [vmem:[#allocation5 + $0xd0] sm:$0xff]
    %v180 = vld [vmem:[#allocation5 + $0xd8] sm:$0xff]
    %v181 = vld [vmem:[#allocation5 + $0xe0] sm:$0xff]
    %v182 = vld [vmem:[#allocation5 + $0xe8] sm:$0xff]
    %v183 = vld [vmem:[#allocation5 + $0xf0] sm:$0xff]
    %v184 = vld [vmem:[#allocation5 + $0xf8] sm:$0xff]
    %v185 = vld [vmem:[#allocation5 + $0x100] sm:$0xff]
    %v186 = vld [vmem:[#allocation5 + $0x108] sm:$0xff]
    %v187 = vld [vmem:[#allocation5 + $0x110] sm:$0xff]
    %v188 = vld [vmem:[#allocation5 + $0x118] sm:$0xff]
    %v189 = vld [vmem:[#allocation5 + $0x120] sm:$0xff]
    %v190 = vld [vmem:[#allocation5 + $0x128] sm:$0xff]
    %v191 = vld [vmem:[#allocation5 + $0x130] sm:$0xff]
    %v192 = vld [vmem:[#allocation5 + $0x138] sm:$0xff]
    %v193 = vld [vmem:[#allocation5 + $0x140] sm:$0xff]
    %v194 = vld [vmem:[#allocation5 + $0x148] sm:$0xff]
    %v195 = vld [vmem:[#allocation5 + $0x150] sm:$0xff]
    %v196 = vld [vmem:[#allocation5 + $0x158] sm:$0xff]
    %v197 = vld [vmem:[#allocation5 + $0x160] sm:$0xff]
    %v198 = vld [vmem:[#allocation5 + $0x168] sm:$0xff]
    %v199 = vld [vmem:[#allocation5 + $0x170] sm:$0xff]
    %v200 = vld [vmem:[#allocation5 + $0x178] sm:$0xff]
    %v201 = vld [vmem:[#allocation5 + $0x180] sm:$0xff]
    %v202 = vld [vmem:[#allocation5 + $0x188] sm:$0xff]
    %v203 = vld [vmem:[#allocation5 + $0x190] sm:$0xff]
    %v204 = vld [vmem:[#allocation5 + $0x198] sm:$0xff]
    %v205 = vld [vmem:[#allocation5 + $0x1a0] sm:$0xff]
    %v206 = vld [vmem:[#allocation5 + $0x1a8] sm:$0xff]
    %v207 = vld [vmem:[#allocation5 + $0x1b0] sm:$0xff]
    %v208 = vld [vmem:[#allocation5 + $0x1b8] sm:$0xff]
    %v209 = vld [vmem:[#allocation5 + $0x1c0] sm:$0xff]
    %v210 = vld [vmem:[#allocation5 + $0x1c8] sm:$0xff]
    %v211 = vld [vmem:[#allocation5 + $0x1d0] sm:$0xff]
    %v212 = vld [vmem:[#allocation5 + $0x1d8] sm:$0xff]
    %v213 = vld [vmem:[#allocation5 + $0x1e0] sm:$0xff]
    %v214 = vld [vmem:[#allocation5 + $0x1e8] sm:$0xff]
    %v215 = vld [vmem:[#allocation5 + $0x1f0] sm:$0xff]
    %v216 = vld [vmem:[#allocation5 + $0x1f8] sm:$0xff]
    %v217 = vld [vmem:[#allocation5 + $0x200] sm:$0xff]
    %v218 = vld [vmem:[#allocation5 + $0x208] sm:$0xff]
    %v219 = vld [vmem:[#allocation5 + $0x210] sm:$0xff]
    %v220 = vld [vmem:[#allocation5 + $0x218] sm:$0xff]
    %v221 = vld [vmem:[#allocation5 + $0x220] sm:$0xff]
    %v222 = vld [vmem:[#allocation5 + $0x228] sm:$0xff]
    %v223 = vld [vmem:[#allocation5 + $0x230] sm:$0xff]
    %v224 = vld [vmem:[#allocation5 + $0x238] sm:$0xff]
    %v225 = vld [vmem:[#allocation5 + $0x240] sm:$0xff]
    %v226 = vld [vmem:[#allocation5 + $0x248] sm:$0xff]
    %v227 = vld [vmem:[#allocation5 + $0x250] sm:$0xff]
    %v228 = vld [vmem:[#allocation5 + $0x258] sm:$0xff]
    %v229 = vld [vmem:[#allocation5 + $0x260] sm:$0xff]
    %v230 = vld [vmem:[#allocation5 + $0x268] sm:$0xff]
    %v231 = vld [vmem:[#allocation5 + $0x270] sm:$0xff]
    %v232 = vld [vmem:[#allocation5 + $0x278] sm:$0xff]
    %v233 = vld [vmem:[#allocation5 + $0x280] sm:$0xff]
    %v234 = vld [vmem:[#allocation5 + $0x288] sm:$0xff]
    %v235 = vld [vmem:[#allocation5 + $0x290] sm:$0xff]
    %v236 = vld [vmem:[#allocation5 + $0x298] sm:$0xff]
    %v237 = vld [vmem:[#allocation5 + $0x2a0] sm:$0xff]
    %v238 = vld [vmem:[#allocation5 + $0x2a8] sm:$0xff]
    %v239 = vld [vmem:[#allocation5 + $0x2b0] sm:$0xff]
    %v240 = vld [vmem:[#allocation5 + $0x2b8] sm:$0xff]
    %v241 = vld [vmem:[#allocation5 + $0x2c0] sm:$0xff]
    %v242 = vld [vmem:[#allocation5 + $0x2c8] sm:$0xff]
    %v243 = vld [vmem:[#allocation5 + $0x2d0] sm:$0xff]
    %v244 = vld [vmem:[#allocation5 + $0x2d8] sm:$0xff]
    %v245 = vld [vmem:[#allocation5 + $0x2e0] sm:$0xff]
    %v246 = vld [vmem:[#allocation5 + $0x2e8] sm:$0xff]
    %v247 = vld [vmem:[#allocation5 + $0x2f0] sm:$0xff]
    %v248 = vld [vmem:[#allocation5 + $0x2f8] sm:$0xff]
    %v249 = vld [vmem:[#allocation5 + $0x300] sm:$0xff]
    %v250 = vld [vmem:[#allocation5 + $0x308] sm:$0xff]
    %v251 = vld [vmem:[#allocation5 + $0x310] sm:$0xff]
    %v252 = vld [vmem:[#allocation5 + $0x318] sm:$0xff]
    %v253 = vld [vmem:[#allocation5 + $0x320] sm:$0xff]
    %v254 = vld [vmem:[#allocation5 + $0x328] sm:$0xff]
    %v255 = vld [vmem:[#allocation5 + $0x330] sm:$0xff]
    %v256 = vld [vmem:[#allocation5 + $0x338] sm:$0xff]
    %v257 = vld [vmem:[#allocation5 + $0x340] sm:$0xff]
    %v258 = vld [vmem:[#allocation5 + $0x348] sm:$0xff]
    %v259 = vld [vmem:[#allocation5 + $0x350] sm:$0xff]
    %v260 = vld [vmem:[#allocation5 + $0x358] sm:$0xff]
    %v261 = vld [vmem:[#allocation5 + $0x360] sm:$0xff]
    %v262 = vld [vmem:[#allocation5 + $0x368] sm:$0xff]
    %v263 = vld [vmem:[#allocation5 + $0x370] sm:$0xff]
    %v264 = vld [vmem:[#allocation5 + $0x378] sm:$0xff]
    %v265 = vld [vmem:[#allocation5 + $0x380] sm:$0xff]
    %v266 = vld [vmem:[#allocation5 + $0x388] sm:$0xff]
    %v267 = vld [vmem:[#allocation5 + $0x390] sm:$0xff]
    %v268 = vld [vmem:[#allocation5 + $0x398] sm:$0xff]
    %v269 = vld [vmem:[#allocation5 + $0x3a0] sm:$0xff]
    %v270 = vld [vmem:[#allocation5 + $0x3a8] sm:$0xff]
    %v271 = vld [vmem:[#allocation5 + $0x3b0] sm:$0xff]
    %v272 = vld [vmem:[#allocation5 + $0x3b8] sm:$0xff]
    %v273 = vld [vmem:[#allocation5 + $0x3c0] sm:$0xff]
    %v274 = vld [vmem:[#allocation5 + $0x3c8] sm:$0xff]
    %v275 = vld [vmem:[#allocation5 + $0x3d0] sm:$0xff]
    %v276 = vld [vmem:[#allocation5 + $0x3d8] sm:$0xff]
    %v277 = vld [vmem:[#allocation5 + $0x3e0] sm:$0xff]
    %v278 = vld [vmem:[#allocation5 + $0x3e8] sm:$0xff]
    %v279 = vld [vmem:[#allocation5 + $0x3f0] sm:$0xff]
    %v280 = vld [vmem:[#allocation5 + $0x3f8] sm:$0xff]
    %v281 = vld [vmem:[#allocation5 + $0x400] sm:$0xff]
    %v282 = vld [vmem:[#allocation5 + $0x408] sm:$0xff]
    %v283 = vld [vmem:[#allocation5 + $0x410] sm:$0xff]
    %v284 = vld [vmem:[#allocation5 + $0x418] sm:$0xff]
    %v285 = vld [vmem:[#allocation5 + $0x420] sm:$0xff]
    %v286 = vld [vmem:[#allocation5 + $0x428] sm:$0xff]
    %v287 = vld [vmem:[#allocation5 + $0x430] sm:$0xff]
    %v288 = vld [vmem:[#allocation5 + $0x438] sm:$0xff]
    %v289 = vld [vmem:[#allocation5 + $0x440] sm:$0xff]
    %v290 = vld [vmem:[#allocation5 + $0x448] sm:$0xff]
    %v291 = vld [vmem:[#allocation5 + $0x450] sm:$0xff]
    %v292 = vld [vmem:[#allocation5 + $0x458] sm:$0xff]
    %v293 = vld [vmem:[#allocation5 + $0x460] sm:$0xff]
    %v294 = vld [vmem:[#allocation5 + $0x468] sm:$0xff]
    %v295 = vld [vmem:[#allocation5 + $0x470] sm:$0xff]
    %v296 = vld [vmem:[#allocation5 + $0x478] sm:$0xff]
    %v297 = vld [vmem:[#allocation5 + $0x480] sm:$0xff]
    %v298 = vld [vmem:[#allocation5 + $0x488] sm:$0xff]
    %v299 = vld [vmem:[#allocation5 + $0x490] sm:$0xff]
    %v300 = vld [vmem:[#allocation5 + $0x498] sm:$0xff]
    %v301 = vld [vmem:[#allocation5 + $0x4a0] sm:$0xff]
    %v302 = vld [vmem:[#allocation5 + $0x4a8] sm:$0xff]
    %v303 = vld [vmem:[#allocation5 + $0x4b0] sm:$0xff]
    %v304 = vld [vmem:[#allocation5 + $0x4b8] sm:$0xff]
    %v305 = vld [vmem:[#allocation5 + $0x4c0] sm:$0xff]
    %v306 = vld [vmem:[#allocation5 + $0x4c8] sm:$0xff]
    %v307 = vld [vmem:[#allocation5 + $0x4d0] sm:$0xff]
    %v308 = vld [vmem:[#allocation5 + $0x4d8] sm:$0xff]
    %v309 = vld [vmem:[#allocation5 + $0x4e0] sm:$0xff]
    %v310 = vld [vmem:[#allocation5 + $0x4e8] sm:$0xff]
    %v311 = vld [vmem:[#allocation5 + $0x4f0] sm:$0xff]
    %v312 = vld [vmem:[#allocation5 + $0x4f8] sm:$0xff]
    %v313 = vld [vmem:[#allocation5 + $0x500] sm:$0xff]
    %v314 = vld [vmem:[#allocation5 + $0x508] sm:$0xff]
    %v315 = vld [vmem:[#allocation5 + $0x510] sm:$0xff]
    %v316 = vld [vmem:[#allocation5 + $0x518] sm:$0xff]
    %v317 = vld [vmem:[#allocation5 + $0x520] sm:$0xff]
    %v318 = vld [vmem:[#allocation5 + $0x528] sm:$0xff]
    %v319 = vld [vmem:[#allocation5 + $0x530] sm:$0xff]
    %v320 = vld [vmem:[#allocation5 + $0x538] sm:$0xff]
    %v321 = vld [vmem:[#allocation5 + $0x540] sm:$0xff]
    %v322 = vld [vmem:[#allocation5 + $0x548] sm:$0xff]
    %v323 = vld [vmem:[#allocation5 + $0x550] sm:$0xff]
    %v324 = vld [vmem:[#allocation5 + $0x558] sm:$0xff]
    %v325 = vld [vmem:[#allocation5 + $0x560] sm:$0xff]
    %v326 = vld [vmem:[#allocation5 + $0x568] sm:$0xff]
    %v327 = vld [vmem:[#allocation5 + $0x570] sm:$0xff]
    %v328 = vld [vmem:[#allocation5 + $0x578] sm:$0xff]
    %v329 = vld [vmem:[#allocation5 + $0x580] sm:$0xff]
    %v330 = vld [vmem:[#allocation5 + $0x588] sm:$0xff]
    %v331 = vld [vmem:[#allocation5 + $0x590] sm:$0xff]
    %v332 = vld [vmem:[#allocation5 + $0x598] sm:$0xff]
    %v333 = vld [vmem:[#allocation5 + $0x5a0] sm:$0xff]
    %v334 = vld [vmem:[#allocation5 + $0x5a8] sm:$0xff]
    %v335 = vld [vmem:[#allocation5 + $0x5b0] sm:$0xff]
    %v336 = vld [vmem:[#allocation5 + $0x5b8] sm:$0xff]
    %v337 = vld [vmem:[#allocation5 + $0x5c0] sm:$0xff]
    %v338 = vld [vmem:[#allocation5 + $0x5c8] sm:$0xff]
    %v339 = vld [vmem:[#allocation5 + $0x5d0] sm:$0xff]
    %v340 = vld [vmem:[#allocation5 + $0x5d8] sm:$0xff]
    %v341 = vld [vmem:[#allocation5 + $0x5e0] sm:$0xff]
    %v342 = vld [vmem:[#allocation5 + $0x5e8] sm:$0xff]
    %v343 = vld [vmem:[#allocation5 + $0x5f0] sm:$0xff]
    %v344 = vld [vmem:[#allocation5 + $0x5f8] sm:$0xff]
    %v345 = vld [vmem:[#allocation5 + $0x600] sm:$0xff]
    %v346 = vld [vmem:[#allocation5 + $0x608] sm:$0xff]
    %v347 = vld [vmem:[#allocation5 + $0x610] sm:$0xff]
    %v348 = vld [vmem:[#allocation5 + $0x618] sm:$0xff]
    %v349 = vld [vmem:[#allocation5 + $0x620] sm:$0xff]
    %v350 = vld [vmem:[#allocation5 + $0x628] sm:$0xff]
    %v351 = vld [vmem:[#allocation5 + $0x630] sm:$0xff]
    %v352 = vld [vmem:[#allocation5 + $0x638] sm:$0xff]
    %v353 = vld [vmem:[#allocation5 + $0x640] sm:$0xff]
    %v354 = vld [vmem:[#allocation5 + $0x648] sm:$0xff]
    %v355 = vld [vmem:[#allocation5 + $0x650] sm:$0xff]
    %v356 = vld [vmem:[#allocation5 + $0x658] sm:$0xff]
    %v357 = vld [vmem:[#allocation5 + $0x660] sm:$0xff]
    %v358 = vld [vmem:[#allocation5 + $0x668] sm:$0xff]
    %v359 = vld [vmem:[#allocation5 + $0x670] sm:$0xff]
    %v360 = vld [vmem:[#allocation5 + $0x678] sm:$0xff]
    %v361 = vld [vmem:[#allocation5 + $0x680] sm:$0xff]
    %v362 = vld [vmem:[#allocation5 + $0x688] sm:$0xff]
    %v363 = vld [vmem:[#allocation5 + $0x690] sm:$0xff]
    %v364 = vld [vmem:[#allocation5 + $0x698] sm:$0xff]
    %v365 = vld [vmem:[#allocation5 + $0x6a0] sm:$0xff]
    %v366 = vld [vmem:[#allocation5 + $0x6a8] sm:$0xff]
    %v367 = vld [vmem:[#allocation5 + $0x6b0] sm:$0xff]
    %v368 = vld [vmem:[#allocation5 + $0x6b8] sm:$0xff]
    %v369 = vld [vmem:[#allocation5 + $0x6c0] sm:$0xff]
    %v370 = vld [vmem:[#allocation5 + $0x6c8] sm:$0xff]
    %v371 = vld [vmem:[#allocation5 + $0x6d0] sm:$0xff]
    %v372 = vld [vmem:[#allocation5 + $0x6d8] sm:$0xff]
    %v373 = vld [vmem:[#allocation5 + $0x6e0] sm:$0xff]
    %v374 = vld [vmem:[#allocation5 + $0x6e8] sm:$0xff]
    %v375 = vld [vmem:[#allocation5 + $0x6f0] sm:$0xff]
    %v376 = vld [vmem:[#allocation5 + $0x6f8] sm:$0xff]
    %v377 = vld [vmem:[#allocation5 + $0x700] sm:$0xff]
    %v378 = vld [vmem:[#allocation5 + $0x708] sm:$0xff]
    %v379 = vld [vmem:[#allocation5 + $0x710] sm:$0xff]
    %v380 = vld [vmem:[#allocation5 + $0x718] sm:$0xff]
    %v381 = vld [vmem:[#allocation5 + $0x720] sm:$0xff]
    %v382 = vld [vmem:[#allocation5 + $0x728] sm:$0xff]
    %v383 = vld [vmem:[#allocation5 + $0x730] sm:$0xff]
    %v384 = vld [vmem:[#allocation5 + $0x738] sm:$0xff]
    %v385 = vld [vmem:[#allocation5 + $0x740] sm:$0xff]
    %v386 = vld [vmem:[#allocation5 + $0x748] sm:$0xff]
    %v387 = vld [vmem:[#allocation5 + $0x750] sm:$0xff]
    %v388 = vld [vmem:[#allocation5 + $0x758] sm:$0xff]
    %v389 = vld [vmem:[#allocation5 + $0x760] sm:$0xff]
    %v390 = vld [vmem:[#allocation5 + $0x768] sm:$0xff]
    %v391 = vld [vmem:[#allocation5 + $0x770] sm:$0xff]
    %v392 = vld [vmem:[#allocation5 + $0x778] sm:$0xff]
    %v393 = vld [vmem:[#allocation5 + $0x780] sm:$0xff]
    %v394 = vld [vmem:[#allocation5 + $0x788] sm:$0xff]
    %v395 = vld [vmem:[#allocation5 + $0x790] sm:$0xff]
    %v396 = vld [vmem:[#allocation5 + $0x798] sm:$0xff]
    %v397 = vld [vmem:[#allocation5 + $0x7a0] sm:$0xff]
    %v398 = vld [vmem:[#allocation5 + $0x7a8] sm:$0xff]
    %v399 = vld [vmem:[#allocation5 + $0x7b0] sm:$0xff]
    %v400 = vld [vmem:[#allocation5 + $0x7b8] sm:$0xff]
    %v401 = vld [vmem:[#allocation5 + $0x7c0] sm:$0xff]
    %v402 = vld [vmem:[#allocation5 + $0x7c8] sm:$0xff]
    %v403 = vld [vmem:[#allocation5 + $0x7d0] sm:$0xff]
    %v404 = vld [vmem:[#allocation5 + $0x7d8] sm:$0xff]
    %v405 = vld [vmem:[#allocation5 + $0x7e0] sm:$0xff]
    %v406 = vld [vmem:[#allocation5 + $0x7e8] sm:$0xff]
    %v407 = vld [vmem:[#allocation5 + $0x7f0] sm:$0xff]
    %v408 = vld [vmem:[#allocation5 + $0x7f8] sm:$0xff]
    %v409 = vld [vmem:[#allocation5 + $0x800] sm:$0xff]
    %v410 = vld [vmem:[#allocation5 + $0x808] sm:$0xff]
    %v411 = vld [vmem:[#allocation5 + $0x810] sm:$0xff]
    %v412 = vld [vmem:[#allocation5 + $0x818] sm:$0xff]
    %v413 = vld [vmem:[#allocation5 + $0x820] sm:$0xff]
    %v414 = vld [vmem:[#allocation5 + $0x828] sm:$0xff]
    %v415 = vld [vmem:[#allocation5 + $0x830] sm:$0xff]
    %v416 = vld [vmem:[#allocation5 + $0x838] sm:$0xff]
    %v417 = vld [vmem:[#allocation5 + $0x840] sm:$0xff]
    %v418 = vld [vmem:[#allocation5 + $0x848] sm:$0xff]
    %v419 = vld [vmem:[#allocation5 + $0x850] sm:$0xff]
    %v420 = vld [vmem:[#allocation5 + $0x858] sm:$0xff]
    %v421 = vld [vmem:[#allocation5 + $0x860] sm:$0xff]
    %v422 = vld [vmem:[#allocation5 + $0x868] sm:$0xff]
    %v423 = vld [vmem:[#allocation5 + $0x870] sm:$0xff]
    %v424 = vld [vmem:[#allocation5 + $0x878] sm:$0xff]
    %v425 = vld [vmem:[#allocation5 + $0x880] sm:$0xff]
    %v426 = vld [vmem:[#allocation5 + $0x888] sm:$0xff]
    %v427 = vld [vmem:[#allocation5 + $0x890] sm:$0xff]
    %v428 = vld [vmem:[#allocation5 + $0x898] sm:$0xff]
    %v429 = vld [vmem:[#allocation5 + $0x8a0] sm:$0xff]
    %v430 = vld [vmem:[#allocation5 + $0x8a8] sm:$0xff]
    %v431 = vld [vmem:[#allocation5 + $0x8b0] sm:$0xff]
    %v432 = vld [vmem:[#allocation5 + $0x8b8] sm:$0xff]
    %v433 = vld [vmem:[#allocation5 + $0x8c0] sm:$0xff]
    %v434 = vld [vmem:[#allocation5 + $0x8c8] sm:$0xff]
    %v435 = vld [vmem:[#allocation5 + $0x8d0] sm:$0xff]
    %v436 = vld [vmem:[#allocation5 + $0x8d8] sm:$0xff]
    %v437 = vld [vmem:[#allocation5 + $0x8e0] sm:$0xff]
    %v438 = vld [vmem:[#allocation5 + $0x8e8] sm:$0xff]
    %v439 = vld [vmem:[#allocation5 + $0x8f0] sm:$0xff]
    %v440 = vld [vmem:[#allocation5 + $0x8f8] sm:$0xff]
    %v441 = vld [vmem:[#allocation5 + $0x900] sm:$0xff]
    %v442 = vld [vmem:[#allocation5 + $0x908] sm:$0xff]
    %v443 = vld [vmem:[#allocation5 + $0x910] sm:$0xff]
    %v444 = vld [vmem:[#allocation5 + $0x918] sm:$0xff]
    %v445 = vld [vmem:[#allocation5 + $0x920] sm:$0xff]
    %v446 = vld [vmem:[#allocation5 + $0x928] sm:$0xff]
    %v447 = vld [vmem:[#allocation5 + $0x930] sm:$0xff]
    %v448 = vld [vmem:[#allocation5 + $0x938] sm:$0xff]
    %v449 = vld [vmem:[#allocation5 + $0x940] sm:$0xff]
    %v450 = vld [vmem:[#allocation5 + $0x948] sm:$0xff]
    %v451 = vld [vmem:[#allocation5 + $0x950] sm:$0xff]
    %v452 = vld [vmem:[#allocation5 + $0x958] sm:$0xff]
    %v453 = vld [vmem:[#allocation5 + $0x960] sm:$0xff]
    %v454 = vld [vmem:[#allocation5 + $0x968] sm:$0xff]
    %v455 = vld [vmem:[#allocation5 + $0x970] sm:$0xff]
    %v456 = vld [vmem:[#allocation5 + $0x978] sm:$0xff]
    %v457 = vld [vmem:[#allocation5 + $0x980] sm:$0xff]
    %v458 = vld [vmem:[#allocation5 + $0x988] sm:$0xff]
    %v459 = vld [vmem:[#allocation5 + $0x990] sm:$0xff]
    %v460 = vld [vmem:[#allocation5 + $0x998] sm:$0xff]
    %v461 = vld [vmem:[#allocation5 + $0x9a0] sm:$0xff]
    %v462 = vld [vmem:[#allocation5 + $0x9a8] sm:$0xff]
    %v463 = vld [vmem:[#allocation5 + $0x9b0] sm:$0xff]
    %v464 = vld [vmem:[#allocation5 + $0x9b8] sm:$0xff]
    %v465 = vld [vmem:[#allocation5 + $0x9c0] sm:$0xff]
    %v466 = vld [vmem:[#allocation5 + $0x9c8] sm:$0xff]
    %v467 = vld [vmem:[#allocation5 + $0x9d0] sm:$0xff]
    %v468 = vld [vmem:[#allocation5 + $0x9d8] sm:$0xff]
    %v469 = vld [vmem:[#allocation5 + $0x9e0] sm:$0xff]
    %v470 = vld [vmem:[#allocation5 + $0x9e8] sm:$0xff]
    %v471 = vld [vmem:[#allocation5 + $0x9f0] sm:$0xff]
    %v472 = vld [vmem:[#allocation5 + $0x9f8] sm:$0xff]
    %v473 = vld [vmem:[#allocation5 + $0xa00] sm:$0xff]
    %v474 = vld [vmem:[#allocation5 + $0xa08] sm:$0xff]
    %v475 = vld [vmem:[#allocation5 + $0xa10] sm:$0xff]
    %v476 = vld [vmem:[#allocation5 + $0xa18] sm:$0xff]
    %v477 = vld [vmem:[#allocation5 + $0xa20] sm:$0xff]
    %v478 = vld [vmem:[#allocation5 + $0xa28] sm:$0xff]
    %v479 = vld [vmem:[#allocation5 + $0xa30] sm:$0xff]
    %v480 = vld [vmem:[#allocation5 + $0xa38] sm:$0xff]
    %v481 = vld [vmem:[#allocation5 + $0xa40] sm:$0xff]
    %v482 = vld [vmem:[#allocation5 + $0xa48] sm:$0xff]
    %v483 = vld [vmem:[#allocation5 + $0xa50] sm:$0xff]
    %v484 = vld [vmem:[#allocation5 + $0xa58] sm:$0xff]
    %v485 = vld [vmem:[#allocation5 + $0xa60] sm:$0xff]
    %v486 = vld [vmem:[#allocation5 + $0xa68] sm:$0xff]
    %v487 = vld [vmem:[#allocation5 + $0xa70] sm:$0xff]
    %v488 = vld [vmem:[#allocation5 + $0xa78] sm:$0xff]
    %v489 = vld [vmem:[#allocation5 + $0xa80] sm:$0xff]
    %v490 = vld [vmem:[#allocation5 + $0xa88] sm:$0xff]
    %v491 = vld [vmem:[#allocation5 + $0xa90] sm:$0xff]
    %v492 = vld [vmem:[#allocation5 + $0xa98] sm:$0xff]
    %v493 = vld [vmem:[#allocation5 + $0xaa0] sm:$0xff]
    %v494 = vld [vmem:[#allocation5 + $0xaa8] sm:$0xff]
    %v495 = vld [vmem:[#allocation5 + $0xab0] sm:$0xff]
    %v496 = vld [vmem:[#allocation5 + $0xab8] sm:$0xff]
    %v497 = vld [vmem:[#allocation5 + $0xac0] sm:$0xff]
    %v498 = vld [vmem:[#allocation5 + $0xac8] sm:$0xff]
    %v499 = vld [vmem:[#allocation5 + $0xad0] sm:$0xff]
    %v500 = vld [vmem:[#allocation5 + $0xad8] sm:$0xff]
    %v501 = vld [vmem:[#allocation5 + $0xae0] sm:$0xff]
    %v502 = vld [vmem:[#allocation5 + $0xae8] sm:$0xff]
    %v503 = vld [vmem:[#allocation5 + $0xaf0] sm:$0xff]
    %v504 = vld [vmem:[#allocation5 + $0xaf8] sm:$0xff]
    %v505 = vld [vmem:[#allocation5 + $0xb00] sm:$0xff]
    %v506 = vld [vmem:[#allocation5 + $0xb08] sm:$0xff]
    %v507 = vld [vmem:[#allocation5 + $0xb10] sm:$0xff]
    %v508 = vld [vmem:[#allocation5 + $0xb18] sm:$0xff]
    %v509 = vld [vmem:[#allocation5 + $0xb20] sm:$0xff]
    %v510 = vld [vmem:[#allocation5 + $0xb28] sm:$0xff]
    %v511 = vld [vmem:[#allocation5 + $0xb30] sm:$0xff]
    %v512 = vld [vmem:[#allocation5 + $0xb38] sm:$0xff]
    %v513 = vld [vmem:[#allocation5 + $0xb40] sm:$0xff]
    %v514 = vld [vmem:[#allocation5 + $0xb48] sm:$0xff]
    %v515 = vld [vmem:[#allocation5 + $0xb50] sm:$0xff]
    %v516 = vld [vmem:[#allocation5 + $0xb58] sm:$0xff]
    %v517 = vld [vmem:[#allocation5 + $0xb60] sm:$0xff]
    %v518 = vld [vmem:[#allocation5 + $0xb68] sm:$0xff]
    %v519 = vld [vmem:[#allocation5 + $0xb70] sm:$0xff]
    %v520 = vld [vmem:[#allocation5 + $0xb78] sm:$0xff]
    %v521 = vld [vmem:[#allocation5 + $0xb80] sm:$0xff]
    %v522 = vld [vmem:[#allocation5 + $0xb88] sm:$0xff]
    %v523 = vld [vmem:[#allocation5 + $0xb90] sm:$0xff]
    %v524 = vld [vmem:[#allocation5 + $0xb98] sm:$0xff]
    %v525 = vld [vmem:[#allocation5 + $0xba0] sm:$0xff]
    %v526 = vld [vmem:[#allocation5 + $0xba8] sm:$0xff]
    %v527 = vld [vmem:[#allocation5 + $0xbb0] sm:$0xff]
    %v528 = vld [vmem:[#allocation5 + $0xbb8] sm:$0xff]
    %v529 = vld [vmem:[#allocation5 + $0xbc0] sm:$0xff]
    %v530 = vld [vmem:[#allocation5 + $0xbc8] sm:$0xff]
    %v531 = vld [vmem:[#allocation5 + $0xbd0] sm:$0xff]
    %v532 = vld [vmem:[#allocation5 + $0xbd8] sm:$0xff]
    %v533 = vld [vmem:[#allocation5 + $0xbe0] sm:$0xff]
    %v534 = vld [vmem:[#allocation5 + $0xbe8] sm:$0xff]
    %v535 = vld [vmem:[#allocation5 + $0xbf0] sm:$0xff]
    %v536 = vld [vmem:[#allocation5 + $0xbf8] sm:$0xff]
    %v537 = vld [vmem:[#allocation5 + $0xc00] sm:$0xff]
    %v538 = vld [vmem:[#allocation5 + $0xc08] sm:$0xff]
    %v539 = vld [vmem:[#allocation5 + $0xc10] sm:$0xff]
    %v540 = vld [vmem:[#allocation5 + $0xc18] sm:$0xff]
    %v541 = vld [vmem:[#allocation5 + $0xc20] sm:$0xff]
    %v542 = vld [vmem:[#allocation5 + $0xc28] sm:$0xff]
    %v543 = vld [vmem:[#allocation5 + $0xc30] sm:$0xff]
    %v544 = vld [vmem:[#allocation5 + $0xc38] sm:$0xff]
    %v545 = vld [vmem:[#allocation5 + $0xc40] sm:$0xff]
    %v546 = vld [vmem:[#allocation5 + $0xc48] sm:$0xff]
    %v547 = vld [vmem:[#allocation5 + $0xc50] sm:$0xff]
    %v548 = vld [vmem:[#allocation5 + $0xc58] sm:$0xff]
    %v549 = vld [vmem:[#allocation5 + $0xc60] sm:$0xff]
    %v550 = vld [vmem:[#allocation5 + $0xc68] sm:$0xff]
    %v551 = vld [vmem:[#allocation5 + $0xc70] sm:$0xff]
    %v552 = vld [vmem:[#allocation5 + $0xc78] sm:$0xff]
    %v553 = vld [vmem:[#allocation5 + $0xc80] sm:$0xff]
    %v554 = vld [vmem:[#allocation5 + $0xc88] sm:$0xff]
    %v555 = vld [vmem:[#allocation5 + $0xc90] sm:$0xff]
    %v556 = vld [vmem:[#allocation5 + $0xc98] sm:$0xff]
    %v557 = vld [vmem:[#allocation5 + $0xca0] sm:$0xff]
    %v558 = vld [vmem:[#allocation5 + $0xca8] sm:$0xff]
    %v559 = vld [vmem:[#allocation5 + $0xcb0] sm:$0xff]
    %v560 = vld [vmem:[#allocation5 + $0xcb8] sm:$0xff]
    %v561 = vld [vmem:[#allocation5 + $0xcc0] sm:$0xff]
    %v562 = vld [vmem:[#allocation5 + $0xcc8] sm:$0xff]
    %v563 = vld [vmem:[#allocation5 + $0xcd0] sm:$0xff]
    %v564 = vld [vmem:[#allocation5 + $0xcd8] sm:$0xff]
    %v565 = vld [vmem:[#allocation5 + $0xce0] sm:$0xff]
    %v566 = vld [vmem:[#allocation5 + $0xce8] sm:$0xff]
    %v567 = vld [vmem:[#allocation5 + $0xcf0] sm:$0xff]
    %v568 = vld [vmem:[#allocation5 + $0xcf8] sm:$0xff]
    %v569 = vld [vmem:[#allocation5 + $0xd00] sm:$0xff]
    %v570 = vld [vmem:[#allocation5 + $0xd08] sm:$0xff]
    %v571 = vld [vmem:[#allocation5 + $0xd10] sm:$0xff]
    %v572 = vld [vmem:[#allocation5 + $0xd18] sm:$0xff]
    %v573 = vld [vmem:[#allocation5 + $0xd20] sm:$0xff]
    %v574 = vld [vmem:[#allocation5 + $0xd28] sm:$0xff]
    %v575 = vld [vmem:[#allocation5 + $0xd30] sm:$0xff]
    %v576 = vld [vmem:[#allocation5 + $0xd38] sm:$0xff]
    %v577 = vld [vmem:[#allocation5 + $0xd40] sm:$0xff]
    %v578 = vld [vmem:[#allocation5 + $0xd48] sm:$0xff]
    %v579 = vld [vmem:[#allocation5 + $0xd50] sm:$0xff]
    %v580 = vld [vmem:[#allocation5 + $0xd58] sm:$0xff]
    %v581 = vld [vmem:[#allocation5 + $0xd60] sm:$0xff]
    %v582 = vld [vmem:[#allocation5 + $0xd68] sm:$0xff]
    %v583 = vld [vmem:[#allocation5 + $0xd70] sm:$0xff]
    %v584 = vld [vmem:[#allocation5 + $0xd78] sm:$0xff]
    %v585 = vld [vmem:[#allocation5 + $0xd80] sm:$0xff]
    %v586 = vld [vmem:[#allocation5 + $0xd88] sm:$0xff]
    %v587 = vld [vmem:[#allocation5 + $0xd90] sm:$0xff]
    %v588 = vld [vmem:[#allocation5 + $0xd98] sm:$0xff]
    %v589 = vld [vmem:[#allocation5 + $0xda0] sm:$0xff]
    %v590 = vld [vmem:[#allocation5 + $0xda8] sm:$0xff]
    %v591 = vld [vmem:[#allocation5 + $0xdb0] sm:$0xff]
    %v592 = vld [vmem:[#allocation5 + $0xdb8] sm:$0xff]
    %v593 = vld [vmem:[#allocation5 + $0xdc0] sm:$0xff]
    %v594 = vld [vmem:[#allocation5 + $0xdc8] sm:$0xff]
    %v595 = vld [vmem:[#allocation5 + $0xdd0] sm:$0xff]
    %v596 = vld [vmem:[#allocation5 + $0xdd8] sm:$0xff]
    %v597 = vld [vmem:[#allocation5 + $0xde0] sm:$0xff]
    %v598 = vld [vmem:[#allocation5 + $0xde8] sm:$0xff]
    %v599 = vld [vmem:[#allocation5 + $0xdf0] sm:$0xff]
    %v600 = vld [vmem:[#allocation5 + $0xdf8] sm:$0xff]
    %v601 = vld [vmem:[#allocation7] sm:$0xf]
    %v603 = vlaneseq
    %v604 = vshrl.u32 %v603, 7
    %v605 = vsub.s32 0, %v604
    %v606 = vrot.slane %v601, %v605
    %v607 = vlaneseq
    %v608 = vshrl.u32 %v607, 7
    %v609 = vsub.s32 1, %v608
    %v610 = vrot.slane %v601, %v609
    %v611 = vlaneseq
    %v612 = vshrl.u32 %v611, 7
    %v613 = vsub.s32 2, %v612
    %v614 = vrot.slane %v601, %v613
    %v615 = vlaneseq
    %v616 = vshrl.u32 %v615, 7
    %v617 = vsub.s32 3, %v616
    %v618 = vrot.slane %v601, %v617
    %v630 = vunpack.c.l.b16 %v146
    %v631 = vunpack.c.h.b16 %v146
    %v632 = vunpack.c.l.b16 %v147
    %v633 = vunpack.c.h.b16 %v147
    %v634 = vunpack.c.l.b16 %v148
    %v635 = vunpack.c.h.b16 %v148
    %v636 = vunpack.c.l.b16 %v149
    %v637 = vunpack.c.h.b16 %v149
    %v638 = vunpack.c.l.b16 %v150
    %v639 = vunpack.c.h.b16 %v150
    %v640 = vunpack.c.l.b16 %v151
    %v641 = vunpack.c.h.b16 %v151
    %v642 = vunpack.c.l.b16 %v152
    %v643 = vunpack.c.h.b16 %v152
    %v644 = vpack.c.b16 %v630, %v630
    %v645 = vpack.c.b16 %v631, %v631
    %v646 = vpack.c.b16 %v632, %v632
    %v647 = vpack.c.b16 %v633, %v633
    %v648 = vpack.c.b16 %v634, %v634
    %v649 = vpack.c.b16 %v635, %v635
    %v650 = vpack.c.b16 %v636, %v636
    %v651 = vpack.c.b16 %v637, %v637
    %v652 = vpack.c.b16 %v638, %v638
    %v653 = vpack.c.b16 %v639, %v639
    %v654 = vpack.c.b16 %v640, %v640
    %v655 = vpack.c.b16 %v641, %v641
    %v656 = vpack.c.b16 %v642, %v642
    %v657 = vpack.c.b16 %v643, %v643
    %v1120 = vunpack.c.l.b16 %v153
    %v1121 = vunpack.c.h.b16 %v153
    %v1122 = vunpack.c.l.b16 %v154
    %v1123 = vunpack.c.h.b16 %v154
    %v1124 = vunpack.c.l.b16 %v155
    %v1125 = vunpack.c.h.b16 %v155
    %v1126 = vunpack.c.l.b16 %v156
    %v1127 = vunpack.c.h.b16 %v156
    %v1128 = vunpack.c.l.b16 %v157
    %v1129 = vunpack.c.h.b16 %v157
    %v1130 = vunpack.c.l.b16 %v158
    %v1131 = vunpack.c.h.b16 %v158
    %v1132 = vunpack.c.l.b16 %v159
    %v1133 = vunpack.c.h.b16 %v159
    %v1134 = vunpack.c.l.b16 %v160
    %v1135 = vunpack.c.h.b16 %v160
    %v1136 = vunpack.c.l.b16 %v161
    %v1137 = vunpack.c.h.b16 %v161
    %v1138 = vunpack.c.l.b16 %v162
    %v1139 = vunpack.c.h.b16 %v162
    %v1140 = vunpack.c.l.b16 %v163
    %v1141 = vunpack.c.h.b16 %v163
    %v1142 = vunpack.c.l.b16 %v164
    %v1143 = vunpack.c.h.b16 %v164
    %v1144 = vunpack.c.l.b16 %v165
    %v1145 = vunpack.c.h.b16 %v165
    %v1146 = vunpack.c.l.b16 %v166
    %v1147 = vunpack.c.h.b16 %v166
    %v1148 = vunpack.c.l.b16 %v167
    %v1149 = vunpack.c.h.b16 %v167
    %v1150 = vunpack.c.l.b16 %v168
    %v1151 = vunpack.c.h.b16 %v168
    %v1152 = vunpack.c.l.b16 %v169
    %v1153 = vunpack.c.h.b16 %v169
    %v1154 = vunpack.c.l.b16 %v170
    %v1155 = vunpack.c.h.b16 %v170
    %v1156 = vunpack.c.l.b16 %v171
    %v1157 = vunpack.c.h.b16 %v171
    %v1158 = vunpack.c.l.b16 %v172
    %v1159 = vunpack.c.h.b16 %v172
    %v1160 = vunpack.c.l.b16 %v173
    %v1161 = vunpack.c.h.b16 %v173
    %v1162 = vunpack.c.l.b16 %v174
    %v1163 = vunpack.c.h.b16 %v174
    %v1164 = vunpack.c.l.b16 %v175
    %v1165 = vunpack.c.h.b16 %v175
    %v1166 = vunpack.c.l.b16 %v176
    %v1167 = vunpack.c.h.b16 %v176
    %v1168 = vunpack.c.l.b16 %v177
    %v1169 = vunpack.c.h.b16 %v177
    %v1170 = vunpack.c.l.b16 %v178
    %v1171 = vunpack.c.h.b16 %v178
    %v1172 = vunpack.c.l.b16 %v179
    %v1173 = vunpack.c.h.b16 %v179
    %v1174 = vunpack.c.l.b16 %v180
    %v1175 = vunpack.c.h.b16 %v180
    %v1176 = vunpack.c.l.b16 %v181
    %v1177 = vunpack.c.h.b16 %v181
    %v1178 = vunpack.c.l.b16 %v182
    %v1179 = vunpack.c.h.b16 %v182
    %v1180 = vunpack.c.l.b16 %v183
    %v1181 = vunpack.c.h.b16 %v183
    %v1182 = vunpack.c.l.b16 %v184
    %v1183 = vunpack.c.h.b16 %v184
    %v1184 = vunpack.c.l.b16 %v185
    %v1185 = vunpack.c.h.b16 %v185
    %v1186 = vunpack.c.l.b16 %v186
    %v1187 = vunpack.c.h.b16 %v186
    %v1188 = vunpack.c.l.b16 %v187
    %v1189 = vunpack.c.h.b16 %v187
    %v1190 = vunpack.c.l.b16 %v188
    %v1191 = vunpack.c.h.b16 %v188
    %v1192 = vunpack.c.l.b16 %v189
    %v1193 = vunpack.c.h.b16 %v189
    %v1194 = vunpack.c.l.b16 %v190
    %v1195 = vunpack.c.h.b16 %v190
    %v1196 = vunpack.c.l.b16 %v191
    %v1197 = vunpack.c.h.b16 %v191
    %v1198 = vunpack.c.l.b16 %v192
    %v1199 = vunpack.c.h.b16 %v192
    %v1200 = vunpack.c.l.b16 %v193
    %v1201 = vunpack.c.h.b16 %v193
    %v1202 = vunpack.c.l.b16 %v194
    %v1203 = vunpack.c.h.b16 %v194
    %v1204 = vunpack.c.l.b16 %v195
    %v1205 = vunpack.c.h.b16 %v195
    %v1206 = vunpack.c.l.b16 %v196
    %v1207 = vunpack.c.h.b16 %v196
    %v1208 = vunpack.c.l.b16 %v197
    %v1209 = vunpack.c.h.b16 %v197
    %v1210 = vunpack.c.l.b16 %v198
    %v1211 = vunpack.c.h.b16 %v198
    %v1212 = vunpack.c.l.b16 %v199
    %v1213 = vunpack.c.h.b16 %v199
    %v1214 = vunpack.c.l.b16 %v200
    %v1215 = vunpack.c.h.b16 %v200
    %v1216 = vunpack.c.l.b16 %v201
    %v1217 = vunpack.c.h.b16 %v201
    %v1218 = vunpack.c.l.b16 %v202
    %v1219 = vunpack.c.h.b16 %v202
    %v1220 = vunpack.c.l.b16 %v203
    %v1221 = vunpack.c.h.b16 %v203
    %v1222 = vunpack.c.l.b16 %v204
    %v1223 = vunpack.c.h.b16 %v204
    %v1224 = vunpack.c.l.b16 %v205
    %v1225 = vunpack.c.h.b16 %v205
    %v1226 = vunpack.c.l.b16 %v206
    %v1227 = vunpack.c.h.b16 %v206
    %v1228 = vunpack.c.l.b16 %v207
    %v1229 = vunpack.c.h.b16 %v207
    %v1230 = vunpack.c.l.b16 %v208
    %v1231 = vunpack.c.h.b16 %v208
    %v1232 = vunpack.c.l.b16 %v209
    %v1233 = vunpack.c.h.b16 %v209
    %v1234 = vunpack.c.l.b16 %v210
    %v1235 = vunpack.c.h.b16 %v210
    %v1236 = vunpack.c.l.b16 %v211
    %v1237 = vunpack.c.h.b16 %v211
    %v1238 = vunpack.c.l.b16 %v212
    %v1239 = vunpack.c.h.b16 %v212
    %v1240 = vunpack.c.l.b16 %v213
    %v1241 = vunpack.c.h.b16 %v213
    %v1242 = vunpack.c.l.b16 %v214
    %v1243 = vunpack.c.h.b16 %v214
    %v1244 = vunpack.c.l.b16 %v215
    %v1245 = vunpack.c.h.b16 %v215
    %v1246 = vunpack.c.l.b16 %v216
    %v1247 = vunpack.c.h.b16 %v216
    %v1248 = vunpack.c.l.b16 %v217
    %v1249 = vunpack.c.h.b16 %v217
    %v1250 = vunpack.c.l.b16 %v218
    %v1251 = vunpack.c.h.b16 %v218
    %v1252 = vunpack.c.l.b16 %v219
    %v1253 = vunpack.c.h.b16 %v219
    %v1254 = vunpack.c.l.b16 %v220
    %v1255 = vunpack.c.h.b16 %v220
    %v1256 = vunpack.c.l.b16 %v221
    %v1257 = vunpack.c.h.b16 %v221
    %v1258 = vunpack.c.l.b16 %v222
    %v1259 = vunpack.c.h.b16 %v222
    %v1260 = vunpack.c.l.b16 %v223
    %v1261 = vunpack.c.h.b16 %v223
    %v1262 = vunpack.c.l.b16 %v224
    %v1263 = vunpack.c.h.b16 %v224
    %v1264 = vunpack.c.l.b16 %v225
    %v1265 = vunpack.c.h.b16 %v225
    %v1266 = vunpack.c.l.b16 %v226
    %v1267 = vunpack.c.h.b16 %v226
    %v1268 = vunpack.c.l.b16 %v227
    %v1269 = vunpack.c.h.b16 %v227
    %v1270 = vunpack.c.l.b16 %v228
    %v1271 = vunpack.c.h.b16 %v228
    %v1272 = vunpack.c.l.b16 %v229
    %v1273 = vunpack.c.h.b16 %v229
    %v1274 = vunpack.c.l.b16 %v230
    %v1275 = vunpack.c.h.b16 %v230
    %v1276 = vunpack.c.l.b16 %v231
    %v1277 = vunpack.c.h.b16 %v231
    %v1278 = vunpack.c.l.b16 %v232
    %v1279 = vunpack.c.h.b16 %v232
    %v1280 = vunpack.c.l.b16 %v233
    %v1281 = vunpack.c.h.b16 %v233
    %v1282 = vunpack.c.l.b16 %v234
    %v1283 = vunpack.c.h.b16 %v234
    %v1284 = vunpack.c.l.b16 %v235
    %v1285 = vunpack.c.h.b16 %v235
    %v1286 = vunpack.c.l.b16 %v236
    %v1287 = vunpack.c.h.b16 %v236
    %v1288 = vunpack.c.l.b16 %v237
    %v1289 = vunpack.c.h.b16 %v237
    %v1290 = vunpack.c.l.b16 %v238
    %v1291 = vunpack.c.h.b16 %v238
    %v1292 = vunpack.c.l.b16 %v239
    %v1293 = vunpack.c.h.b16 %v239
    %v1294 = vunpack.c.l.b16 %v240
    %v1295 = vunpack.c.h.b16 %v240
    %v1296 = vunpack.c.l.b16 %v241
    %v1297 = vunpack.c.h.b16 %v241
    %v1298 = vunpack.c.l.b16 %v242
    %v1299 = vunpack.c.h.b16 %v242
    %v1300 = vunpack.c.l.b16 %v243
    %v1301 = vunpack.c.h.b16 %v243
    %v1302 = vunpack.c.l.b16 %v244
    %v1303 = vunpack.c.h.b16 %v244
    %v1304 = vunpack.c.l.b16 %v245
    %v1305 = vunpack.c.h.b16 %v245
    %v1306 = vunpack.c.l.b16 %v246
    %v1307 = vunpack.c.h.b16 %v246
    %v1308 = vunpack.c.l.b16 %v247
    %v1309 = vunpack.c.h.b16 %v247
    %v1310 = vunpack.c.l.b16 %v248
    %v1311 = vunpack.c.h.b16 %v248
    %v1312 = vunpack.c.l.b16 %v249
    %v1313 = vunpack.c.h.b16 %v249
    %v1314 = vunpack.c.l.b16 %v250
    %v1315 = vunpack.c.h.b16 %v250
    %v1316 = vunpack.c.l.b16 %v251
    %v1317 = vunpack.c.h.b16 %v251
    %v1318 = vunpack.c.l.b16 %v252
    %v1319 = vunpack.c.h.b16 %v252
    %v1320 = vunpack.c.l.b16 %v253
    %v1321 = vunpack.c.h.b16 %v253
    %v1322 = vunpack.c.l.b16 %v254
    %v1323 = vunpack.c.h.b16 %v254
    %v1324 = vunpack.c.l.b16 %v255
    %v1325 = vunpack.c.h.b16 %v255
    %v1326 = vunpack.c.l.b16 %v256
    %v1327 = vunpack.c.h.b16 %v256
    %v1328 = vunpack.c.l.b16 %v257
    %v1329 = vunpack.c.h.b16 %v257
    %v1330 = vunpack.c.l.b16 %v258
    %v1331 = vunpack.c.h.b16 %v258
    %v1332 = vunpack.c.l.b16 %v259
    %v1333 = vunpack.c.h.b16 %v259
    %v1334 = vunpack.c.l.b16 %v260
    %v1335 = vunpack.c.h.b16 %v260
    %v1336 = vunpack.c.l.b16 %v261
    %v1337 = vunpack.c.h.b16 %v261
    %v1338 = vunpack.c.l.b16 %v262
    %v1339 = vunpack.c.h.b16 %v262
    %v1340 = vunpack.c.l.b16 %v263
    %v1341 = vunpack.c.h.b16 %v263
    %v1342 = vunpack.c.l.b16 %v264
    %v1343 = vunpack.c.h.b16 %v264
    %v1344 = vunpack.c.l.b16 %v265
    %v1345 = vunpack.c.h.b16 %v265
    %v1346 = vunpack.c.l.b16 %v266
    %v1347 = vunpack.c.h.b16 %v266
    %v1348 = vunpack.c.l.b16 %v267
    %v1349 = vunpack.c.h.b16 %v267
    %v1350 = vunpack.c.l.b16 %v268
    %v1351 = vunpack.c.h.b16 %v268
    %v1352 = vunpack.c.l.b16 %v269
    %v1353 = vunpack.c.h.b16 %v269
    %v1354 = vunpack.c.l.b16 %v270
    %v1355 = vunpack.c.h.b16 %v270
    %v1356 = vunpack.c.l.b16 %v271
    %v1357 = vunpack.c.h.b16 %v271
    %v1358 = vunpack.c.l.b16 %v272
    %v1359 = vunpack.c.h.b16 %v272
    %v1360 = vunpack.c.l.b16 %v273
    %v1361 = vunpack.c.h.b16 %v273
    %v1362 = vunpack.c.l.b16 %v274
    %v1363 = vunpack.c.h.b16 %v274
    %v1364 = vunpack.c.l.b16 %v275
    %v1365 = vunpack.c.h.b16 %v275
    %v1366 = vunpack.c.l.b16 %v276
    %v1367 = vunpack.c.h.b16 %v276
    %v1368 = vunpack.c.l.b16 %v277
    %v1369 = vunpack.c.h.b16 %v277
    %v1370 = vunpack.c.l.b16 %v278
    %v1371 = vunpack.c.h.b16 %v278
    %v1372 = vunpack.c.l.b16 %v279
    %v1373 = vunpack.c.h.b16 %v279
    %v1374 = vunpack.c.l.b16 %v280
    %v1375 = vunpack.c.h.b16 %v280
    %v1376 = vunpack.c.l.b16 %v281
    %v1377 = vunpack.c.h.b16 %v281
    %v1378 = vunpack.c.l.b16 %v282
    %v1379 = vunpack.c.h.b16 %v282
    %v1380 = vunpack.c.l.b16 %v283
    %v1381 = vunpack.c.h.b16 %v283
    %v1382 = vunpack.c.l.b16 %v284
    %v1383 = vunpack.c.h.b16 %v284
    %v1384 = vunpack.c.l.b16 %v285
    %v1385 = vunpack.c.h.b16 %v285
    %v1386 = vunpack.c.l.b16 %v286
    %v1387 = vunpack.c.h.b16 %v286
    %v1388 = vunpack.c.l.b16 %v287
    %v1389 = vunpack.c.h.b16 %v287
    %v1390 = vunpack.c.l.b16 %v288
    %v1391 = vunpack.c.h.b16 %v288
    %v1392 = vunpack.c.l.b16 %v289
    %v1393 = vunpack.c.h.b16 %v289
    %v1394 = vunpack.c.l.b16 %v290
    %v1395 = vunpack.c.h.b16 %v290
    %v1396 = vunpack.c.l.b16 %v291
    %v1397 = vunpack.c.h.b16 %v291
    %v1398 = vunpack.c.l.b16 %v292
    %v1399 = vunpack.c.h.b16 %v292
    %v1400 = vunpack.c.l.b16 %v293
    %v1401 = vunpack.c.h.b16 %v293
    %v1402 = vunpack.c.l.b16 %v294
    %v1403 = vunpack.c.h.b16 %v294
    %v1404 = vunpack.c.l.b16 %v295
    %v1405 = vunpack.c.h.b16 %v295
    %v1406 = vunpack.c.l.b16 %v296
    %v1407 = vunpack.c.h.b16 %v296
    %v1408 = vunpack.c.l.b16 %v297
    %v1409 = vunpack.c.h.b16 %v297
    %v1410 = vunpack.c.l.b16 %v298
    %v1411 = vunpack.c.h.b16 %v298
    %v1412 = vunpack.c.l.b16 %v299
    %v1413 = vunpack.c.h.b16 %v299
    %v1414 = vunpack.c.l.b16 %v300
    %v1415 = vunpack.c.h.b16 %v300
    %v1416 = vunpack.c.l.b16 %v301
    %v1417 = vunpack.c.h.b16 %v301
    %v1418 = vunpack.c.l.b16 %v302
    %v1419 = vunpack.c.h.b16 %v302
    %v1420 = vunpack.c.l.b16 %v303
    %v1421 = vunpack.c.h.b16 %v303
    %v1422 = vunpack.c.l.b16 %v304
    %v1423 = vunpack.c.h.b16 %v304
    %v1424 = vunpack.c.l.b16 %v305
    %v1425 = vunpack.c.h.b16 %v305
    %v1426 = vunpack.c.l.b16 %v306
    %v1427 = vunpack.c.h.b16 %v306
    %v1428 = vunpack.c.l.b16 %v307
    %v1429 = vunpack.c.h.b16 %v307
    %v1430 = vunpack.c.l.b16 %v308
    %v1431 = vunpack.c.h.b16 %v308
    %v1432 = vunpack.c.l.b16 %v309
    %v1433 = vunpack.c.h.b16 %v309
    %v1434 = vunpack.c.l.b16 %v310
    %v1435 = vunpack.c.h.b16 %v310
    %v1436 = vunpack.c.l.b16 %v311
    %v1437 = vunpack.c.h.b16 %v311
    %v1438 = vunpack.c.l.b16 %v312
    %v1439 = vunpack.c.h.b16 %v312
    %v1440 = vunpack.c.l.b16 %v313
    %v1441 = vunpack.c.h.b16 %v313
    %v1442 = vunpack.c.l.b16 %v314
    %v1443 = vunpack.c.h.b16 %v314
    %v1444 = vunpack.c.l.b16 %v315
    %v1445 = vunpack.c.h.b16 %v315
    %v1446 = vunpack.c.l.b16 %v316
    %v1447 = vunpack.c.h.b16 %v316
    %v1448 = vunpack.c.l.b16 %v317
    %v1449 = vunpack.c.h.b16 %v317
    %v1450 = vunpack.c.l.b16 %v318
    %v1451 = vunpack.c.h.b16 %v318
    %v1452 = vunpack.c.l.b16 %v319
    %v1453 = vunpack.c.h.b16 %v319
    %v1454 = vunpack.c.l.b16 %v320
    %v1455 = vunpack.c.h.b16 %v320
    %v1456 = vunpack.c.l.b16 %v321
    %v1457 = vunpack.c.h.b16 %v321
    %v1458 = vunpack.c.l.b16 %v322
    %v1459 = vunpack.c.h.b16 %v322
    %v1460 = vunpack.c.l.b16 %v323
    %v1461 = vunpack.c.h.b16 %v323
    %v1462 = vunpack.c.l.b16 %v324
    %v1463 = vunpack.c.h.b16 %v324
    %v1464 = vunpack.c.l.b16 %v325
    %v1465 = vunpack.c.h.b16 %v325
    %v1466 = vunpack.c.l.b16 %v326
    %v1467 = vunpack.c.h.b16 %v326
    %v1468 = vunpack.c.l.b16 %v327
    %v1469 = vunpack.c.h.b16 %v327
    %v1470 = vunpack.c.l.b16 %v328
    %v1471 = vunpack.c.h.b16 %v328
    %v1472 = vunpack.c.l.b16 %v329
    %v1473 = vunpack.c.h.b16 %v329
    %v1474 = vunpack.c.l.b16 %v330
    %v1475 = vunpack.c.h.b16 %v330
    %v1476 = vunpack.c.l.b16 %v331
    %v1477 = vunpack.c.h.b16 %v331
    %v1478 = vunpack.c.l.b16 %v332
    %v1479 = vunpack.c.h.b16 %v332
    %v1480 = vunpack.c.l.b16 %v333
    %v1481 = vunpack.c.h.b16 %v333
    %v1482 = vunpack.c.l.b16 %v334
    %v1483 = vunpack.c.h.b16 %v334
    %v1484 = vunpack.c.l.b16 %v335
    %v1485 = vunpack.c.h.b16 %v335
    %v1486 = vunpack.c.l.b16 %v336
    %v1487 = vunpack.c.h.b16 %v336
    %v1488 = vunpack.c.l.b16 %v337
    %v1489 = vunpack.c.h.b16 %v337
    %v1490 = vunpack.c.l.b16 %v338
    %v1491 = vunpack.c.h.b16 %v338
    %v1492 = vunpack.c.l.b16 %v339
    %v1493 = vunpack.c.h.b16 %v339
    %v1494 = vunpack.c.l.b16 %v340
    %v1495 = vunpack.c.h.b16 %v340
    %v1496 = vunpack.c.l.b16 %v341
    %v1497 = vunpack.c.h.b16 %v341
    %v1498 = vunpack.c.l.b16 %v342
    %v1499 = vunpack.c.h.b16 %v342
    %v1500 = vunpack.c.l.b16 %v343
    %v1501 = vunpack.c.h.b16 %v343
    %v1502 = vunpack.c.l.b16 %v344
    %v1503 = vunpack.c.h.b16 %v344
    %v1504 = vunpack.c.l.b16 %v345
    %v1505 = vunpack.c.h.b16 %v345
    %v1506 = vunpack.c.l.b16 %v346
    %v1507 = vunpack.c.h.b16 %v346
    %v1508 = vunpack.c.l.b16 %v347
    %v1509 = vunpack.c.h.b16 %v347
    %v1510 = vunpack.c.l.b16 %v348
    %v1511 = vunpack.c.h.b16 %v348
    %v1512 = vunpack.c.l.b16 %v349
    %v1513 = vunpack.c.h.b16 %v349
    %v1514 = vunpack.c.l.b16 %v350
    %v1515 = vunpack.c.h.b16 %v350
    %v1516 = vunpack.c.l.b16 %v351
    %v1517 = vunpack.c.h.b16 %v351
    %v1518 = vunpack.c.l.b16 %v352
    %v1519 = vunpack.c.h.b16 %v352
    %v1520 = vunpack.c.l.b16 %v353
    %v1521 = vunpack.c.h.b16 %v353
    %v1522 = vunpack.c.l.b16 %v354
    %v1523 = vunpack.c.h.b16 %v354
    %v1524 = vunpack.c.l.b16 %v355
    %v1525 = vunpack.c.h.b16 %v355
    %v1526 = vunpack.c.l.b16 %v356
    %v1527 = vunpack.c.h.b16 %v356
    %v1528 = vunpack.c.l.b16 %v357
    %v1529 = vunpack.c.h.b16 %v357
    %v1530 = vunpack.c.l.b16 %v358
    %v1531 = vunpack.c.h.b16 %v358
    %v1532 = vunpack.c.l.b16 %v359
    %v1533 = vunpack.c.h.b16 %v359
    %v1534 = vunpack.c.l.b16 %v360
    %v1535 = vunpack.c.h.b16 %v360
    %v1536 = vunpack.c.l.b16 %v361
    %v1537 = vunpack.c.h.b16 %v361
    %v1538 = vunpack.c.l.b16 %v362
    %v1539 = vunpack.c.h.b16 %v362
    %v1540 = vunpack.c.l.b16 %v363
    %v1541 = vunpack.c.h.b16 %v363
    %v1542 = vunpack.c.l.b16 %v364
    %v1543 = vunpack.c.h.b16 %v364
    %v1544 = vunpack.c.l.b16 %v365
    %v1545 = vunpack.c.h.b16 %v365
    %v1546 = vunpack.c.l.b16 %v366
    %v1547 = vunpack.c.h.b16 %v366
    %v1548 = vunpack.c.l.b16 %v367
    %v1549 = vunpack.c.h.b16 %v367
    %v1550 = vunpack.c.l.b16 %v368
    %v1551 = vunpack.c.h.b16 %v368
    %v1552 = vunpack.c.l.b16 %v369
    %v1553 = vunpack.c.h.b16 %v369
    %v1554 = vunpack.c.l.b16 %v370
    %v1555 = vunpack.c.h.b16 %v370
    %v1556 = vunpack.c.l.b16 %v371
    %v1557 = vunpack.c.h.b16 %v371
    %v1558 = vunpack.c.l.b16 %v372
    %v1559 = vunpack.c.h.b16 %v372
    %v1560 = vunpack.c.l.b16 %v373
    %v1561 = vunpack.c.h.b16 %v373
    %v1562 = vunpack.c.l.b16 %v374
    %v1563 = vunpack.c.h.b16 %v374
    %v1564 = vunpack.c.l.b16 %v375
    %v1565 = vunpack.c.h.b16 %v375
    %v1566 = vunpack.c.l.b16 %v376
    %v1567 = vunpack.c.h.b16 %v376
    %v1568 = vunpack.c.l.b16 %v377
    %v1569 = vunpack.c.h.b16 %v377
    %v1570 = vunpack.c.l.b16 %v378
    %v1571 = vunpack.c.h.b16 %v378
    %v1572 = vunpack.c.l.b16 %v379
    %v1573 = vunpack.c.h.b16 %v379
    %v1574 = vunpack.c.l.b16 %v380
    %v1575 = vunpack.c.h.b16 %v380
    %v1576 = vunpack.c.l.b16 %v381
    %v1577 = vunpack.c.h.b16 %v381
    %v1578 = vunpack.c.l.b16 %v382
    %v1579 = vunpack.c.h.b16 %v382
    %v1580 = vunpack.c.l.b16 %v383
    %v1581 = vunpack.c.h.b16 %v383
    %v1582 = vunpack.c.l.b16 %v384
    %v1583 = vunpack.c.h.b16 %v384
    %v1584 = vunpack.c.l.b16 %v385
    %v1585 = vunpack.c.h.b16 %v385
    %v1586 = vunpack.c.l.b16 %v386
    %v1587 = vunpack.c.h.b16 %v386
    %v1588 = vunpack.c.l.b16 %v387
    %v1589 = vunpack.c.h.b16 %v387
    %v1590 = vunpack.c.l.b16 %v388
    %v1591 = vunpack.c.h.b16 %v388
    %v1592 = vunpack.c.l.b16 %v389
    %v1593 = vunpack.c.h.b16 %v389
    %v1594 = vunpack.c.l.b16 %v390
    %v1595 = vunpack.c.h.b16 %v390
    %v1596 = vunpack.c.l.b16 %v391
    %v1597 = vunpack.c.h.b16 %v391
    %v1598 = vunpack.c.l.b16 %v392
    %v1599 = vunpack.c.h.b16 %v392
    %v1600 = vunpack.c.l.b16 %v393
    %v1601 = vunpack.c.h.b16 %v393
    %v1602 = vunpack.c.l.b16 %v394
    %v1603 = vunpack.c.h.b16 %v394
    %v1604 = vunpack.c.l.b16 %v395
    %v1605 = vunpack.c.h.b16 %v395
    %v1606 = vunpack.c.l.b16 %v396
    %v1607 = vunpack.c.h.b16 %v396
    %v1608 = vunpack.c.l.b16 %v397
    %v1609 = vunpack.c.h.b16 %v397
    %v1610 = vunpack.c.l.b16 %v398
    %v1611 = vunpack.c.h.b16 %v398
    %v1612 = vunpack.c.l.b16 %v399
    %v1613 = vunpack.c.h.b16 %v399
    %v1614 = vunpack.c.l.b16 %v400
    %v1615 = vunpack.c.h.b16 %v400
    %v1616 = vunpack.c.l.b16 %v401
    %v1617 = vunpack.c.h.b16 %v401
    %v1618 = vunpack.c.l.b16 %v402
    %v1619 = vunpack.c.h.b16 %v402
    %v1620 = vunpack.c.l.b16 %v403
    %v1621 = vunpack.c.h.b16 %v403
    %v1622 = vunpack.c.l.b16 %v404
    %v1623 = vunpack.c.h.b16 %v404
    %v1624 = vunpack.c.l.b16 %v405
    %v1625 = vunpack.c.h.b16 %v405
    %v1626 = vunpack.c.l.b16 %v406
    %v1627 = vunpack.c.h.b16 %v406
    %v1628 = vunpack.c.l.b16 %v407
    %v1629 = vunpack.c.h.b16 %v407
    %v1630 = vunpack.c.l.b16 %v408
    %v1631 = vunpack.c.h.b16 %v408
    %v1632 = vunpack.c.l.b16 %v409
    %v1633 = vunpack.c.h.b16 %v409
    %v1634 = vunpack.c.l.b16 %v410
    %v1635 = vunpack.c.h.b16 %v410
    %v1636 = vunpack.c.l.b16 %v411
    %v1637 = vunpack.c.h.b16 %v411
    %v1638 = vunpack.c.l.b16 %v412
    %v1639 = vunpack.c.h.b16 %v412
    %v1640 = vunpack.c.l.b16 %v413
    %v1641 = vunpack.c.h.b16 %v413
    %v1642 = vunpack.c.l.b16 %v414
    %v1643 = vunpack.c.h.b16 %v414
    %v1644 = vunpack.c.l.b16 %v415
    %v1645 = vunpack.c.h.b16 %v415
    %v1646 = vunpack.c.l.b16 %v416
    %v1647 = vunpack.c.h.b16 %v416
    %v1648 = vunpack.c.l.b16 %v417
    %v1649 = vunpack.c.h.b16 %v417
    %v1650 = vunpack.c.l.b16 %v418
    %v1651 = vunpack.c.h.b16 %v418
    %v1652 = vunpack.c.l.b16 %v419
    %v1653 = vunpack.c.h.b16 %v419
    %v1654 = vunpack.c.l.b16 %v420
    %v1655 = vunpack.c.h.b16 %v420
    %v1656 = vunpack.c.l.b16 %v421
    %v1657 = vunpack.c.h.b16 %v421
    %v1658 = vunpack.c.l.b16 %v422
    %v1659 = vunpack.c.h.b16 %v422
    %v1660 = vunpack.c.l.b16 %v423
    %v1661 = vunpack.c.h.b16 %v423
    %v1662 = vunpack.c.l.b16 %v424
    %v1663 = vunpack.c.h.b16 %v424
    %v1664 = vunpack.c.l.b16 %v425
    %v1665 = vunpack.c.h.b16 %v425
    %v1666 = vunpack.c.l.b16 %v426
    %v1667 = vunpack.c.h.b16 %v426
    %v1668 = vunpack.c.l.b16 %v427
    %v1669 = vunpack.c.h.b16 %v427
    %v1670 = vunpack.c.l.b16 %v428
    %v1671 = vunpack.c.h.b16 %v428
    %v1672 = vunpack.c.l.b16 %v429
    %v1673 = vunpack.c.h.b16 %v429
    %v1674 = vunpack.c.l.b16 %v430
    %v1675 = vunpack.c.h.b16 %v430
    %v1676 = vunpack.c.l.b16 %v431
    %v1677 = vunpack.c.h.b16 %v431
    %v1678 = vunpack.c.l.b16 %v432
    %v1679 = vunpack.c.h.b16 %v432
    %v1680 = vunpack.c.l.b16 %v433
    %v1681 = vunpack.c.h.b16 %v433
    %v1682 = vunpack.c.l.b16 %v434
    %v1683 = vunpack.c.h.b16 %v434
    %v1684 = vunpack.c.l.b16 %v435
    %v1685 = vunpack.c.h.b16 %v435
    %v1686 = vunpack.c.l.b16 %v436
    %v1687 = vunpack.c.h.b16 %v436
    %v1688 = vunpack.c.l.b16 %v437
    %v1689 = vunpack.c.h.b16 %v437
    %v1690 = vunpack.c.l.b16 %v438
    %v1691 = vunpack.c.h.b16 %v438
    %v1692 = vunpack.c.l.b16 %v439
    %v1693 = vunpack.c.h.b16 %v439
    %v1694 = vunpack.c.l.b16 %v440
    %v1695 = vunpack.c.h.b16 %v440
    %v1696 = vunpack.c.l.b16 %v441
    %v1697 = vunpack.c.h.b16 %v441
    %v1698 = vunpack.c.l.b16 %v442
    %v1699 = vunpack.c.h.b16 %v442
    %v1700 = vunpack.c.l.b16 %v443
    %v1701 = vunpack.c.h.b16 %v443
    %v1702 = vunpack.c.l.b16 %v444
    %v1703 = vunpack.c.h.b16 %v444
    %v1704 = vunpack.c.l.b16 %v445
    %v1705 = vunpack.c.h.b16 %v445
    %v1706 = vunpack.c.l.b16 %v446
    %v1707 = vunpack.c.h.b16 %v446
    %v1708 = vunpack.c.l.b16 %v447
    %v1709 = vunpack.c.h.b16 %v447
    %v1710 = vunpack.c.l.b16 %v448
    %v1711 = vunpack.c.h.b16 %v448
    %v1712 = vunpack.c.l.b16 %v449
    %v1713 = vunpack.c.h.b16 %v449
    %v1714 = vunpack.c.l.b16 %v450
    %v1715 = vunpack.c.h.b16 %v450
    %v1716 = vunpack.c.l.b16 %v451
    %v1717 = vunpack.c.h.b16 %v451
    %v1718 = vunpack.c.l.b16 %v452
    %v1719 = vunpack.c.h.b16 %v452
    %v1720 = vunpack.c.l.b16 %v453
    %v1721 = vunpack.c.h.b16 %v453
    %v1722 = vunpack.c.l.b16 %v454
    %v1723 = vunpack.c.h.b16 %v454
    %v1724 = vunpack.c.l.b16 %v455
    %v1725 = vunpack.c.h.b16 %v455
    %v1726 = vunpack.c.l.b16 %v456
    %v1727 = vunpack.c.h.b16 %v456
    %v1728 = vunpack.c.l.b16 %v457
    %v1729 = vunpack.c.h.b16 %v457
    %v1730 = vunpack.c.l.b16 %v458
    %v1731 = vunpack.c.h.b16 %v458
    %v1732 = vunpack.c.l.b16 %v459
    %v1733 = vunpack.c.h.b16 %v459
    %v1734 = vunpack.c.l.b16 %v460
    %v1735 = vunpack.c.h.b16 %v460
    %v1736 = vunpack.c.l.b16 %v461
    %v1737 = vunpack.c.h.b16 %v461
    %v1738 = vunpack.c.l.b16 %v462
    %v1739 = vunpack.c.h.b16 %v462
    %v1740 = vunpack.c.l.b16 %v463
    %v1741 = vunpack.c.h.b16 %v463
    %v1742 = vunpack.c.l.b16 %v464
    %v1743 = vunpack.c.h.b16 %v464
    %v1744 = vunpack.c.l.b16 %v465
    %v1745 = vunpack.c.h.b16 %v465
    %v1746 = vunpack.c.l.b16 %v466
    %v1747 = vunpack.c.h.b16 %v466
    %v1748 = vunpack.c.l.b16 %v467
    %v1749 = vunpack.c.h.b16 %v467
    %v1750 = vunpack.c.l.b16 %v468
    %v1751 = vunpack.c.h.b16 %v468
    %v1752 = vunpack.c.l.b16 %v469
    %v1753 = vunpack.c.h.b16 %v469
    %v1754 = vunpack.c.l.b16 %v470
    %v1755 = vunpack.c.h.b16 %v470
    %v1756 = vunpack.c.l.b16 %v471
    %v1757 = vunpack.c.h.b16 %v471
    %v1758 = vunpack.c.l.b16 %v472
    %v1759 = vunpack.c.h.b16 %v472
    %v1760 = vunpack.c.l.b16 %v473
    %v1761 = vunpack.c.h.b16 %v473
    %v1762 = vunpack.c.l.b16 %v474
    %v1763 = vunpack.c.h.b16 %v474
    %v1764 = vunpack.c.l.b16 %v475
    %v1765 = vunpack.c.h.b16 %v475
    %v1766 = vunpack.c.l.b16 %v476
    %v1767 = vunpack.c.h.b16 %v476
    %v1768 = vunpack.c.l.b16 %v477
    %v1769 = vunpack.c.h.b16 %v477
    %v1770 = vunpack.c.l.b16 %v478
    %v1771 = vunpack.c.h.b16 %v478
    %v1772 = vunpack.c.l.b16 %v479
    %v1773 = vunpack.c.h.b16 %v479
    %v1774 = vunpack.c.l.b16 %v480
    %v1775 = vunpack.c.h.b16 %v480
    %v1776 = vunpack.c.l.b16 %v481
    %v1777 = vunpack.c.h.b16 %v481
    %v1778 = vunpack.c.l.b16 %v482
    %v1779 = vunpack.c.h.b16 %v482
    %v1780 = vunpack.c.l.b16 %v483
    %v1781 = vunpack.c.h.b16 %v483
    %v1782 = vunpack.c.l.b16 %v484
    %v1783 = vunpack.c.h.b16 %v484
    %v1784 = vunpack.c.l.b16 %v485
    %v1785 = vunpack.c.h.b16 %v485
    %v1786 = vunpack.c.l.b16 %v486
    %v1787 = vunpack.c.h.b16 %v486
    %v1788 = vunpack.c.l.b16 %v487
    %v1789 = vunpack.c.h.b16 %v487
    %v1790 = vunpack.c.l.b16 %v488
    %v1791 = vunpack.c.h.b16 %v488
    %v1792 = vunpack.c.l.b16 %v489
    %v1793 = vunpack.c.h.b16 %v489
    %v1794 = vunpack.c.l.b16 %v490
    %v1795 = vunpack.c.h.b16 %v490
    %v1796 = vunpack.c.l.b16 %v491
    %v1797 = vunpack.c.h.b16 %v491
    %v1798 = vunpack.c.l.b16 %v492
    %v1799 = vunpack.c.h.b16 %v492
    %v1800 = vunpack.c.l.b16 %v493
    %v1801 = vunpack.c.h.b16 %v493
    %v1802 = vunpack.c.l.b16 %v494
    %v1803 = vunpack.c.h.b16 %v494
    %v1804 = vunpack.c.l.b16 %v495
    %v1805 = vunpack.c.h.b16 %v495
    %v1806 = vunpack.c.l.b16 %v496
    %v1807 = vunpack.c.h.b16 %v496
    %v1808 = vunpack.c.l.b16 %v497
    %v1809 = vunpack.c.h.b16 %v497
    %v1810 = vunpack.c.l.b16 %v498
    %v1811 = vunpack.c.h.b16 %v498
    %v1812 = vunpack.c.l.b16 %v499
    %v1813 = vunpack.c.h.b16 %v499
    %v1814 = vunpack.c.l.b16 %v500
    %v1815 = vunpack.c.h.b16 %v500
    %v1816 = vunpack.c.l.b16 %v501
    %v1817 = vunpack.c.h.b16 %v501
    %v1818 = vunpack.c.l.b16 %v502
    %v1819 = vunpack.c.h.b16 %v502
    %v1820 = vunpack.c.l.b16 %v503
    %v1821 = vunpack.c.h.b16 %v503
    %v1822 = vunpack.c.l.b16 %v504
    %v1823 = vunpack.c.h.b16 %v504
    %v1824 = vunpack.c.l.b16 %v505
    %v1825 = vunpack.c.h.b16 %v505
    %v1826 = vunpack.c.l.b16 %v506
    %v1827 = vunpack.c.h.b16 %v506
    %v1828 = vunpack.c.l.b16 %v507
    %v1829 = vunpack.c.h.b16 %v507
    %v1830 = vunpack.c.l.b16 %v508
    %v1831 = vunpack.c.h.b16 %v508
    %v1832 = vunpack.c.l.b16 %v509
    %v1833 = vunpack.c.h.b16 %v509
    %v1834 = vunpack.c.l.b16 %v510
    %v1835 = vunpack.c.h.b16 %v510
    %v1836 = vunpack.c.l.b16 %v511
    %v1837 = vunpack.c.h.b16 %v511
    %v1838 = vunpack.c.l.b16 %v512
    %v1839 = vunpack.c.h.b16 %v512
    %v1840 = vunpack.c.l.b16 %v513
    %v1841 = vunpack.c.h.b16 %v513
    %v1842 = vunpack.c.l.b16 %v514
    %v1843 = vunpack.c.h.b16 %v514
    %v1844 = vunpack.c.l.b16 %v515
    %v1845 = vunpack.c.h.b16 %v515
    %v1846 = vunpack.c.l.b16 %v516
    %v1847 = vunpack.c.h.b16 %v516
    %v1848 = vunpack.c.l.b16 %v517
    %v1849 = vunpack.c.h.b16 %v517
    %v1850 = vunpack.c.l.b16 %v518
    %v1851 = vunpack.c.h.b16 %v518
    %v1852 = vunpack.c.l.b16 %v519
    %v1853 = vunpack.c.h.b16 %v519
    %v1854 = vunpack.c.l.b16 %v520
    %v1855 = vunpack.c.h.b16 %v520
    %v1856 = vunpack.c.l.b16 %v521
    %v1857 = vunpack.c.h.b16 %v521
    %v1858 = vunpack.c.l.b16 %v522
    %v1859 = vunpack.c.h.b16 %v522
    %v1860 = vunpack.c.l.b16 %v523
    %v1861 = vunpack.c.h.b16 %v523
    %v1862 = vunpack.c.l.b16 %v524
    %v1863 = vunpack.c.h.b16 %v524
    %v1864 = vunpack.c.l.b16 %v525
    %v1865 = vunpack.c.h.b16 %v525
    %v1866 = vunpack.c.l.b16 %v526
    %v1867 = vunpack.c.h.b16 %v526
    %v1868 = vunpack.c.l.b16 %v527
    %v1869 = vunpack.c.h.b16 %v527
    %v1870 = vunpack.c.l.b16 %v528
    %v1871 = vunpack.c.h.b16 %v528
    %v1872 = vunpack.c.l.b16 %v529
    %v1873 = vunpack.c.h.b16 %v529
    %v1874 = vunpack.c.l.b16 %v530
    %v1875 = vunpack.c.h.b16 %v530
    %v1876 = vunpack.c.l.b16 %v531
    %v1877 = vunpack.c.h.b16 %v531
    %v1878 = vunpack.c.l.b16 %v532
    %v1879 = vunpack.c.h.b16 %v532
    %v1880 = vunpack.c.l.b16 %v533
    %v1881 = vunpack.c.h.b16 %v533
    %v1882 = vunpack.c.l.b16 %v534
    %v1883 = vunpack.c.h.b16 %v534
    %v1884 = vunpack.c.l.b16 %v535
    %v1885 = vunpack.c.h.b16 %v535
    %v1886 = vunpack.c.l.b16 %v536
    %v1887 = vunpack.c.h.b16 %v536
    %v1888 = vunpack.c.l.b16 %v537
    %v1889 = vunpack.c.h.b16 %v537
    %v1890 = vunpack.c.l.b16 %v538
    %v1891 = vunpack.c.h.b16 %v538
    %v1892 = vunpack.c.l.b16 %v539
    %v1893 = vunpack.c.h.b16 %v539
    %v1894 = vunpack.c.l.b16 %v540
    %v1895 = vunpack.c.h.b16 %v540
    %v1896 = vunpack.c.l.b16 %v541
    %v1897 = vunpack.c.h.b16 %v541
    %v1898 = vunpack.c.l.b16 %v542
    %v1899 = vunpack.c.h.b16 %v542
    %v1900 = vunpack.c.l.b16 %v543
    %v1901 = vunpack.c.h.b16 %v543
    %v1902 = vunpack.c.l.b16 %v544
    %v1903 = vunpack.c.h.b16 %v544
    %v1904 = vunpack.c.l.b16 %v545
    %v1905 = vunpack.c.h.b16 %v545
    %v1906 = vunpack.c.l.b16 %v546
    %v1907 = vunpack.c.h.b16 %v546
    %v1908 = vunpack.c.l.b16 %v547
    %v1909 = vunpack.c.h.b16 %v547
    %v1910 = vunpack.c.l.b16 %v548
    %v1911 = vunpack.c.h.b16 %v548
    %v1912 = vunpack.c.l.b16 %v549
    %v1913 = vunpack.c.h.b16 %v549
    %v1914 = vunpack.c.l.b16 %v550
    %v1915 = vunpack.c.h.b16 %v550
    %v1916 = vunpack.c.l.b16 %v551
    %v1917 = vunpack.c.h.b16 %v551
    %v1918 = vunpack.c.l.b16 %v552
    %v1919 = vunpack.c.h.b16 %v552
    %v1920 = vunpack.c.l.b16 %v553
    %v1921 = vunpack.c.h.b16 %v553
    %v1922 = vunpack.c.l.b16 %v554
    %v1923 = vunpack.c.h.b16 %v554
    %v1924 = vunpack.c.l.b16 %v555
    %v1925 = vunpack.c.h.b16 %v555
    %v1926 = vunpack.c.l.b16 %v556
    %v1927 = vunpack.c.h.b16 %v556
    %v1928 = vunpack.c.l.b16 %v557
    %v1929 = vunpack.c.h.b16 %v557
    %v1930 = vunpack.c.l.b16 %v558
    %v1931 = vunpack.c.h.b16 %v558
    %v1932 = vunpack.c.l.b16 %v559
    %v1933 = vunpack.c.h.b16 %v559
    %v1934 = vunpack.c.l.b16 %v560
    %v1935 = vunpack.c.h.b16 %v560
    %v1936 = vunpack.c.l.b16 %v561
    %v1937 = vunpack.c.h.b16 %v561
    %v1938 = vunpack.c.l.b16 %v562
    %v1939 = vunpack.c.h.b16 %v562
    %v1940 = vunpack.c.l.b16 %v563
    %v1941 = vunpack.c.h.b16 %v563
    %v1942 = vunpack.c.l.b16 %v564
    %v1943 = vunpack.c.h.b16 %v564
    %v1944 = vunpack.c.l.b16 %v565
    %v1945 = vunpack.c.h.b16 %v565
    %v1946 = vunpack.c.l.b16 %v566
    %v1947 = vunpack.c.h.b16 %v566
    %v1948 = vunpack.c.l.b16 %v567
    %v1949 = vunpack.c.h.b16 %v567
    %v1950 = vunpack.c.l.b16 %v568
    %v1951 = vunpack.c.h.b16 %v568
    %v1952 = vunpack.c.l.b16 %v569
    %v1953 = vunpack.c.h.b16 %v569
    %v1954 = vunpack.c.l.b16 %v570
    %v1955 = vunpack.c.h.b16 %v570
    %v1956 = vunpack.c.l.b16 %v571
    %v1957 = vunpack.c.h.b16 %v571
    %v1958 = vunpack.c.l.b16 %v572
    %v1959 = vunpack.c.h.b16 %v572
    %v1960 = vunpack.c.l.b16 %v573
    %v1961 = vunpack.c.h.b16 %v573
    %v1962 = vunpack.c.l.b16 %v574
    %v1963 = vunpack.c.h.b16 %v574
    %v1964 = vunpack.c.l.b16 %v575
    %v1965 = vunpack.c.h.b16 %v575
    %v1966 = vunpack.c.l.b16 %v576
    %v1967 = vunpack.c.h.b16 %v576
    %v1968 = vunpack.c.l.b16 %v577
    %v1969 = vunpack.c.h.b16 %v577
    %v1970 = vunpack.c.l.b16 %v578
    %v1971 = vunpack.c.h.b16 %v578
    %v1972 = vunpack.c.l.b16 %v579
    %v1973 = vunpack.c.h.b16 %v579
    %v1974 = vunpack.c.l.b16 %v580
    %v1975 = vunpack.c.h.b16 %v580
    %v1976 = vunpack.c.l.b16 %v581
    %v1977 = vunpack.c.h.b16 %v581
    %v1978 = vunpack.c.l.b16 %v582
    %v1979 = vunpack.c.h.b16 %v582
    %v1980 = vunpack.c.l.b16 %v583
    %v1981 = vunpack.c.h.b16 %v583
    %v1982 = vunpack.c.l.b16 %v584
    %v1983 = vunpack.c.h.b16 %v584
    %v1984 = vunpack.c.l.b16 %v585
    %v1985 = vunpack.c.h.b16 %v585
    %v1986 = vunpack.c.l.b16 %v586
    %v1987 = vunpack.c.h.b16 %v586
    %v1988 = vunpack.c.l.b16 %v587
    %v1989 = vunpack.c.h.b16 %v587
    %v1990 = vunpack.c.l.b16 %v588
    %v1991 = vunpack.c.h.b16 %v588
    %v1992 = vunpack.c.l.b16 %v589
    %v1993 = vunpack.c.h.b16 %v589
    %v1994 = vunpack.c.l.b16 %v590
    %v1995 = vunpack.c.h.b16 %v590
    %v1996 = vunpack.c.l.b16 %v591
    %v1997 = vunpack.c.h.b16 %v591
    %v1998 = vunpack.c.l.b16 %v592
    %v1999 = vunpack.c.h.b16 %v592
    %v2000 = vunpack.c.l.b16 %v593
    %v2001 = vunpack.c.h.b16 %v593
    %v2002 = vunpack.c.l.b16 %v594
    %v2003 = vunpack.c.h.b16 %v594
    %v2004 = vunpack.c.l.b16 %v595
    %v2005 = vunpack.c.h.b16 %v595
    %v2006 = vunpack.c.l.b16 %v596
    %v2007 = vunpack.c.h.b16 %v596
    %v2008 = vunpack.c.l.b16 %v597
    %v2009 = vunpack.c.h.b16 %v597
    %v2010 = vunpack.c.l.b16 %v598
    %v2011 = vunpack.c.h.b16 %v598
    %v2012 = vunpack.c.l.b16 %v599
    %v2013 = vunpack.c.h.b16 %v599
    %v2014 = vunpack.c.l.b16 %v600
    %v2015 = vunpack.c.h.b16 %v600
    %v2016 = vpack.c.b16 %v1124, %v1120
    %v2017 = vpack.c.b16 %v1125, %v1121
    %v2018 = vpack.c.b16 %v1126, %v1122
    %v2019 = vpack.c.b16 %v1127, %v1123
    %v2020 = vpack.c.b16 %v1132, %v1128
    %v2021 = vpack.c.b16 %v1133, %v1129
    %v2022 = vpack.c.b16 %v1134, %v1130
    %v2023 = vpack.c.b16 %v1135, %v1131
    %v2024 = vpack.c.b16 %v1140, %v1136
    %v2025 = vpack.c.b16 %v1141, %v1137
    %v2026 = vpack.c.b16 %v1142, %v1138
    %v2027 = vpack.c.b16 %v1143, %v1139
    %v2028 = vpack.c.b16 %v1148, %v1144
    %v2029 = vpack.c.b16 %v1149, %v1145
    %v2030 = vpack.c.b16 %v1150, %v1146
    %v2031 = vpack.c.b16 %v1151, %v1147
    %v2032 = vpack.c.b16 %v1156, %v1152
    %v2033 = vpack.c.b16 %v1157, %v1153
    %v2034 = vpack.c.b16 %v1158, %v1154
    %v2035 = vpack.c.b16 %v1159, %v1155
    %v2036 = vpack.c.b16 %v1164, %v1160
    %v2037 = vpack.c.b16 %v1165, %v1161
    %v2038 = vpack.c.b16 %v1166, %v1162
    %v2039 = vpack.c.b16 %v1167, %v1163
    %v2040 = vpack.c.b16 %v1172, %v1168
    %v2041 = vpack.c.b16 %v1173, %v1169
    %v2042 = vpack.c.b16 %v1174, %v1170
    %v2043 = vpack.c.b16 %v1175, %v1171
    %v2044 = vpack.c.b16 %v1180, %v1176
    %v2045 = vpack.c.b16 %v1181, %v1177
    %v2046 = vpack.c.b16 %v1182, %v1178
    %v2047 = vpack.c.b16 %v1183, %v1179
    %v2048 = vpack.c.b16 %v1188, %v1184
    %v2049 = vpack.c.b16 %v1189, %v1185
    %v2050 = vpack.c.b16 %v1190, %v1186
    %v2051 = vpack.c.b16 %v1191, %v1187
    %v2052 = vpack.c.b16 %v1196, %v1192
    %v2053 = vpack.c.b16 %v1197, %v1193
    %v2054 = vpack.c.b16 %v1198, %v1194
    %v2055 = vpack.c.b16 %v1199, %v1195
    %v2056 = vpack.c.b16 %v1204, %v1200
    %v2057 = vpack.c.b16 %v1205, %v1201
    %v2058 = vpack.c.b16 %v1206, %v1202
    %v2059 = vpack.c.b16 %v1207, %v1203
    %v2060 = vpack.c.b16 %v1212, %v1208
    %v2061 = vpack.c.b16 %v1213, %v1209
    %v2062 = vpack.c.b16 %v1214, %v1210
    %v2063 = vpack.c.b16 %v1215, %v1211
    %v2064 = vpack.c.b16 %v1220, %v1216
    %v2065 = vpack.c.b16 %v1221, %v1217
    %v2066 = vpack.c.b16 %v1222, %v1218
    %v2067 = vpack.c.b16 %v1223, %v1219
    %v2068 = vpack.c.b16 %v1228, %v1224
    %v2069 = vpack.c.b16 %v1229, %v1225
    %v2070 = vpack.c.b16 %v1230, %v1226
    %v2071 = vpack.c.b16 %v1231, %v1227
    %v2072 = vpack.c.b16 %v1236, %v1232
    %v2073 = vpack.c.b16 %v1237, %v1233
    %v2074 = vpack.c.b16 %v1238, %v1234
    %v2075 = vpack.c.b16 %v1239, %v1235
    %v2076 = vpack.c.b16 %v1244, %v1240
    %v2077 = vpack.c.b16 %v1245, %v1241
    %v2078 = vpack.c.b16 %v1246, %v1242
    %v2079 = vpack.c.b16 %v1247, %v1243
    %v2080 = vpack.c.b16 %v1252, %v1248
    %v2081 = vpack.c.b16 %v1253, %v1249
    %v2082 = vpack.c.b16 %v1254, %v1250
    %v2083 = vpack.c.b16 %v1255, %v1251
    %v2084 = vpack.c.b16 %v1260, %v1256
    %v2085 = vpack.c.b16 %v1261, %v1257
    %v2086 = vpack.c.b16 %v1262, %v1258
    %v2087 = vpack.c.b16 %v1263, %v1259
    %v2088 = vpack.c.b16 %v1268, %v1264
    %v2089 = vpack.c.b16 %v1269, %v1265
    %v2090 = vpack.c.b16 %v1270, %v1266
    %v2091 = vpack.c.b16 %v1271, %v1267
    %v2092 = vpack.c.b16 %v1276, %v1272
    %v2093 = vpack.c.b16 %v1277, %v1273
    %v2094 = vpack.c.b16 %v1278, %v1274
    %v2095 = vpack.c.b16 %v1279, %v1275
    %v2096 = vpack.c.b16 %v1284, %v1280
    %v2097 = vpack.c.b16 %v1285, %v1281
    %v2098 = vpack.c.b16 %v1286, %v1282
    %v2099 = vpack.c.b16 %v1287, %v1283
    %v2100 = vpack.c.b16 %v1292, %v1288
    %v2101 = vpack.c.b16 %v1293, %v1289
    %v2102 = vpack.c.b16 %v1294, %v1290
    %v2103 = vpack.c.b16 %v1295, %v1291
    %v2104 = vpack.c.b16 %v1300, %v1296
    %v2105 = vpack.c.b16 %v1301, %v1297
    %v2106 = vpack.c.b16 %v1302, %v1298
    %v2107 = vpack.c.b16 %v1303, %v1299
    %v2108 = vpack.c.b16 %v1308, %v1304
    %v2109 = vpack.c.b16 %v1309, %v1305
    %v2110 = vpack.c.b16 %v1310, %v1306
    %v2111 = vpack.c.b16 %v1311, %v1307
    %v2112 = vpack.c.b16 %v1316, %v1312
    %v2113 = vpack.c.b16 %v1317, %v1313
    %v2114 = vpack.c.b16 %v1318, %v1314
    %v2115 = vpack.c.b16 %v1319, %v1315
    %v2116 = vpack.c.b16 %v1324, %v1320
    %v2117 = vpack.c.b16 %v1325, %v1321
    %v2118 = vpack.c.b16 %v1326, %v1322
    %v2119 = vpack.c.b16 %v1327, %v1323
    %v2120 = vpack.c.b16 %v1332, %v1328
    %v2121 = vpack.c.b16 %v1333, %v1329
    %v2122 = vpack.c.b16 %v1334, %v1330
    %v2123 = vpack.c.b16 %v1335, %v1331
    %v2124 = vpack.c.b16 %v1340, %v1336
    %v2125 = vpack.c.b16 %v1341, %v1337
    %v2126 = vpack.c.b16 %v1342, %v1338
    %v2127 = vpack.c.b16 %v1343, %v1339
    %v2128 = vpack.c.b16 %v1348, %v1344
    %v2129 = vpack.c.b16 %v1349, %v1345
    %v2130 = vpack.c.b16 %v1350, %v1346
    %v2131 = vpack.c.b16 %v1351, %v1347
    %v2132 = vpack.c.b16 %v1356, %v1352
    %v2133 = vpack.c.b16 %v1357, %v1353
    %v2134 = vpack.c.b16 %v1358, %v1354
    %v2135 = vpack.c.b16 %v1359, %v1355
    %v2136 = vpack.c.b16 %v1364, %v1360
    %v2137 = vpack.c.b16 %v1365, %v1361
    %v2138 = vpack.c.b16 %v1366, %v1362
    %v2139 = vpack.c.b16 %v1367, %v1363
    %v2140 = vpack.c.b16 %v1372, %v1368
    %v2141 = vpack.c.b16 %v1373, %v1369
    %v2142 = vpack.c.b16 %v1374, %v1370
    %v2143 = vpack.c.b16 %v1375, %v1371
    %v2144 = vpack.c.b16 %v1380, %v1376
    %v2145 = vpack.c.b16 %v1381, %v1377
    %v2146 = vpack.c.b16 %v1382, %v1378
    %v2147 = vpack.c.b16 %v1383, %v1379
    %v2148 = vpack.c.b16 %v1388, %v1384
    %v2149 = vpack.c.b16 %v1389, %v1385
    %v2150 = vpack.c.b16 %v1390, %v1386
    %v2151 = vpack.c.b16 %v1391, %v1387
    %v2152 = vpack.c.b16 %v1396, %v1392
    %v2153 = vpack.c.b16 %v1397, %v1393
    %v2154 = vpack.c.b16 %v1398, %v1394
    %v2155 = vpack.c.b16 %v1399, %v1395
    %v2156 = vpack.c.b16 %v1404, %v1400
    %v2157 = vpack.c.b16 %v1405, %v1401
    %v2158 = vpack.c.b16 %v1406, %v1402
    %v2159 = vpack.c.b16 %v1407, %v1403
    %v2160 = vpack.c.b16 %v1412, %v1408
    %v2161 = vpack.c.b16 %v1413, %v1409
    %v2162 = vpack.c.b16 %v1414, %v1410
    %v2163 = vpack.c.b16 %v1415, %v1411
    %v2164 = vpack.c.b16 %v1420, %v1416
    %v2165 = vpack.c.b16 %v1421, %v1417
    %v2166 = vpack.c.b16 %v1422, %v1418
    %v2167 = vpack.c.b16 %v1423, %v1419
    %v2168 = vpack.c.b16 %v1428, %v1424
    %v2169 = vpack.c.b16 %v1429, %v1425
    %v2170 = vpack.c.b16 %v1430, %v1426
    %v2171 = vpack.c.b16 %v1431, %v1427
    %v2172 = vpack.c.b16 %v1436, %v1432
    %v2173 = vpack.c.b16 %v1437, %v1433
    %v2174 = vpack.c.b16 %v1438, %v1434
    %v2175 = vpack.c.b16 %v1439, %v1435
    %v2176 = vpack.c.b16 %v1444, %v1440
    %v2177 = vpack.c.b16 %v1445, %v1441
    %v2178 = vpack.c.b16 %v1446, %v1442
    %v2179 = vpack.c.b16 %v1447, %v1443
    %v2180 = vpack.c.b16 %v1452, %v1448
    %v2181 = vpack.c.b16 %v1453, %v1449
    %v2182 = vpack.c.b16 %v1454, %v1450
    %v2183 = vpack.c.b16 %v1455, %v1451
    %v2184 = vpack.c.b16 %v1460, %v1456
    %v2185 = vpack.c.b16 %v1461, %v1457
    %v2186 = vpack.c.b16 %v1462, %v1458
    %v2187 = vpack.c.b16 %v1463, %v1459
    %v2188 = vpack.c.b16 %v1468, %v1464
    %v2189 = vpack.c.b16 %v1469, %v1465
    %v2190 = vpack.c.b16 %v1470, %v1466
    %v2191 = vpack.c.b16 %v1471, %v1467
    %v2192 = vpack.c.b16 %v1476, %v1472
    %v2193 = vpack.c.b16 %v1477, %v1473
    %v2194 = vpack.c.b16 %v1478, %v1474
    %v2195 = vpack.c.b16 %v1479, %v1475
    %v2196 = vpack.c.b16 %v1484, %v1480
    %v2197 = vpack.c.b16 %v1485, %v1481
    %v2198 = vpack.c.b16 %v1486, %v1482
    %v2199 = vpack.c.b16 %v1487, %v1483
    %v2200 = vpack.c.b16 %v1492, %v1488
    %v2201 = vpack.c.b16 %v1493, %v1489
    %v2202 = vpack.c.b16 %v1494, %v1490
    %v2203 = vpack.c.b16 %v1495, %v1491
    %v2204 = vpack.c.b16 %v1500, %v1496
    %v2205 = vpack.c.b16 %v1501, %v1497
    %v2206 = vpack.c.b16 %v1502, %v1498
    %v2207 = vpack.c.b16 %v1503, %v1499
    %v2208 = vpack.c.b16 %v1508, %v1504
    %v2209 = vpack.c.b16 %v1509, %v1505
    %v2210 = vpack.c.b16 %v1510, %v1506
    %v2211 = vpack.c.b16 %v1511, %v1507
    %v2212 = vpack.c.b16 %v1516, %v1512
    %v2213 = vpack.c.b16 %v1517, %v1513
    %v2214 = vpack.c.b16 %v1518, %v1514
    %v2215 = vpack.c.b16 %v1519, %v1515
    %v2216 = vpack.c.b16 %v1524, %v1520
    %v2217 = vpack.c.b16 %v1525, %v1521
    %v2218 = vpack.c.b16 %v1526, %v1522
    %v2219 = vpack.c.b16 %v1527, %v1523
    %v2220 = vpack.c.b16 %v1532, %v1528
    %v2221 = vpack.c.b16 %v1533, %v1529
    %v2222 = vpack.c.b16 %v1534, %v1530
    %v2223 = vpack.c.b16 %v1535, %v1531
    %v2224 = vpack.c.b16 %v1540, %v1536
    %v2225 = vpack.c.b16 %v1541, %v1537
    %v2226 = vpack.c.b16 %v1542, %v1538
    %v2227 = vpack.c.b16 %v1543, %v1539
    %v2228 = vpack.c.b16 %v1548, %v1544
    %v2229 = vpack.c.b16 %v1549, %v1545
    %v2230 = vpack.c.b16 %v1550, %v1546
    %v2231 = vpack.c.b16 %v1551, %v1547
    %v2232 = vpack.c.b16 %v1556, %v1552
    %v2233 = vpack.c.b16 %v1557, %v1553
    %v2234 = vpack.c.b16 %v1558, %v1554
    %v2235 = vpack.c.b16 %v1559, %v1555
    %v2236 = vpack.c.b16 %v1564, %v1560
    %v2237 = vpack.c.b16 %v1565, %v1561
    %v2238 = vpack.c.b16 %v1566, %v1562
    %v2239 = vpack.c.b16 %v1567, %v1563
    %v2240 = vpack.c.b16 %v1572, %v1568
    %v2241 = vpack.c.b16 %v1573, %v1569
    %v2242 = vpack.c.b16 %v1574, %v1570
    %v2243 = vpack.c.b16 %v1575, %v1571
    %v2244 = vpack.c.b16 %v1580, %v1576
    %v2245 = vpack.c.b16 %v1581, %v1577
    %v2246 = vpack.c.b16 %v1582, %v1578
    %v2247 = vpack.c.b16 %v1583, %v1579
    %v2248 = vpack.c.b16 %v1588, %v1584
    %v2249 = vpack.c.b16 %v1589, %v1585
    %v2250 = vpack.c.b16 %v1590, %v1586
    %v2251 = vpack.c.b16 %v1591, %v1587
    %v2252 = vpack.c.b16 %v1596, %v1592
    %v2253 = vpack.c.b16 %v1597, %v1593
    %v2254 = vpack.c.b16 %v1598, %v1594
    %v2255 = vpack.c.b16 %v1599, %v1595
    %v2256 = vpack.c.b16 %v1604, %v1600
    %v2257 = vpack.c.b16 %v1605, %v1601
    %v2258 = vpack.c.b16 %v1606, %v1602
    %v2259 = vpack.c.b16 %v1607, %v1603
    %v2260 = vpack.c.b16 %v1612, %v1608
    %v2261 = vpack.c.b16 %v1613, %v1609
    %v2262 = vpack.c.b16 %v1614, %v1610
    %v2263 = vpack.c.b16 %v1615, %v1611
    %v2264 = vpack.c.b16 %v1620, %v1616
    %v2265 = vpack.c.b16 %v1621, %v1617
    %v2266 = vpack.c.b16 %v1622, %v1618
    %v2267 = vpack.c.b16 %v1623, %v1619
    %v2268 = vpack.c.b16 %v1628, %v1624
    %v2269 = vpack.c.b16 %v1629, %v1625
    %v2270 = vpack.c.b16 %v1630, %v1626
    %v2271 = vpack.c.b16 %v1631, %v1627
    %v2272 = vpack.c.b16 %v1636, %v1632
    %v2273 = vpack.c.b16 %v1637, %v1633
    %v2274 = vpack.c.b16 %v1638, %v1634
    %v2275 = vpack.c.b16 %v1639, %v1635
    %v2276 = vpack.c.b16 %v1644, %v1640
    %v2277 = vpack.c.b16 %v1645, %v1641
    %v2278 = vpack.c.b16 %v1646, %v1642
    %v2279 = vpack.c.b16 %v1647, %v1643
    %v2280 = vpack.c.b16 %v1652, %v1648
    %v2281 = vpack.c.b16 %v1653, %v1649
    %v2282 = vpack.c.b16 %v1654, %v1650
    %v2283 = vpack.c.b16 %v1655, %v1651
    %v2284 = vpack.c.b16 %v1660, %v1656
    %v2285 = vpack.c.b16 %v1661, %v1657
    %v2286 = vpack.c.b16 %v1662, %v1658
    %v2287 = vpack.c.b16 %v1663, %v1659
    %v2288 = vpack.c.b16 %v1668, %v1664
    %v2289 = vpack.c.b16 %v1669, %v1665
    %v2290 = vpack.c.b16 %v1670, %v1666
    %v2291 = vpack.c.b16 %v1671, %v1667
    %v2292 = vpack.c.b16 %v1676, %v1672
    %v2293 = vpack.c.b16 %v1677, %v1673
    %v2294 = vpack.c.b16 %v1678, %v1674
    %v2295 = vpack.c.b16 %v1679, %v1675
    %v2296 = vpack.c.b16 %v1684, %v1680
    %v2297 = vpack.c.b16 %v1685, %v1681
    %v2298 = vpack.c.b16 %v1686, %v1682
    %v2299 = vpack.c.b16 %v1687, %v1683
    %v2300 = vpack.c.b16 %v1692, %v1688
    %v2301 = vpack.c.b16 %v1693, %v1689
    %v2302 = vpack.c.b16 %v1694, %v1690
    %v2303 = vpack.c.b16 %v1695, %v1691
    %v2304 = vpack.c.b16 %v1700, %v1696
    %v2305 = vpack.c.b16 %v1701, %v1697
    %v2306 = vpack.c.b16 %v1702, %v1698
    %v2307 = vpack.c.b16 %v1703, %v1699
    %v2308 = vpack.c.b16 %v1708, %v1704
    %v2309 = vpack.c.b16 %v1709, %v1705
    %v2310 = vpack.c.b16 %v1710, %v1706
    %v2311 = vpack.c.b16 %v1711, %v1707
    %v2312 = vpack.c.b16 %v1716, %v1712
    %v2313 = vpack.c.b16 %v1717, %v1713
    %v2314 = vpack.c.b16 %v1718, %v1714
    %v2315 = vpack.c.b16 %v1719, %v1715
    %v2316 = vpack.c.b16 %v1724, %v1720
    %v2317 = vpack.c.b16 %v1725, %v1721
    %v2318 = vpack.c.b16 %v1726, %v1722
    %v2319 = vpack.c.b16 %v1727, %v1723
    %v2320 = vpack.c.b16 %v1732, %v1728
    %v2321 = vpack.c.b16 %v1733, %v1729
    %v2322 = vpack.c.b16 %v1734, %v1730
    %v2323 = vpack.c.b16 %v1735, %v1731
    %v2324 = vpack.c.b16 %v1740, %v1736
    %v2325 = vpack.c.b16 %v1741, %v1737
    %v2326 = vpack.c.b16 %v1742, %v1738
    %v2327 = vpack.c.b16 %v1743, %v1739
    %v2328 = vpack.c.b16 %v1748, %v1744
    %v2329 = vpack.c.b16 %v1749, %v1745
    %v2330 = vpack.c.b16 %v1750, %v1746
    %v2331 = vpack.c.b16 %v1751, %v1747
    %v2332 = vpack.c.b16 %v1756, %v1752
    %v2333 = vpack.c.b16 %v1757, %v1753
    %v2334 = vpack.c.b16 %v1758, %v1754
    %v2335 = vpack.c.b16 %v1759, %v1755
    %v2336 = vpack.c.b16 %v1764, %v1760
    %v2337 = vpack.c.b16 %v1765, %v1761
    %v2338 = vpack.c.b16 %v1766, %v1762
    %v2339 = vpack.c.b16 %v1767, %v1763
    %v2340 = vpack.c.b16 %v1772, %v1768
    %v2341 = vpack.c.b16 %v1773, %v1769
    %v2342 = vpack.c.b16 %v1774, %v1770
    %v2343 = vpack.c.b16 %v1775, %v1771
    %v2344 = vpack.c.b16 %v1780, %v1776
    %v2345 = vpack.c.b16 %v1781, %v1777
    %v2346 = vpack.c.b16 %v1782, %v1778
    %v2347 = vpack.c.b16 %v1783, %v1779
    %v2348 = vpack.c.b16 %v1788, %v1784
    %v2349 = vpack.c.b16 %v1789, %v1785
    %v2350 = vpack.c.b16 %v1790, %v1786
    %v2351 = vpack.c.b16 %v1791, %v1787
    %v2352 = vpack.c.b16 %v1796, %v1792
    %v2353 = vpack.c.b16 %v1797, %v1793
    %v2354 = vpack.c.b16 %v1798, %v1794
    %v2355 = vpack.c.b16 %v1799, %v1795
    %v2356 = vpack.c.b16 %v1804, %v1800
    %v2357 = vpack.c.b16 %v1805, %v1801
    %v2358 = vpack.c.b16 %v1806, %v1802
    %v2359 = vpack.c.b16 %v1807, %v1803
    %v2360 = vpack.c.b16 %v1812, %v1808
    %v2361 = vpack.c.b16 %v1813, %v1809
    %v2362 = vpack.c.b16 %v1814, %v1810
    %v2363 = vpack.c.b16 %v1815, %v1811
    %v2364 = vpack.c.b16 %v1820, %v1816
    %v2365 = vpack.c.b16 %v1821, %v1817
    %v2366 = vpack.c.b16 %v1822, %v1818
    %v2367 = vpack.c.b16 %v1823, %v1819
    %v2368 = vpack.c.b16 %v1828, %v1824
    %v2369 = vpack.c.b16 %v1829, %v1825
    %v2370 = vpack.c.b16 %v1830, %v1826
    %v2371 = vpack.c.b16 %v1831, %v1827
    %v2372 = vpack.c.b16 %v1836, %v1832
    %v2373 = vpack.c.b16 %v1837, %v1833
    %v2374 = vpack.c.b16 %v1838, %v1834
    %v2375 = vpack.c.b16 %v1839, %v1835
    %v2376 = vpack.c.b16 %v1844, %v1840
    %v2377 = vpack.c.b16 %v1845, %v1841
    %v2378 = vpack.c.b16 %v1846, %v1842
    %v2379 = vpack.c.b16 %v1847, %v1843
    %v2380 = vpack.c.b16 %v1852, %v1848
    %v2381 = vpack.c.b16 %v1853, %v1849
    %v2382 = vpack.c.b16 %v1854, %v1850
    %v2383 = vpack.c.b16 %v1855, %v1851
    %v2384 = vpack.c.b16 %v1860, %v1856
    %v2385 = vpack.c.b16 %v1861, %v1857
    %v2386 = vpack.c.b16 %v1862, %v1858
    %v2387 = vpack.c.b16 %v1863, %v1859
    %v2388 = vpack.c.b16 %v1868, %v1864
    %v2389 = vpack.c.b16 %v1869, %v1865
    %v2390 = vpack.c.b16 %v1870, %v1866
    %v2391 = vpack.c.b16 %v1871, %v1867
    %v2392 = vpack.c.b16 %v1876, %v1872
    %v2393 = vpack.c.b16 %v1877, %v1873
    %v2394 = vpack.c.b16 %v1878, %v1874
    %v2395 = vpack.c.b16 %v1879, %v1875
    %v2396 = vpack.c.b16 %v1884, %v1880
    %v2397 = vpack.c.b16 %v1885, %v1881
    %v2398 = vpack.c.b16 %v1886, %v1882
    %v2399 = vpack.c.b16 %v1887, %v1883
    %v2400 = vpack.c.b16 %v1892, %v1888
    %v2401 = vpack.c.b16 %v1893, %v1889
    %v2402 = vpack.c.b16 %v1894, %v1890
    %v2403 = vpack.c.b16 %v1895, %v1891
    %v2404 = vpack.c.b16 %v1900, %v1896
    %v2405 = vpack.c.b16 %v1901, %v1897
    %v2406 = vpack.c.b16 %v1902, %v1898
    %v2407 = vpack.c.b16 %v1903, %v1899
    %v2408 = vpack.c.b16 %v1908, %v1904
    %v2409 = vpack.c.b16 %v1909, %v1905
    %v2410 = vpack.c.b16 %v1910, %v1906
    %v2411 = vpack.c.b16 %v1911, %v1907
    %v2412 = vpack.c.b16 %v1916, %v1912
    %v2413 = vpack.c.b16 %v1917, %v1913
    %v2414 = vpack.c.b16 %v1918, %v1914
    %v2415 = vpack.c.b16 %v1919, %v1915
    %v2416 = vpack.c.b16 %v1924, %v1920
    %v2417 = vpack.c.b16 %v1925, %v1921
    %v2418 = vpack.c.b16 %v1926, %v1922
    %v2419 = vpack.c.b16 %v1927, %v1923
    %v2420 = vpack.c.b16 %v1932, %v1928
    %v2421 = vpack.c.b16 %v1933, %v1929
    %v2422 = vpack.c.b16 %v1934, %v1930
    %v2423 = vpack.c.b16 %v1935, %v1931
    %v2424 = vpack.c.b16 %v1940, %v1936
    %v2425 = vpack.c.b16 %v1941, %v1937
    %v2426 = vpack.c.b16 %v1942, %v1938
    %v2427 = vpack.c.b16 %v1943, %v1939
    %v2428 = vpack.c.b16 %v1948, %v1944
    %v2429 = vpack.c.b16 %v1949, %v1945
    %v2430 = vpack.c.b16 %v1950, %v1946
    %v2431 = vpack.c.b16 %v1951, %v1947
    %v2432 = vpack.c.b16 %v1956, %v1952
    %v2433 = vpack.c.b16 %v1957, %v1953
    %v2434 = vpack.c.b16 %v1958, %v1954
    %v2435 = vpack.c.b16 %v1959, %v1955
    %v2436 = vpack.c.b16 %v1964, %v1960
    %v2437 = vpack.c.b16 %v1965, %v1961
    %v2438 = vpack.c.b16 %v1966, %v1962
    %v2439 = vpack.c.b16 %v1967, %v1963
    %v2440 = vpack.c.b16 %v1972, %v1968
    %v2441 = vpack.c.b16 %v1973, %v1969
    %v2442 = vpack.c.b16 %v1974, %v1970
    %v2443 = vpack.c.b16 %v1975, %v1971
    %v2444 = vpack.c.b16 %v1980, %v1976
    %v2445 = vpack.c.b16 %v1981, %v1977
    %v2446 = vpack.c.b16 %v1982, %v1978
    %v2447 = vpack.c.b16 %v1983, %v1979
    %v2448 = vpack.c.b16 %v1988, %v1984
    %v2449 = vpack.c.b16 %v1989, %v1985
    %v2450 = vpack.c.b16 %v1990, %v1986
    %v2451 = vpack.c.b16 %v1991, %v1987
    %v2452 = vpack.c.b16 %v1996, %v1992
    %v2453 = vpack.c.b16 %v1997, %v1993
    %v2454 = vpack.c.b16 %v1998, %v1994
    %v2455 = vpack.c.b16 %v1999, %v1995
    %v2456 = vpack.c.b16 %v2004, %v2000
    %v2457 = vpack.c.b16 %v2005, %v2001
    %v2458 = vpack.c.b16 %v2006, %v2002
    %v2459 = vpack.c.b16 %v2007, %v2003
    %v2460 = vpack.c.b16 %v2012, %v2008
    %v2461 = vpack.c.b16 %v2013, %v2009
    %v2462 = vpack.c.b16 %v2014, %v2010
    %v2463 = vpack.c.b16 %v2015, %v2011
    %2912 = vmatprep.subr.bf16.mxu0 %v2017
    %2913 = vmatpush1.bf16.msra.mxu0 %v2016
    %2914 = vmatprep.subr.bf16.mxu0 %v2021
    %2915 = vmatpush1.bf16.msra.mxu0 %v2020
    %2916 = vmatprep.subr.bf16.mxu0 %v2025
    %2917 = vmatpush1.bf16.msra.mxu0 %v2024
    %2918 = vmatprep.subr.bf16.mxu0 %v2029
    %2919 = vmatpush1.bf16.msra.mxu0 %v2028
    %2920 = vmatprep.subr.bf16.mxu0 %v2033
    %2921 = vmatpush1.bf16.msra.mxu0 %v2032
    %2922 = vmatprep.subr.bf16.mxu0 %v2037
    %2923 = vmatpush1.bf16.msra.mxu0 %v2036
    %2924 = vmatprep.subr.bf16.mxu0 %v2041
    %2925 = vmatpush1.bf16.msra.mxu0 %v2040
    %2926 = vmatprep.subr.bf16.mxu0 %v2045
    %2927 = vmatpush1.bf16.msra.mxu0 %v2044
    %2928 = vmatprep.subr.bf16.mxu0 %v2049
    %2929 = vmatpush1.bf16.msra.mxu0 %v2048
    %2930 = vmatprep.subr.bf16.mxu0 %v2053
    %2931 = vmatpush1.bf16.msra.mxu0 %v2052
    %2932 = vmatprep.subr.bf16.mxu0 %v2057
    %2933 = vmatpush1.bf16.msra.mxu0 %v2056
    %2934 = vmatprep.subr.bf16.mxu0 %v2061
    %2935 = vmatpush1.bf16.msra.mxu0 %v2060
    %2936 = vmatprep.subr.bf16.mxu0 %v2065
    %2937 = vmatpush1.bf16.msra.mxu0 %v2064
    %2938 = vmatprep.subr.bf16.mxu0 %v2069
    %2939 = vmatpush1.bf16.msra.mxu0 %v2068
    %2940 = vmatprep.subr.bf16.mxu0 %v2073
    %2941 = vmatpush1.bf16.msra.mxu0 %v2072
    %2942 = vmatprep.subr.bf16.mxu0 %v2077
    %2943 = vmatpush1.bf16.msra.mxu0 %v2076
    %2944 = vmatprep.mubr.bf16.mxu0 %v645
    %2945 = vmatmul.mubr.bf16.gmra.mrb[0].mxu0 %v644
    %v2946 = vpop.f32.mrb[0].mxu0
    %v2947 = vadd.f32 %v606, %v2946
    %v2948 = vpop.f32.mrb[0].mxu0
    %v2949 = vadd.f32 %v610, %v2948
    %v2950 = vpop.f32.mrb[0].mxu0
    %v2951 = vpop.f32.mrb[0].mxu0
    %2952 = vdwg.mxu0
    %2953 = vmatprep.subr.bf16.mxu0 %v2081
    %2954 = vmatpush1.bf16.msra.mxu0 %v2080
    %2955 = vmatprep.subr.bf16.mxu0 %v2085
    %2956 = vmatpush1.bf16.msra.mxu0 %v2084
    %2957 = vmatprep.subr.bf16.mxu0 %v2089
    %2958 = vmatpush1.bf16.msra.mxu0 %v2088
    %2959 = vmatprep.subr.bf16.mxu0 %v2093
    %2960 = vmatpush1.bf16.msra.mxu0 %v2092
    %2961 = vmatprep.subr.bf16.mxu0 %v2097
    %2962 = vmatpush1.bf16.msra.mxu0 %v2096
    %2963 = vmatprep.subr.bf16.mxu0 %v2101
    %2964 = vmatpush1.bf16.msra.mxu0 %v2100
    %2965 = vmatprep.subr.bf16.mxu0 %v2105
    %2966 = vmatpush1.bf16.msra.mxu0 %v2104
    %2967 = vmatprep.subr.bf16.mxu0 %v2109
    %2968 = vmatpush1.bf16.msra.mxu0 %v2108
    %2969 = vmatprep.subr.bf16.mxu0 %v2113
    %2970 = vmatpush1.bf16.msra.mxu0 %v2112
    %2971 = vmatprep.subr.bf16.mxu0 %v2117
    %2972 = vmatpush1.bf16.msra.mxu0 %v2116
    %2973 = vmatprep.subr.bf16.mxu0 %v2121
    %2974 = vmatpush1.bf16.msra.mxu0 %v2120
    %2975 = vmatprep.subr.bf16.mxu0 %v2125
    %2976 = vmatpush1.bf16.msra.mxu0 %v2124
    %2977 = vmatprep.subr.bf16.mxu0 %v2129
    %2978 = vmatpush1.bf16.msra.mxu0 %v2128
    %2979 = vmatprep.subr.bf16.mxu0 %v2133
    %2980 = vmatpush1.bf16.msra.mxu0 %v2132
    %2981 = vmatprep.subr.bf16.mxu0 %v2137
    %2982 = vmatpush1.bf16.msra.mxu0 %v2136
    %2983 = vmatprep.subr.bf16.mxu0 %v2141
    %2984 = vmatpush1.bf16.msra.mxu0 %v2140
    %2985 = vmatprep.mubr.bf16.mxu0 %v647
    %2986 = vmatmul.mubr.bf16.gmra.mrb[0].mxu0 %v646
    %v2987 = vpop.f32.mrb[0].mxu0
    %v2988 = vadd.f32 %v2947, %v2987
    %v2989 = vpop.f32.mrb[0].mxu0
    %v2990 = vadd.f32 %v2949, %v2989
    %v2991 = vpop.f32.mrb[0].mxu0
    %v2992 = vpop.f32.mrb[0].mxu0
    %2993 = vdwg.mxu0
    %2994 = vmatprep.subr.bf16.mxu0 %v2145
    %2995 = vmatpush1.bf16.msra.mxu0 %v2144
    %2996 = vmatprep.subr.bf16.mxu0 %v2149
    %2997 = vmatpush1.bf16.msra.mxu0 %v2148
    %2998 = vmatprep.subr.bf16.mxu0 %v2153
    %2999 = vmatpush1.bf16.msra.mxu0 %v2152
    %3000 = vmatprep.subr.bf16.mxu0 %v2157
    %3001 = vmatpush1.bf16.msra.mxu0 %v2156
    %3002 = vmatprep.subr.bf16.mxu0 %v2161
    %3003 = vmatpush1.bf16.msra.mxu0 %v2160
    %3004 = vmatprep.subr.bf16.mxu0 %v2165
    %3005 = vmatpush1.bf16.msra.mxu0 %v2164
    %3006 = vmatprep.subr.bf16.mxu0 %v2169
    %3007 = vmatpush1.bf16.msra.mxu0 %v2168
    %3008 = vmatprep.subr.bf16.mxu0 %v2173
    %3009 = vmatpush1.bf16.msra.mxu0 %v2172
    %3010 = vmatprep.subr.bf16.mxu0 %v2177
    %3011 = vmatpush1.bf16.msra.mxu0 %v2176
    %3012 = vmatprep.subr.bf16.mxu0 %v2181
    %3013 = vmatpush1.bf16.msra.mxu0 %v2180
    %3014 = vmatprep.subr.bf16.mxu0 %v2185
    %3015 = vmatpush1.bf16.msra.mxu0 %v2184
    %3016 = vmatprep.subr.bf16.mxu0 %v2189
    %3017 = vmatpush1.bf16.msra.mxu0 %v2188
    %3018 = vmatprep.subr.bf16.mxu0 %v2193
    %3019 = vmatpush1.bf16.msra.mxu0 %v2192
    %3020 = vmatprep.subr.bf16.mxu0 %v2197
    %3021 = vmatpush1.bf16.msra.mxu0 %v2196
    %3022 = vmatprep.subr.bf16.mxu0 %v2201
    %3023 = vmatpush1.bf16.msra.mxu0 %v2200
    %3024 = vmatprep.subr.bf16.mxu0 %v2205
    %3025 = vmatpush1.bf16.msra.mxu0 %v2204
    %3026 = vmatprep.mubr.bf16.mxu0 %v649
    %3027 = vmatmul.mubr.bf16.gmra.mrb[0].mxu0 %v648
    %v3028 = vpop.f32.mrb[0].mxu0
    %v3029 = vadd.f32 %v2988, %v3028
    %v3030 = vpop.f32.mrb[0].mxu0
    %v3031 = vadd.f32 %v2990, %v3030
    %v3032 = vpop.f32.mrb[0].mxu0
    %v3033 = vpop.f32.mrb[0].mxu0
    %3034 = vdwg.mxu0
    %3035 = vmatprep.subr.bf16.mxu0 %v2209
    %3036 = vmatpush1.bf16.msra.mxu0 %v2208
    %3037 = vmatprep.subr.bf16.mxu0 %v2213
    %3038 = vmatpush1.bf16.msra.mxu0 %v2212
    %3039 = vmatprep.subr.bf16.mxu0 %v2217
    %3040 = vmatpush1.bf16.msra.mxu0 %v2216
    %3041 = vmatprep.subr.bf16.mxu0 %v2221
    %3042 = vmatpush1.bf16.msra.mxu0 %v2220
    %3043 = vmatprep.subr.bf16.mxu0 %v2225
    %3044 = vmatpush1.bf16.msra.mxu0 %v2224
    %3045 = vmatprep.subr.bf16.mxu0 %v2229
    %3046 = vmatpush1.bf16.msra.mxu0 %v2228
    %3047 = vmatprep.subr.bf16.mxu0 %v2233
    %3048 = vmatpush1.bf16.msra.mxu0 %v2232
    %3049 = vmatprep.subr.bf16.mxu0 %v2237
    %3050 = vmatpush1.bf16.msra.mxu0 %v2236
    %3051 = vmatprep.subr.bf16.mxu0 %v2241
    %3052 = vmatpush1.bf16.msra.mxu0 %v2240
    %3053 = vmatprep.subr.bf16.mxu0 %v2245
    %3054 = vmatpush1.bf16.msra.mxu0 %v2244
    %3055 = vmatprep.subr.bf16.mxu0 %v2249
    %3056 = vmatpush1.bf16.msra.mxu0 %v2248
    %3057 = vmatprep.subr.bf16.mxu0 %v2253
    %3058 = vmatpush1.bf16.msra.mxu0 %v2252
    %3059 = vmatprep.subr.bf16.mxu0 %v2257
    %3060 = vmatpush1.bf16.msra.mxu0 %v2256
    %3061 = vmatprep.subr.bf16.mxu0 %v2261
    %3062 = vmatpush1.bf16.msra.mxu0 %v2260
    %3063 = vmatprep.subr.bf16.mxu0 %v2265
    %3064 = vmatpush1.bf16.msra.mxu0 %v2264
    %3065 = vmatprep.subr.bf16.mxu0 %v2269
    %3066 = vmatpush1.bf16.msra.mxu0 %v2268
    %3067 = vmatprep.mubr.bf16.mxu0 %v651
    %3068 = vmatmul.mubr.bf16.gmra.mrb[0].mxu0 %v650
    %v3069 = vpop.f32.mrb[0].mxu0
    %v3070 = vadd.f32 %v3029, %v3069
    %v3071 = vpop.f32.mrb[0].mxu0
    %v3072 = vadd.f32 %v3031, %v3071
    %v3073 = vpop.f32.mrb[0].mxu0
    %v3074 = vpop.f32.mrb[0].mxu0
    %3075 = vdwg.mxu0
    %3076 = vmatprep.subr.bf16.mxu0 %v2273
    %3077 = vmatpush1.bf16.msra.mxu0 %v2272
    %3078 = vmatprep.subr.bf16.mxu0 %v2277
    %3079 = vmatpush1.bf16.msra.mxu0 %v2276
    %3080 = vmatprep.subr.bf16.mxu0 %v2281
    %3081 = vmatpush1.bf16.msra.mxu0 %v2280
    %3082 = vmatprep.subr.bf16.mxu0 %v2285
    %3083 = vmatpush1.bf16.msra.mxu0 %v2284
    %3084 = vmatprep.subr.bf16.mxu0 %v2289
    %3085 = vmatpush1.bf16.msra.mxu0 %v2288
    %3086 = vmatprep.subr.bf16.mxu0 %v2293
    %3087 = vmatpush1.bf16.msra.mxu0 %v2292
    %3088 = vmatprep.subr.bf16.mxu0 %v2297
    %3089 = vmatpush1.bf16.msra.mxu0 %v2296
    %3090 = vmatprep.subr.bf16.mxu0 %v2301
    %3091 = vmatpush1.bf16.msra.mxu0 %v2300
    %3092 = vmatprep.subr.bf16.mxu0 %v2305
    %3093 = vmatpush1.bf16.msra.mxu0 %v2304
    %3094 = vmatprep.subr.bf16.mxu0 %v2309
    %3095 = vmatpush1.bf16.msra.mxu0 %v2308
    %3096 = vmatprep.subr.bf16.mxu0 %v2313
    %3097 = vmatpush1.bf16.msra.mxu0 %v2312
    %3098 = vmatprep.subr.bf16.mxu0 %v2317
    %3099 = vmatpush1.bf16.msra.mxu0 %v2316
    %3100 = vmatprep.subr.bf16.mxu0 %v2321
    %3101 = vmatpush1.bf16.msra.mxu0 %v2320
    %3102 = vmatprep.subr.bf16.mxu0 %v2325
    %3103 = vmatpush1.bf16.msra.mxu0 %v2324
    %3104 = vmatprep.subr.bf16.mxu0 %v2329
    %3105 = vmatpush1.bf16.msra.mxu0 %v2328
    %3106 = vmatprep.subr.bf16.mxu0 %v2333
    %3107 = vmatpush1.bf16.msra.mxu0 %v2332
    %3108 = vmatprep.mubr.bf16.mxu0 %v653
    %3109 = vmatmul.mubr.bf16.gmra.mrb[0].mxu0 %v652
    %v3110 = vpop.f32.mrb[0].mxu0
    %v3111 = vadd.f32 %v3070, %v3110
    %v3112 = vpop.f32.mrb[0].mxu0
    %v3113 = vadd.f32 %v3072, %v3112
    %v3114 = vpop.f32.mrb[0].mxu0
    %v3115 = vpop.f32.mrb[0].mxu0
    %3116 = vdwg.mxu0
    %3117 = vmatprep.subr.bf16.mxu0 %v2337
    %3118 = vmatpush1.bf16.msra.mxu0 %v2336
    %3119 = vmatprep.subr.bf16.mxu0 %v2341
    %3120 = vmatpush1.bf16.msra.mxu0 %v2340
    %3121 = vmatprep.subr.bf16.mxu0 %v2345
    %3122 = vmatpush1.bf16.msra.mxu0 %v2344
    %3123 = vmatprep.subr.bf16.mxu0 %v2349
    %3124 = vmatpush1.bf16.msra.mxu0 %v2348
    %3125 = vmatprep.subr.bf16.mxu0 %v2353
    %3126 = vmatpush1.bf16.msra.mxu0 %v2352
    %3127 = vmatprep.subr.bf16.mxu0 %v2357
    %3128 = vmatpush1.bf16.msra.mxu0 %v2356
    %3129 = vmatprep.subr.bf16.mxu0 %v2361
    %3130 = vmatpush1.bf16.msra.mxu0 %v2360
    %3131 = vmatprep.subr.bf16.mxu0 %v2365
    %3132 = vmatpush1.bf16.msra.mxu0 %v2364
    %3133 = vmatprep.subr.bf16.mxu0 %v2369
    %3134 = vmatpush1.bf16.msra.mxu0 %v2368
    %3135 = vmatprep.subr.bf16.mxu0 %v2373
    %3136 = vmatpush1.bf16.msra.mxu0 %v2372
    %3137 = vmatprep.subr.bf16.mxu0 %v2377
    %3138 = vmatpush1.bf16.msra.mxu0 %v2376
    %3139 = vmatprep.subr.bf16.mxu0 %v2381
    %3140 = vmatpush1.bf16.msra.mxu0 %v2380
    %3141 = vmatprep.subr.bf16.mxu0 %v2385
    %3142 = vmatpush1.bf16.msra.mxu0 %v2384
    %3143 = vmatprep.subr.bf16.mxu0 %v2389
    %3144 = vmatpush1.bf16.msra.mxu0 %v2388
    %3145 = vmatprep.subr.bf16.mxu0 %v2393
    %3146 = vmatpush1.bf16.msra.mxu0 %v2392
    %3147 = vmatprep.subr.bf16.mxu0 %v2397
    %3148 = vmatpush1.bf16.msra.mxu0 %v2396
    %3149 = vmatprep.mubr.bf16.mxu0 %v655
    %3150 = vmatmul.mubr.bf16.gmra.mrb[0].mxu0 %v654
    %v3151 = vpop.f32.mrb[0].mxu0
    %v3152 = vadd.f32 %v3111, %v3151
    %v3153 = vpop.f32.mrb[0].mxu0
    %v3154 = vadd.f32 %v3113, %v3153
    %v3155 = vpop.f32.mrb[0].mxu0
    %v3156 = vpop.f32.mrb[0].mxu0
    %3157 = vdwg.mxu0
    %3158 = vmatprep.subr.bf16.mxu0 %v2401
    %3159 = vmatpush1.bf16.msra.mxu0 %v2400
    %3160 = vmatprep.subr.bf16.mxu0 %v2405
    %3161 = vmatpush1.bf16.msra.mxu0 %v2404
    %3162 = vmatprep.subr.bf16.mxu0 %v2409
    %3163 = vmatpush1.bf16.msra.mxu0 %v2408
    %3164 = vmatprep.subr.bf16.mxu0 %v2413
    %3165 = vmatpush1.bf16.msra.mxu0 %v2412
    %3166 = vmatprep.subr.bf16.mxu0 %v2417
    %3167 = vmatpush1.bf16.msra.mxu0 %v2416
    %3168 = vmatprep.subr.bf16.mxu0 %v2421
    %3169 = vmatpush1.bf16.msra.mxu0 %v2420
    %3170 = vmatprep.subr.bf16.mxu0 %v2425
    %3171 = vmatpush1.bf16.msra.mxu0 %v2424
    %3172 = vmatprep.subr.bf16.mxu0 %v2429
    %3173 = vmatpush1.bf16.msra.mxu0 %v2428
    %3174 = vmatprep.subr.bf16.mxu0 %v2433
    %3175 = vmatpush1.bf16.msra.mxu0 %v2432
    %3176 = vmatprep.subr.bf16.mxu0 %v2437
    %3177 = vmatpush1.bf16.msra.mxu0 %v2436
    %3178 = vmatprep.subr.bf16.mxu0 %v2441
    %3179 = vmatpush1.bf16.msra.mxu0 %v2440
    %3180 = vmatprep.subr.bf16.mxu0 %v2445
    %3181 = vmatpush1.bf16.msra.mxu0 %v2444
    %3182 = vmatprep.subr.bf16.mxu0 %v2449
    %3183 = vmatpush1.bf16.msra.mxu0 %v2448
    %3184 = vmatprep.subr.bf16.mxu0 %v2453
    %3185 = vmatpush1.bf16.msra.mxu0 %v2452
    %3186 = vmatprep.subr.bf16.mxu0 %v2457
    %3187 = vmatpush1.bf16.msra.mxu0 %v2456
    %3188 = vmatprep.subr.bf16.mxu0 %v2461
    %3189 = vmatpush1.bf16.msra.mxu0 %v2460
    %3190 = vmatprep.mubr.bf16.mxu0 %v657
    %3191 = vmatmul.mubr.bf16.gmra.mrb[0].mxu0 %v656
    %v3192 = vpop.f32.mrb[0].mxu0
    %v3193 = vadd.f32 %v3152, %v3192
    %v3194 = vpop.f32.mrb[0].mxu0
    %v3195 = vadd.f32 %v3154, %v3194
    %v3196 = vpop.f32.mrb[0].mxu0
    %v3197 = vpop.f32.mrb[0].mxu0
    %3198 = vdwg.mxu0
    %3199 = vmatprep.subr.bf16.mxu0 %v2019
    %3200 = vmatpush1.bf16.msra.mxu0 %v2018
    %3201 = vmatprep.subr.bf16.mxu0 %v2023
    %3202 = vmatpush1.bf16.msra.mxu0 %v2022
    %3203 = vmatprep.subr.bf16.mxu0 %v2027
    %3204 = vmatpush1.bf16.msra.mxu0 %v2026
    %3205 = vmatprep.subr.bf16.mxu0 %v2031
    %3206 = vmatpush1.bf16.msra.mxu0 %v2030
    %3207 = vmatprep.subr.bf16.mxu0 %v2035
    %3208 = vmatpush1.bf16.msra.mxu0 %v2034
    %3209 = vmatprep.subr.bf16.mxu0 %v2039
    %3210 = vmatpush1.bf16.msra.mxu0 %v2038
    %3211 = vmatprep.subr.bf16.mxu0 %v2043
    %3212 = vmatpush1.bf16.msra.mxu0 %v2042
    %3213 = vmatprep.subr.bf16.mxu0 %v2047
    %3214 = vmatpush1.bf16.msra.mxu0 %v2046
    %3215 = vmatprep.subr.bf16.mxu0 %v2051
    %3216 = vmatpush1.bf16.msra.mxu0 %v2050
    %3217 = vmatprep.subr.bf16.mxu0 %v2055
    %3218 = vmatpush1.bf16.msra.mxu0 %v2054
    %3219 = vmatprep.subr.bf16.mxu0 %v2059
    %3220 = vmatpush1.bf16.msra.mxu0 %v2058
    %3221 = vmatprep.subr.bf16.mxu0 %v2063
    %3222 = vmatpush1.bf16.msra.mxu0 %v2062
    %3223 = vmatprep.subr.bf16.mxu0 %v2067
    %3224 = vmatpush1.bf16.msra.mxu0 %v2066
    %3225 = vmatprep.subr.bf16.mxu0 %v2071
    %3226 = vmatpush1.bf16.msra.mxu0 %v2070
    %3227 = vmatprep.subr.bf16.mxu0 %v2075
    %3228 = vmatpush1.bf16.msra.mxu0 %v2074
    %3229 = vmatprep.subr.bf16.mxu0 %v2079
    %3230 = vmatpush1.bf16.msra.mxu0 %v2078
    %3231 = vmatprep.mubr.bf16.mxu0 %v645
    %3232 = vmatmul.mubr.bf16.gmra.mrb[0].mxu0 %v644
    %v3233 = vpop.f32.mrb[0].mxu0
    %v3234 = vadd.f32 %v614, %v3233
    %v3235 = vpop.f32.mrb[0].mxu0
    %v3236 = vadd.f32 %v618, %v3235
    %v3237 = vpop.f32.mrb[0].mxu0
    %v3238 = vpop.f32.mrb[0].mxu0
    %3239 = vdwg.mxu0
    %3240 = vmatprep.subr.bf16.mxu0 %v2083
    %3241 = vmatpush1.bf16.msra.mxu0 %v2082
    %3242 = vmatprep.subr.bf16.mxu0 %v2087
    %3243 = vmatpush1.bf16.msra.mxu0 %v2086
    %3244 = vmatprep.subr.bf16.mxu0 %v2091
    %3245 = vmatpush1.bf16.msra.mxu0 %v2090
    %3246 = vmatprep.subr.bf16.mxu0 %v2095
    %3247 = vmatpush1.bf16.msra.mxu0 %v2094
    %3248 = vmatprep.subr.bf16.mxu0 %v2099
    %3249 = vmatpush1.bf16.msra.mxu0 %v2098
    %3250 = vmatprep.subr.bf16.mxu0 %v2103
    %3251 = vmatpush1.bf16.msra.mxu0 %v2102
    %3252 = vmatprep.subr.bf16.mxu0 %v2107
    %3253 = vmatpush1.bf16.msra.mxu0 %v2106
    %3254 = vmatprep.subr.bf16.mxu0 %v2111
    %3255 = vmatpush1.bf16.msra.mxu0 %v2110
    %3256 = vmatprep.subr.bf16.mxu0 %v2115
    %3257 = vmatpush1.bf16.msra.mxu0 %v2114
    %3258 = vmatprep.subr.bf16.mxu0 %v2119
    %3259 = vmatpush1.bf16.msra.mxu0 %v2118
    %3260 = vmatprep.subr.bf16.mxu0 %v2123
    %3261 = vmatpush1.bf16.msra.mxu0 %v2122
    %3262 = vmatprep.subr.bf16.mxu0 %v2127
    %3263 = vmatpush1.bf16.msra.mxu0 %v2126
    %3264 = vmatprep.subr.bf16.mxu0 %v2131
    %3265 = vmatpush1.bf16.msra.mxu0 %v2130
    %3266 = vmatprep.subr.bf16.mxu0 %v2135
    %3267 = vmatpush1.bf16.msra.mxu0 %v2134
    %3268 = vmatprep.subr.bf16.mxu0 %v2139
    %3269 = vmatpush1.bf16.msra.mxu0 %v2138
    %3270 = vmatprep.subr.bf16.mxu0 %v2143
    %3271 = vmatpush1.bf16.msra.mxu0 %v2142
    %3272 = vmatprep.mubr.bf16.mxu0 %v647
    %3273 = vmatmul.mubr.bf16.gmra.mrb[0].mxu0 %v646
    %v3274 = vpop.f32.mrb[0].mxu0
    %v3275 = vadd.f32 %v3234, %v3274
    %v3276 = vpop.f32.mrb[0].mxu0
    %v3277 = vadd.f32 %v3236, %v3276
    %v3278 = vpop.f32.mrb[0].mxu0
    %v3279 = vpop.f32.mrb[0].mxu0
    %3280 = vdwg.mxu0
    %3281 = vmatprep.subr.bf16.mxu0 %v2147
    %3282 = vmatpush1.bf16.msra.mxu0 %v2146
    %3283 = vmatprep.subr.bf16.mxu0 %v2151
    %3284 = vmatpush1.bf16.msra.mxu0 %v2150
    %3285 = vmatprep.subr.bf16.mxu0 %v2155
    %3286 = vmatpush1.bf16.msra.mxu0 %v2154
    %3287 = vmatprep.subr.bf16.mxu0 %v2159
    %3288 = vmatpush1.bf16.msra.mxu0 %v2158
    %3289 = vmatprep.subr.bf16.mxu0 %v2163
    %3290 = vmatpush1.bf16.msra.mxu0 %v2162
    %3291 = vmatprep.subr.bf16.mxu0 %v2167
    %3292 = vmatpush1.bf16.msra.mxu0 %v2166
    %3293 = vmatprep.subr.bf16.mxu0 %v2171
    %3294 = vmatpush1.bf16.msra.mxu0 %v2170
    %3295 = vmatprep.subr.bf16.mxu0 %v2175
    %3296 = vmatpush1.bf16.msra.mxu0 %v2174
    %3297 = vmatprep.subr.bf16.mxu0 %v2179
    %3298 = vmatpush1.bf16.msra.mxu0 %v2178
    %3299 = vmatprep.subr.bf16.mxu0 %v2183
    %3300 = vmatpush1.bf16.msra.mxu0 %v2182
    %3301 = vmatprep.subr.bf16.mxu0 %v2187
    %3302 = vmatpush1.bf16.msra.mxu0 %v2186
    %3303 = vmatprep.subr.bf16.mxu0 %v2191
    %3304 = vmatpush1.bf16.msra.mxu0 %v2190
    %3305 = vmatprep.subr.bf16.mxu0 %v2195
    %3306 = vmatpush1.bf16.msra.mxu0 %v2194
    %3307 = vmatprep.subr.bf16.mxu0 %v2199
    %3308 = vmatpush1.bf16.msra.mxu0 %v2198
    %3309 = vmatprep.subr.bf16.mxu0 %v2203
    %3310 = vmatpush1.bf16.msra.mxu0 %v2202
    %3311 = vmatprep.subr.bf16.mxu0 %v2207
    %3312 = vmatpush1.bf16.msra.mxu0 %v2206
    %3313 = vmatprep.mubr.bf16.mxu0 %v649
    %3314 = vmatmul.mubr.bf16.gmra.mrb[0].mxu0 %v648
    %v3315 = vpop.f32.mrb[0].mxu0
    %v3316 = vadd.f32 %v3275, %v3315
    %v3317 = vpop.f32.mrb[0].mxu0
    %v3318 = vadd.f32 %v3277, %v3317
    %v3319 = vpop.f32.mrb[0].mxu0
    %v3320 = vpop.f32.mrb[0].mxu0
    %3321 = vdwg.mxu0
    %3322 = vmatprep.subr.bf16.mxu0 %v2211
    %3323 = vmatpush1.bf16.msra.mxu0 %v2210
    %3324 = vmatprep.subr.bf16.mxu0 %v2215
    %3325 = vmatpush1.bf16.msra.mxu0 %v2214
    %3326 = vmatprep.subr.bf16.mxu0 %v2219
    %3327 = vmatpush1.bf16.msra.mxu0 %v2218
    %3328 = vmatprep.subr.bf16.mxu0 %v2223
    %3329 = vmatpush1.bf16.msra.mxu0 %v2222
    %3330 = vmatprep.subr.bf16.mxu0 %v2227
    %3331 = vmatpush1.bf16.msra.mxu0 %v2226
    %3332 = vmatprep.subr.bf16.mxu0 %v2231
    %3333 = vmatpush1.bf16.msra.mxu0 %v2230
    %3334 = vmatprep.subr.bf16.mxu0 %v2235
    %3335 = vmatpush1.bf16.msra.mxu0 %v2234
    %3336 = vmatprep.subr.bf16.mxu0 %v2239
    %3337 = vmatpush1.bf16.msra.mxu0 %v2238
    %3338 = vmatprep.subr.bf16.mxu0 %v2243
    %3339 = vmatpush1.bf16.msra.mxu0 %v2242
    %3340 = vmatprep.subr.bf16.mxu0 %v2247
    %3341 = vmatpush1.bf16.msra.mxu0 %v2246
    %3342 = vmatprep.subr.bf16.mxu0 %v2251
    %3343 = vmatpush1.bf16.msra.mxu0 %v2250
    %3344 = vmatprep.subr.bf16.mxu0 %v2255
    %3345 = vmatpush1.bf16.msra.mxu0 %v2254
    %3346 = vmatprep.subr.bf16.mxu0 %v2259
    %3347 = vmatpush1.bf16.msra.mxu0 %v2258
    %3348 = vmatprep.subr.bf16.mxu0 %v2263
    %3349 = vmatpush1.bf16.msra.mxu0 %v2262
    %3350 = vmatprep.subr.bf16.mxu0 %v2267
    %3351 = vmatpush1.bf16.msra.mxu0 %v2266
    %3352 = vmatprep.subr.bf16.mxu0 %v2271
    %3353 = vmatpush1.bf16.msra.mxu0 %v2270
    %3354 = vmatprep.mubr.bf16.mxu0 %v651
    %3355 = vmatmul.mubr.bf16.gmra.mrb[0].mxu0 %v650
    %v3356 = vpop.f32.mrb[0].mxu0
    %v3357 = vadd.f32 %v3316, %v3356
    %v3358 = vpop.f32.mrb[0].mxu0
    %v3359 = vadd.f32 %v3318, %v3358
    %v3360 = vpop.f32.mrb[0].mxu0
    %v3361 = vpop.f32.mrb[0].mxu0
    %3362 = vdwg.mxu0
    %3363 = vmatprep.subr.bf16.mxu0 %v2275
    %3364 = vmatpush1.bf16.msra.mxu0 %v2274
    %3365 = vmatprep.subr.bf16.mxu0 %v2279
    %3366 = vmatpush1.bf16.msra.mxu0 %v2278
    %3367 = vmatprep.subr.bf16.mxu0 %v2283
    %3368 = vmatpush1.bf16.msra.mxu0 %v2282
    %3369 = vmatprep.subr.bf16.mxu0 %v2287
    %3370 = vmatpush1.bf16.msra.mxu0 %v2286
    %3371 = vmatprep.subr.bf16.mxu0 %v2291
    %3372 = vmatpush1.bf16.msra.mxu0 %v2290
    %3373 = vmatprep.subr.bf16.mxu0 %v2295
    %3374 = vmatpush1.bf16.msra.mxu0 %v2294
    %3375 = vmatprep.subr.bf16.mxu0 %v2299
    %3376 = vmatpush1.bf16.msra.mxu0 %v2298
    %3377 = vmatprep.subr.bf16.mxu0 %v2303
    %3378 = vmatpush1.bf16.msra.mxu0 %v2302
    %3379 = vmatprep.subr.bf16.mxu0 %v2307
    %3380 = vmatpush1.bf16.msra.mxu0 %v2306
    %3381 = vmatprep.subr.bf16.mxu0 %v2311
    %3382 = vmatpush1.bf16.msra.mxu0 %v2310
    %3383 = vmatprep.subr.bf16.mxu0 %v2315
    %3384 = vmatpush1.bf16.msra.mxu0 %v2314
    %3385 = vmatprep.subr.bf16.mxu0 %v2319
    %3386 = vmatpush1.bf16.msra.mxu0 %v2318
    %3387 = vmatprep.subr.bf16.mxu0 %v2323
    %3388 = vmatpush1.bf16.msra.mxu0 %v2322
    %3389 = vmatprep.subr.bf16.mxu0 %v2327
    %3390 = vmatpush1.bf16.msra.mxu0 %v2326
    %3391 = vmatprep.subr.bf16.mxu0 %v2331
    %3392 = vmatpush1.bf16.msra.mxu0 %v2330
    %3393 = vmatprep.subr.bf16.mxu0 %v2335
    %3394 = vmatpush1.bf16.msra.mxu0 %v2334
    %3395 = vmatprep.mubr.bf16.mxu0 %v653
    %3396 = vmatmul.mubr.bf16.gmra.mrb[0].mxu0 %v652
    %v3397 = vpop.f32.mrb[0].mxu0
    %v3398 = vadd.f32 %v3357, %v3397
    %v3399 = vpop.f32.mrb[0].mxu0
    %v3400 = vadd.f32 %v3359, %v3399
    %v3401 = vpop.f32.mrb[0].mxu0
    %v3402 = vpop.f32.mrb[0].mxu0
    %3403 = vdwg.mxu0
    %3404 = vmatprep.subr.bf16.mxu0 %v2339
    %3405 = vmatpush1.bf16.msra.mxu0 %v2338
    %3406 = vmatprep.subr.bf16.mxu0 %v2343
    %3407 = vmatpush1.bf16.msra.mxu0 %v2342
    %3408 = vmatprep.subr.bf16.mxu0 %v2347
    %3409 = vmatpush1.bf16.msra.mxu0 %v2346
    %3410 = vmatprep.subr.bf16.mxu0 %v2351
    %3411 = vmatpush1.bf16.msra.mxu0 %v2350
    %3412 = vmatprep.subr.bf16.mxu0 %v2355
    %3413 = vmatpush1.bf16.msra.mxu0 %v2354
    %3414 = vmatprep.subr.bf16.mxu0 %v2359
    %3415 = vmatpush1.bf16.msra.mxu0 %v2358
    %3416 = vmatprep.subr.bf16.mxu0 %v2363
    %3417 = vmatpush1.bf16.msra.mxu0 %v2362
    %3418 = vmatprep.subr.bf16.mxu0 %v2367
    %3419 = vmatpush1.bf16.msra.mxu0 %v2366
    %3420 = vmatprep.subr.bf16.mxu0 %v2371
    %3421 = vmatpush1.bf16.msra.mxu0 %v2370
    %3422 = vmatprep.subr.bf16.mxu0 %v2375
    %3423 = vmatpush1.bf16.msra.mxu0 %v2374
    %3424 = vmatprep.subr.bf16.mxu0 %v2379
    %3425 = vmatpush1.bf16.msra.mxu0 %v2378
    %3426 = vmatprep.subr.bf16.mxu0 %v2383
    %3427 = vmatpush1.bf16.msra.mxu0 %v2382
    %3428 = vmatprep.subr.bf16.mxu0 %v2387
    %3429 = vmatpush1.bf16.msra.mxu0 %v2386
    %3430 = vmatprep.subr.bf16.mxu0 %v2391
    %3431 = vmatpush1.bf16.msra.mxu0 %v2390
    %3432 = vmatprep.subr.bf16.mxu0 %v2395
    %3433 = vmatpush1.bf16.msra.mxu0 %v2394
    %3434 = vmatprep.subr.bf16.mxu0 %v2399
    %3435 = vmatpush1.bf16.msra.mxu0 %v2398
    %3436 = vmatprep.mubr.bf16.mxu0 %v655
    %3437 = vmatmul.mubr.bf16.gmra.mrb[0].mxu0 %v654
    %v3438 = vpop.f32.mrb[0].mxu0
    %v3439 = vadd.f32 %v3398, %v3438
    %v3440 = vpop.f32.mrb[0].mxu0
    %v3441 = vadd.f32 %v3400, %v3440
    %v3442 = vpop.f32.mrb[0].mxu0
    %v3443 = vpop.f32.mrb[0].mxu0
    %3444 = vdwg.mxu0
    %3445 = vmatprep.subr.bf16.mxu0 %v2403
    %3446 = vmatpush1.bf16.msra.mxu0 %v2402
    %3447 = vmatprep.subr.bf16.mxu0 %v2407
    %3448 = vmatpush1.bf16.msra.mxu0 %v2406
    %3449 = vmatprep.subr.bf16.mxu0 %v2411
    %3450 = vmatpush1.bf16.msra.mxu0 %v2410
    %3451 = vmatprep.subr.bf16.mxu0 %v2415
    %3452 = vmatpush1.bf16.msra.mxu0 %v2414
    %3453 = vmatprep.subr.bf16.mxu0 %v2419
    %3454 = vmatpush1.bf16.msra.mxu0 %v2418
    %3455 = vmatprep.subr.bf16.mxu0 %v2423
    %3456 = vmatpush1.bf16.msra.mxu0 %v2422
    %3457 = vmatprep.subr.bf16.mxu0 %v2427
    %3458 = vmatpush1.bf16.msra.mxu0 %v2426
    %3459 = vmatprep.subr.bf16.mxu0 %v2431
    %3460 = vmatpush1.bf16.msra.mxu0 %v2430
    %3461 = vmatprep.subr.bf16.mxu0 %v2435
    %3462 = vmatpush1.bf16.msra.mxu0 %v2434
    %3463 = vmatprep.subr.bf16.mxu0 %v2439
    %3464 = vmatpush1.bf16.msra.mxu0 %v2438
    %3465 = vmatprep.subr.bf16.mxu0 %v2443
    %3466 = vmatpush1.bf16.msra.mxu0 %v2442
    %3467 = vmatprep.subr.bf16.mxu0 %v2447
    %3468 = vmatpush1.bf16.msra.mxu0 %v2446
    %3469 = vmatprep.subr.bf16.mxu0 %v2451
    %3470 = vmatpush1.bf16.msra.mxu0 %v2450
    %3471 = vmatprep.subr.bf16.mxu0 %v2455
    %3472 = vmatpush1.bf16.msra.mxu0 %v2454
    %3473 = vmatprep.subr.bf16.mxu0 %v2459
    %3474 = vmatpush1.bf16.msra.mxu0 %v2458
    %3475 = vmatprep.subr.bf16.mxu0 %v2463
    %3476 = vmatpush1.bf16.msra.mxu0 %v2462
    %3477 = vmatprep.mubr.bf16.mxu0 %v657
    %3478 = vmatmul.mubr.bf16.gmra.mrb[0].mxu0 %v656
    %v3479 = vpop.f32.mrb[0].mxu0
    %v3480 = vadd.f32 %v3439, %v3479
    %v3481 = vpop.f32.mrb[0].mxu0
    %v3482 = vadd.f32 %v3441, %v3481
    %v3483 = vpop.f32.mrb[0].mxu0
    %v3484 = vpop.f32.mrb[0].mxu0
    %3485 = vdwg.mxu0
    %v3486 = vmax.f32 %v3193, 0.0
    %v3487 = vmax.f32 %v3195, 0.0
    %v3488 = vmax.f32 %v3480, 0.0
    %v3489 = vmax.f32 %v3482, 0.0
    %v3490 = vpack.c.bf16 %v3486, %v3486
    %v3491 = vpack.c.bf16 %v3487, %v3487
    %v3492 = vpack.c.bf16 %v3488, %v3488
    %v3493 = vpack.c.bf16 %v3489, %v3489
    %v3494 = vld [vmem:[#allocation8] sm:$0xff]
    %v3495 = vld [vmem:[#allocation8 + $0x8] sm:$0xff]
    %v3496 = vld [vmem:[#allocation8 + $0x10] sm:$0xff]
    %v3497 = vld [vmem:[#allocation8 + $0x18] sm:$0xff]
    %v3498 = vld [vmem:[#allocation8 + $0x20] sm:$0xff]
    %v3499 = vld [vmem:[#allocation8 + $0x28] sm:$0xff]
    %v3500 = vld [vmem:[#allocation8 + $0x30] sm:$0xff]
    %v3501 = vld [vmem:[#allocation8 + $0x38] sm:$0xff]
    %v3502 = vld [vmem:[#allocation8 + $0x40] sm:$0xff]
    %v3503 = vld [vmem:[#allocation8 + $0x48] sm:$0xff]
    %v3504 = vld [vmem:[#allocation8 + $0x50] sm:$0xff]
    %v3505 = vld [vmem:[#allocation8 + $0x58] sm:$0xff]
    %v3506 = vld [vmem:[#allocation8 + $0x60] sm:$0xff]
    %v3507 = vld [vmem:[#allocation8 + $0x68] sm:$0xff]
    %v3508 = vld [vmem:[#allocation8 + $0x70] sm:$0xff]
    %v3509 = vld [vmem:[#allocation8 + $0x78] sm:$0xff]
    %v3510 = vld [vmem:[#allocation8 + $0x80] sm:$0xff]
    %v3511 = vld [vmem:[#allocation8 + $0x88] sm:$0xff]
    %v3512 = vld [vmem:[#allocation8 + $0x90] sm:$0xff]
    %v3513 = vld [vmem:[#allocation8 + $0x98] sm:$0xff]
    %v3514 = vld [vmem:[#allocation8 + $0xa0] sm:$0xff]
    %v3515 = vld [vmem:[#allocation8 + $0xa8] sm:$0xff]
    %v3516 = vld [vmem:[#allocation8 + $0xb0] sm:$0xff]
    %v3517 = vld [vmem:[#allocation8 + $0xb8] sm:$0xff]
    %v3518 = vld [vmem:[#allocation8 + $0xc0] sm:$0xff]
    %v3519 = vld [vmem:[#allocation8 + $0xc8] sm:$0xff]
    %v3520 = vld [vmem:[#allocation8 + $0xd0] sm:$0xff]
    %v3521 = vld [vmem:[#allocation8 + $0xd8] sm:$0xff]
    %v3522 = vld [vmem:[#allocation8 + $0xe0] sm:$0xff]
    %v3523 = vld [vmem:[#allocation8 + $0xe8] sm:$0xff]
    %v3524 = vld [vmem:[#allocation8 + $0xf0] sm:$0xff]
    %v3525 = vld [vmem:[#allocation8 + $0xf8] sm:$0xff]
    %v3526 = vld [vmem:[#allocation8 + $0x100] sm:$0xff]
    %v3527 = vld [vmem:[#allocation8 + $0x108] sm:$0xff]
    %v3528 = vld [vmem:[#allocation8 + $0x110] sm:$0xff]
    %v3529 = vld [vmem:[#allocation8 + $0x118] sm:$0xff]
    %v3530 = vld [vmem:[#allocation8 + $0x120] sm:$0xff]
    %v3531 = vld [vmem:[#allocation8 + $0x128] sm:$0xff]
    %v3532 = vld [vmem:[#allocation8 + $0x130] sm:$0xff]
    %v3533 = vld [vmem:[#allocation8 + $0x138] sm:$0xff]
    %v3534 = vld [vmem:[#allocation8 + $0x140] sm:$0xff]
    %v3535 = vld [vmem:[#allocation8 + $0x148] sm:$0xff]
    %v3536 = vld [vmem:[#allocation8 + $0x150] sm:$0xff]
    %v3537 = vld [vmem:[#allocation8 + $0x158] sm:$0xff]
    %v3538 = vld [vmem:[#allocation8 + $0x160] sm:$0xff]
    %v3539 = vld [vmem:[#allocation8 + $0x168] sm:$0xff]
    %v3540 = vld [vmem:[#allocation8 + $0x170] sm:$0xff]
    %v3541 = vld [vmem:[#allocation8 + $0x178] sm:$0xff]
    %v3542 = vld [vmem:[#allocation8 + $0x180] sm:$0xff]
    %v3543 = vld [vmem:[#allocation8 + $0x188] sm:$0xff]
    %v3544 = vld [vmem:[#allocation8 + $0x190] sm:$0xff]
    %v3545 = vld [vmem:[#allocation8 + $0x198] sm:$0xff]
    %v3546 = vld [vmem:[#allocation8 + $0x1a0] sm:$0xff]
    %v3547 = vld [vmem:[#allocation8 + $0x1a8] sm:$0xff]
    %v3548 = vld [vmem:[#allocation8 + $0x1b0] sm:$0xff]
    %v3549 = vld [vmem:[#allocation8 + $0x1b8] sm:$0xff]
    %v3550 = vld [vmem:[#allocation8 + $0x1c0] sm:$0xff]
    %v3551 = vld [vmem:[#allocation8 + $0x1c8] sm:$0xff]
    %v3552 = vld [vmem:[#allocation8 + $0x1d0] sm:$0xff]
    %v3553 = vld [vmem:[#allocation8 + $0x1d8] sm:$0xff]
    %v3554 = vld [vmem:[#allocation8 + $0x1e0] sm:$0xff]
    %v3555 = vld [vmem:[#allocation8 + $0x1e8] sm:$0xff]
    %v3556 = vld [vmem:[#allocation8 + $0x1f0] sm:$0xff]
    %v3557 = vld [vmem:[#allocation8 + $0x1f8] sm:$0xff]
    %v3558 = vld [vmem:[#allocation10] sm:$0x3]
    %v3560 = vlaneseq
    %v3561 = vshrl.u32 %v3560, 7
    %v3562 = vsub.s32 0, %v3561
    %v3563 = vrot.slane %v3558, %v3562
    %v3564 = vlaneseq
    %v3565 = vshrl.u32 %v3564, 7
    %v3566 = vsub.s32 1, %v3565
    %v3567 = vrot.slane %v3558, %v3566
    %v3634 = vunpack.c.l.b16 %v3494
    %v3635 = vunpack.c.h.b16 %v3494
    %v3636 = vunpack.c.l.b16 %v3495
    %v3637 = vunpack.c.h.b16 %v3495
    %v3638 = vunpack.c.l.b16 %v3496
    %v3639 = vunpack.c.h.b16 %v3496
    %v3640 = vunpack.c.l.b16 %v3497
    %v3641 = vunpack.c.h.b16 %v3497
    %v3642 = vunpack.c.l.b16 %v3498
    %v3643 = vunpack.c.h.b16 %v3498
    %v3644 = vunpack.c.l.b16 %v3499
    %v3645 = vunpack.c.h.b16 %v3499
    %v3646 = vunpack.c.l.b16 %v3500
    %v3647 = vunpack.c.h.b16 %v3500
    %v3648 = vunpack.c.l.b16 %v3501
    %v3649 = vunpack.c.h.b16 %v3501
    %v3650 = vunpack.c.l.b16 %v3502
    %v3651 = vunpack.c.h.b16 %v3502
    %v3652 = vunpack.c.l.b16 %v3503
    %v3653 = vunpack.c.h.b16 %v3503
    %v3654 = vunpack.c.l.b16 %v3504
    %v3655 = vunpack.c.h.b16 %v3504
    %v3656 = vunpack.c.l.b16 %v3505
    %v3657 = vunpack.c.h.b16 %v3505
    %v3658 = vunpack.c.l.b16 %v3506
    %v3659 = vunpack.c.h.b16 %v3506
    %v3660 = vunpack.c.l.b16 %v3507
    %v3661 = vunpack.c.h.b16 %v3507
    %v3662 = vunpack.c.l.b16 %v3508
    %v3663 = vunpack.c.h.b16 %v3508
    %v3664 = vunpack.c.l.b16 %v3509
    %v3665 = vunpack.c.h.b16 %v3509
    %v3666 = vunpack.c.l.b16 %v3510
    %v3667 = vunpack.c.h.b16 %v3510
    %v3668 = vunpack.c.l.b16 %v3511
    %v3669 = vunpack.c.h.b16 %v3511
    %v3670 = vunpack.c.l.b16 %v3512
    %v3671 = vunpack.c.h.b16 %v3512
    %v3672 = vunpack.c.l.b16 %v3513
    %v3673 = vunpack.c.h.b16 %v3513
    %v3674 = vunpack.c.l.b16 %v3514
    %v3675 = vunpack.c.h.b16 %v3514
    %v3676 = vunpack.c.l.b16 %v3515
    %v3677 = vunpack.c.h.b16 %v3515
    %v3678 = vunpack.c.l.b16 %v3516
    %v3679 = vunpack.c.h.b16 %v3516
    %v3680 = vunpack.c.l.b16 %v3517
    %v3681 = vunpack.c.h.b16 %v3517
    %v3682 = vunpack.c.l.b16 %v3518
    %v3683 = vunpack.c.h.b16 %v3518
    %v3684 = vunpack.c.l.b16 %v3519
    %v3685 = vunpack.c.h.b16 %v3519
    %v3686 = vunpack.c.l.b16 %v3520
    %v3687 = vunpack.c.h.b16 %v3520
    %v3688 = vunpack.c.l.b16 %v3521
    %v3689 = vunpack.c.h.b16 %v3521
    %v3690 = vunpack.c.l.b16 %v3522
    %v3691 = vunpack.c.h.b16 %v3522
    %v3692 = vunpack.c.l.b16 %v3523
    %v3693 = vunpack.c.h.b16 %v3523
    %v3694 = vunpack.c.l.b16 %v3524
    %v3695 = vunpack.c.h.b16 %v3524
    %v3696 = vunpack.c.l.b16 %v3525
    %v3697 = vunpack.c.h.b16 %v3525
    %v3698 = vunpack.c.l.b16 %v3526
    %v3699 = vunpack.c.h.b16 %v3526
    %v3700 = vunpack.c.l.b16 %v3527
    %v3701 = vunpack.c.h.b16 %v3527
    %v3702 = vunpack.c.l.b16 %v3528
    %v3703 = vunpack.c.h.b16 %v3528
    %v3704 = vunpack.c.l.b16 %v3529
    %v3705 = vunpack.c.h.b16 %v3529
    %v3706 = vunpack.c.l.b16 %v3530
    %v3707 = vunpack.c.h.b16 %v3530
    %v3708 = vunpack.c.l.b16 %v3531
    %v3709 = vunpack.c.h.b16 %v3531
    %v3710 = vunpack.c.l.b16 %v3532
    %v3711 = vunpack.c.h.b16 %v3532
    %v3712 = vunpack.c.l.b16 %v3533
    %v3713 = vunpack.c.h.b16 %v3533
    %v3714 = vunpack.c.l.b16 %v3534
    %v3715 = vunpack.c.h.b16 %v3534
    %v3716 = vunpack.c.l.b16 %v3535
    %v3717 = vunpack.c.h.b16 %v3535
    %v3718 = vunpack.c.l.b16 %v3536
    %v3719 = vunpack.c.h.b16 %v3536
    %v3720 = vunpack.c.l.b16 %v3537
    %v3721 = vunpack.c.h.b16 %v3537
    %v3722 = vunpack.c.l.b16 %v3538
    %v3723 = vunpack.c.h.b16 %v3538
    %v3724 = vunpack.c.l.b16 %v3539
    %v3725 = vunpack.c.h.b16 %v3539
    %v3726 = vunpack.c.l.b16 %v3540
    %v3727 = vunpack.c.h.b16 %v3540
    %v3728 = vunpack.c.l.b16 %v3541
    %v3729 = vunpack.c.h.b16 %v3541
    %v3730 = vunpack.c.l.b16 %v3542
    %v3731 = vunpack.c.h.b16 %v3542
    %v3732 = vunpack.c.l.b16 %v3543
    %v3733 = vunpack.c.h.b16 %v3543
    %v3734 = vunpack.c.l.b16 %v3544
    %v3735 = vunpack.c.h.b16 %v3544
    %v3736 = vunpack.c.l.b16 %v3545
    %v3737 = vunpack.c.h.b16 %v3545
    %v3738 = vunpack.c.l.b16 %v3546
    %v3739 = vunpack.c.h.b16 %v3546
    %v3740 = vunpack.c.l.b16 %v3547
    %v3741 = vunpack.c.h.b16 %v3547
    %v3742 = vunpack.c.l.b16 %v3548
    %v3743 = vunpack.c.h.b16 %v3548
    %v3744 = vunpack.c.l.b16 %v3549
    %v3745 = vunpack.c.h.b16 %v3549
    %v3746 = vunpack.c.l.b16 %v3550
    %v3747 = vunpack.c.h.b16 %v3550
    %v3748 = vunpack.c.l.b16 %v3551
    %v3749 = vunpack.c.h.b16 %v3551
    %v3750 = vunpack.c.l.b16 %v3552
    %v3751 = vunpack.c.h.b16 %v3552
    %v3752 = vunpack.c.l.b16 %v3553
    %v3753 = vunpack.c.h.b16 %v3553
    %v3754 = vunpack.c.l.b16 %v3554
    %v3755 = vunpack.c.h.b16 %v3554
    %v3756 = vunpack.c.l.b16 %v3555
    %v3757 = vunpack.c.h.b16 %v3555
    %v3758 = vunpack.c.l.b16 %v3556
    %v3759 = vunpack.c.h.b16 %v3556
    %v3760 = vunpack.c.l.b16 %v3557
    %v3761 = vunpack.c.h.b16 %v3557
    %v3762 = vpack.c.b16 %v3636, %v3634
    %v3763 = vpack.c.b16 %v3637, %v3635
    %v3764 = vpack.c.b16 %v3640, %v3638
    %v3765 = vpack.c.b16 %v3641, %v3639
    %v3766 = vpack.c.b16 %v3644, %v3642
    %v3767 = vpack.c.b16 %v3645, %v3643
    %v3768 = vpack.c.b16 %v3648, %v3646
    %v3769 = vpack.c.b16 %v3649, %v3647
    %v3770 = vpack.c.b16 %v3652, %v3650
    %v3771 = vpack.c.b16 %v3653, %v3651
    %v3772 = vpack.c.b16 %v3656, %v3654
    %v3773 = vpack.c.b16 %v3657, %v3655
    %v3774 = vpack.c.b16 %v3660, %v3658
    %v3775 = vpack.c.b16 %v3661, %v3659
    %v3776 = vpack.c.b16 %v3664, %v3662
    %v3777 = vpack.c.b16 %v3665, %v3663
    %v3778 = vpack.c.b16 %v3668, %v3666
    %v3779 = vpack.c.b16 %v3669, %v3667
    %v3780 = vpack.c.b16 %v3672, %v3670
    %v3781 = vpack.c.b16 %v3673, %v3671
    %v3782 = vpack.c.b16 %v3676, %v3674
    %v3783 = vpack.c.b16 %v3677, %v3675
    %v3784 = vpack.c.b16 %v3680, %v3678
    %v3785 = vpack.c.b16 %v3681, %v3679
    %v3786 = vpack.c.b16 %v3684, %v3682
    %v3787 = vpack.c.b16 %v3685, %v3683
    %v3788 = vpack.c.b16 %v3688, %v3686
    %v3789 = vpack.c.b16 %v3689, %v3687
    %v3790 = vpack.c.b16 %v3692, %v3690
    %v3791 = vpack.c.b16 %v3693, %v3691
    %v3792 = vpack.c.b16 %v3696, %v3694
    %v3793 = vpack.c.b16 %v3697, %v3695
    %v3794 = vpack.c.b16 %v3700, %v3698
    %v3795 = vpack.c.b16 %v3701, %v3699
    %v3796 = vpack.c.b16 %v3704, %v3702
    %v3797 = vpack.c.b16 %v3705, %v3703
    %v3798 = vpack.c.b16 %v3708, %v3706
    %v3799 = vpack.c.b16 %v3709, %v3707
    %v3800 = vpack.c.b16 %v3712, %v3710
    %v3801 = vpack.c.b16 %v3713, %v3711
    %v3802 = vpack.c.b16 %v3716, %v3714
    %v3803 = vpack.c.b16 %v3717, %v3715
    %v3804 = vpack.c.b16 %v3720, %v3718
    %v3805 = vpack.c.b16 %v3721, %v3719
    %v3806 = vpack.c.b16 %v3724, %v3722
    %v3807 = vpack.c.b16 %v3725, %v3723
    %v3808 = vpack.c.b16 %v3728, %v3726
    %v3809 = vpack.c.b16 %v3729, %v3727
    %v3810 = vpack.c.b16 %v3732, %v3730
    %v3811 = vpack.c.b16 %v3733, %v3731
    %v3812 = vpack.c.b16 %v3736, %v3734
    %v3813 = vpack.c.b16 %v3737, %v3735
    %v3814 = vpack.c.b16 %v3740, %v3738
    %v3815 = vpack.c.b16 %v3741, %v3739
    %v3816 = vpack.c.b16 %v3744, %v3742
    %v3817 = vpack.c.b16 %v3745, %v3743
    %v3818 = vpack.c.b16 %v3748, %v3746
    %v3819 = vpack.c.b16 %v3749, %v3747
    %v3820 = vpack.c.b16 %v3752, %v3750
    %v3821 = vpack.c.b16 %v3753, %v3751
    %v3822 = vpack.c.b16 %v3756, %v3754
    %v3823 = vpack.c.b16 %v3757, %v3755
    %v3824 = vpack.c.b16 %v3760, %v3758
    %v3825 = vpack.c.b16 %v3761, %v3759
    %3890 = vmatprep.subr.bf16.mxu0 %v3763
    %3891 = vmatpush1.bf16.msra.mxu0 %v3762
    %3892 = vmatprep.subr.bf16.mxu0 %v3765
    %3893 = vmatpush1.bf16.msra.mxu0 %v3764
    %3894 = vmatprep.subr.bf16.mxu0 %v3767
    %3895 = vmatpush1.bf16.msra.mxu0 %v3766
    %3896 = vmatprep.subr.bf16.mxu0 %v3769
    %3897 = vmatpush1.bf16.msra.mxu0 %v3768
    %3898 = vmatprep.subr.bf16.mxu0 %v3771
    %3899 = vmatpush1.bf16.msra.mxu0 %v3770
    %3900 = vmatprep.subr.bf16.mxu0 %v3773
    %3901 = vmatpush1.bf16.msra.mxu0 %v3772
    %3902 = vmatprep.subr.bf16.mxu0 %v3775
    %3903 = vmatpush1.bf16.msra.mxu0 %v3774
    %3904 = vmatprep.subr.bf16.mxu0 %v3777
    %3905 = vmatpush1.bf16.msra.mxu0 %v3776
    %3906 = vmatprep.subr.bf16.mxu0 %v3779
    %3907 = vmatpush1.bf16.msra.mxu0 %v3778
    %3908 = vmatprep.subr.bf16.mxu0 %v3781
    %3909 = vmatpush1.bf16.msra.mxu0 %v3780
    %3910 = vmatprep.subr.bf16.mxu0 %v3783
    %3911 = vmatpush1.bf16.msra.mxu0 %v3782
    %3912 = vmatprep.subr.bf16.mxu0 %v3785
    %3913 = vmatpush1.bf16.msra.mxu0 %v3784
    %3914 = vmatprep.subr.bf16.mxu0 %v3787
    %3915 = vmatpush1.bf16.msra.mxu0 %v3786
    %3916 = vmatprep.subr.bf16.mxu0 %v3789
    %3917 = vmatpush1.bf16.msra.mxu0 %v3788
    %3918 = vmatprep.subr.bf16.mxu0 %v3791
    %3919 = vmatpush1.bf16.msra.mxu0 %v3790
    %3920 = vmatprep.subr.bf16.mxu0 %v3793
    %3921 = vmatpush1.bf16.msra.mxu0 %v3792
    %3922 = vmatprep.mubr.bf16.mxu0 %v3491
    %3923 = vmatmul.mubr.bf16.gmra.mrb[0].mxu0 %v3490
    %v3924 = vpop.f32.mrb[0].mxu0
    %v3925 = vadd.f32 %v3563, %v3924
    %v3926 = vpop.f32.mrb[0].mxu0
    %v3927 = vadd.f32 %v3567, %v3926
    %v3928 = vpop.f32.mrb[0].mxu0
    %v3929 = vpop.f32.mrb[0].mxu0
    %3930 = vdwg.mxu0
    %3931 = vmatprep.subr.bf16.mxu0 %v3795
    %3932 = vmatpush1.bf16.msra.mxu0 %v3794
    %3933 = vmatprep.subr.bf16.mxu0 %v3797
    %3934 = vmatpush1.bf16.msra.mxu0 %v3796
    %3935 = vmatprep.subr.bf16.mxu0 %v3799
    %3936 = vmatpush1.bf16.msra.mxu0 %v3798
    %3937 = vmatprep.subr.bf16.mxu0 %v3801
    %3938 = vmatpush1.bf16.msra.mxu0 %v3800
    %3939 = vmatprep.subr.bf16.mxu0 %v3803
    %3940 = vmatpush1.bf16.msra.mxu0 %v3802
    %3941 = vmatprep.subr.bf16.mxu0 %v3805
    %3942 = vmatpush1.bf16.msra.mxu0 %v3804
    %3943 = vmatprep.subr.bf16.mxu0 %v3807
    %3944 = vmatpush1.bf16.msra.mxu0 %v3806
    %3945 = vmatprep.subr.bf16.mxu0 %v3809
    %3946 = vmatpush1.bf16.msra.mxu0 %v3808
    %3947 = vmatprep.subr.bf16.mxu0 %v3811
    %3948 = vmatpush1.bf16.msra.mxu0 %v3810
    %3949 = vmatprep.subr.bf16.mxu0 %v3813
    %3950 = vmatpush1.bf16.msra.mxu0 %v3812
    %3951 = vmatprep.subr.bf16.mxu0 %v3815
    %3952 = vmatpush1.bf16.msra.mxu0 %v3814
    %3953 = vmatprep.subr.bf16.mxu0 %v3817
    %3954 = vmatpush1.bf16.msra.mxu0 %v3816
    %3955 = vmatprep.subr.bf16.mxu0 %v3819
    %3956 = vmatpush1.bf16.msra.mxu0 %v3818
    %3957 = vmatprep.subr.bf16.mxu0 %v3821
    %3958 = vmatpush1.bf16.msra.mxu0 %v3820
    %3959 = vmatprep.subr.bf16.mxu0 %v3823
    %3960 = vmatpush1.bf16.msra.mxu0 %v3822
    %3961 = vmatprep.subr.bf16.mxu0 %v3825
    %3962 = vmatpush1.bf16.msra.mxu0 %v3824
    %3963 = vmatprep.mubr.bf16.mxu0 %v3493
    %3964 = vmatmul.mubr.bf16.gmra.mrb[0].mxu0 %v3492
    %v3965 = vpop.f32.mrb[0].mxu0
    %v3966 = vadd.f32 %v3925, %v3965
    %v3967 = vpop.f32.mrb[0].mxu0
    %v3968 = vadd.f32 %v3927, %v3967
    %v3969 = vpop.f32.mrb[0].mxu0
    %v3970 = vpop.f32.mrb[0].mxu0
    %3971 = vdwg.mxu0
    %v3972 = vmax.f32 %v3966, 0.0
    %v3973 = vmax.f32 %v3968, 0.0
    %v3974 = vpack.c.bf16 %v3972, %v3972
    %v3975 = vpack.c.bf16 %v3973, %v3973
    %v3976 = vld [vmem:[#allocation11] sm:$0xf]
    %v3977 = vld [vmem:[#allocation11 + $0x4] sm:$0xf]
    %v3978 = vld [vmem:[#allocation11 + $0x8] sm:$0xf]
    %v3979 = vld [vmem:[#allocation11 + $0xc] sm:$0xf]
    %v3980 = vld [vmem:[#allocation11 + $0x10] sm:$0xf]
    %v3981 = vld [vmem:[#allocation11 + $0x14] sm:$0xf]
    %v3982 = vld [vmem:[#allocation11 + $0x18] sm:$0xf]
    %v3983 = vld [vmem:[#allocation11 + $0x1c] sm:$0xf]
    %v3984 = vld [vmem:[#allocation11 + $0x20] sm:$0xf]
    %v3985 = vld [vmem:[#allocation11 + $0x24] sm:$0xf]
    %v3986 = vld [vmem:[#allocation11 + $0x28] sm:$0xf]
    %v3987 = vld [vmem:[#allocation11 + $0x2c] sm:$0xf]
    %v3988 = vld [vmem:[#allocation11 + $0x30] sm:$0xf]
    %v3989 = vld [vmem:[#allocation11 + $0x34] sm:$0xf]
    %v3990 = vld [vmem:[#allocation11 + $0x38] sm:$0xf]
    %v3991 = vld [vmem:[#allocation11 + $0x3c] sm:$0xf]
    %v3992 = vld [vmem:[#allocation11 + $0x40] sm:$0xf]
    %v3993 = vld [vmem:[#allocation11 + $0x44] sm:$0xf]
    %v3994 = vld [vmem:[#allocation11 + $0x48] sm:$0xf]
    %v3995 = vld [vmem:[#allocation11 + $0x4c] sm:$0xf]
    %v3996 = vld [vmem:[#allocation11 + $0x50] sm:$0xf]
    %v3997 = vld [vmem:[#allocation11 + $0x54] sm:$0xf]
    %v3998 = vld [vmem:[#allocation11 + $0x58] sm:$0xf]
    %v3999 = vld [vmem:[#allocation11 + $0x5c] sm:$0xf]
    %v4000 = vld [vmem:[#allocation11 + $0x60] sm:$0xf]
    %v4001 = vld [vmem:[#allocation11 + $0x64] sm:$0xf]
    %v4002 = vld [vmem:[#allocation11 + $0x68] sm:$0xf]
    %v4003 = vld [vmem:[#allocation11 + $0x6c] sm:$0xf]
    %v4004 = vld [vmem:[#allocation11 + $0x70] sm:$0xf]
    %v4005 = vld [vmem:[#allocation11 + $0x74] sm:$0xf]
    %v4006 = vld [vmem:[#allocation11 + $0x78] sm:$0xf]
    %v4007 = vld [vmem:[#allocation11 + $0x7c] sm:$0xf]
    %v4008 = vld [vmem:[#allocation13] sm:$0x1]
    %v4010 = vlaneseq
    %v4011 = vshrl.u32 %v4010, 7
    %v4012 = vsub.s32 0, %v4011
    %v4013 = vrot.slane %v4008, %v4012
    %v4047 = vunpack.c.l.b16 %v3976
    %v4048 = vunpack.c.l.b16 %v3977
    %v4049 = vunpack.c.l.b16 %v3978
    %v4050 = vunpack.c.l.b16 %v3979
    %v4051 = vunpack.c.l.b16 %v3980
    %v4052 = vunpack.c.l.b16 %v3981
    %v4053 = vunpack.c.l.b16 %v3982
    %v4054 = vunpack.c.l.b16 %v3983
    %v4055 = vunpack.c.l.b16 %v3984
    %v4056 = vunpack.c.l.b16 %v3985
    %v4057 = vunpack.c.l.b16 %v3986
    %v4058 = vunpack.c.l.b16 %v3987
    %v4059 = vunpack.c.l.b16 %v3988
    %v4060 = vunpack.c.l.b16 %v3989
    %v4061 = vunpack.c.l.b16 %v3990
    %v4062 = vunpack.c.l.b16 %v3991
    %v4063 = vunpack.c.l.b16 %v3992
    %v4064 = vunpack.c.l.b16 %v3993
    %v4065 = vunpack.c.l.b16 %v3994
    %v4066 = vunpack.c.l.b16 %v3995
    %v4067 = vunpack.c.l.b16 %v3996
    %v4068 = vunpack.c.l.b16 %v3997
    %v4069 = vunpack.c.l.b16 %v3998
    %v4070 = vunpack.c.l.b16 %v3999
    %v4071 = vunpack.c.l.b16 %v4000
    %v4072 = vunpack.c.l.b16 %v4001
    %v4073 = vunpack.c.l.b16 %v4002
    %v4074 = vunpack.c.l.b16 %v4003
    %v4075 = vunpack.c.l.b16 %v4004
    %v4076 = vunpack.c.l.b16 %v4005
    %v4077 = vunpack.c.l.b16 %v4006
    %v4078 = vunpack.c.l.b16 %v4007
    %v4079 = vpack.c.b16 %v4048, %v4047
    %v4080 = vpack.c.b16 %v4050, %v4049
    %v4081 = vpack.c.b16 %v4052, %v4051
    %v4082 = vpack.c.b16 %v4054, %v4053
    %v4083 = vpack.c.b16 %v4056, %v4055
    %v4084 = vpack.c.b16 %v4058, %v4057
    %v4085 = vpack.c.b16 %v4060, %v4059
    %v4086 = vpack.c.b16 %v4062, %v4061
    %v4087 = vpack.c.b16 %v4064, %v4063
    %v4088 = vpack.c.b16 %v4066, %v4065
    %v4089 = vpack.c.b16 %v4068, %v4067
    %v4090 = vpack.c.b16 %v4070, %v4069
    %v4091 = vpack.c.b16 %v4072, %v4071
    %v4092 = vpack.c.b16 %v4074, %v4073
    %v4093 = vpack.c.b16 %v4076, %v4075
    %v4094 = vpack.c.b16 %v4078, %v4077
    %4111 = vmatprep.subr.bf16.mxu0 0
    %4112 = vmatpush1.bf16.msra.mxu0 %v4079
    %4113 = vmatprep.subr.bf16.mxu0 0
    %4114 = vmatpush1.bf16.msra.mxu0 %v4080
    %4115 = vmatprep.subr.bf16.mxu0 0
    %4116 = vmatpush1.bf16.msra.mxu0 %v4081
    %4117 = vmatprep.subr.bf16.mxu0 0
    %4118 = vmatpush1.bf16.msra.mxu0 %v4082
    %4119 = vmatprep.subr.bf16.mxu0 0
    %4120 = vmatpush1.bf16.msra.mxu0 %v4083
    %4121 = vmatprep.subr.bf16.mxu0 0
    %4122 = vmatpush1.bf16.msra.mxu0 %v4084
    %4123 = vmatprep.subr.bf16.mxu0 0
    %4124 = vmatpush1.bf16.msra.mxu0 %v4085
    %4125 = vmatprep.subr.bf16.mxu0 0
    %4126 = vmatpush1.bf16.msra.mxu0 %v4086
    %4127 = vmatprep.subr.bf16.mxu0 0
    %4128 = vmatpush1.bf16.msra.mxu0 %v4087
    %4129 = vmatprep.subr.bf16.mxu0 0
    %4130 = vmatpush1.bf16.msra.mxu0 %v4088
    %4131 = vmatprep.subr.bf16.mxu0 0
    %4132 = vmatpush1.bf16.msra.mxu0 %v4089
    %4133 = vmatprep.subr.bf16.mxu0 0
    %4134 = vmatpush1.bf16.msra.mxu0 %v4090
    %4135 = vmatprep.subr.bf16.mxu0 0
    %4136 = vmatpush1.bf16.msra.mxu0 %v4091
    %4137 = vmatprep.subr.bf16.mxu0 0
    %4138 = vmatpush1.bf16.msra.mxu0 %v4092
    %4139 = vmatprep.subr.bf16.mxu0 0
    %4140 = vmatpush1.bf16.msra.mxu0 %v4093
    %4141 = vmatprep.subr.bf16.mxu0 0
    %4142 = vmatpush1.bf16.msra.mxu0 %v4094
    %4143 = vmatprep.mubr.bf16.mxu0 %v3975
    %4144 = vmatmul.mubr.bf16.gmra.mrb[0].mxu0 %v3974
    %v4145 = vpop.f32.mrb[0].mxu0
    %v4146 = vadd.f32 %v4013, %v4145
    %v4147 = vpop.f32.mrb[0].mxu0
    %v4148 = vpop.f32.mrb[0].mxu0
    %v4149 = vpop.f32.mrb[0].mxu0
    %4150 = vdwg.mxu0
    %v4151 = vmax.f32 %v4146, 0.0
    %v4152 = vpack.c.bf16 %v4151, %v4151
    %v4153 = vld [vmem:[#allocation14] sm:$0xf]
    %v4154 = vld [vmem:[#allocation14 + $0x4] sm:$0xf]
    %v4155 = vld [vmem:[#allocation14 + $0x8] sm:$0xf]
    %v4156 = vld [vmem:[#allocation14 + $0xc] sm:$0xf]
    %v4157 = vld [vmem:[#allocation14 + $0x10] sm:$0xf]
    %v4158 = vld [vmem:[#allocation14 + $0x14] sm:$0xf]
    %v4159 = vld [vmem:[#allocation14 + $0x18] sm:$0xf]
    %v4160 = vld [vmem:[#allocation14 + $0x1c] sm:$0xf]
    %v4161 = vld [vmem:[#allocation14 + $0x20] sm:$0xf]
    %v4162 = vld [vmem:[#allocation14 + $0x24] sm:$0xf]
    %v4163 = vld [vmem:[#allocation14 + $0x28] sm:$0xf]
    %v4164 = vld [vmem:[#allocation14 + $0x2c] sm:$0xf]
    %v4165 = vld [vmem:[#allocation14 + $0x30] sm:$0xf]
    %v4166 = vld [vmem:[#allocation14 + $0x34] sm:$0xf]
    %v4167 = vld [vmem:[#allocation14 + $0x38] sm:$0xf]
    %v4168 = vld [vmem:[#allocation14 + $0x3c] sm:$0xf]
    %v4169 = vld [vmem:[#allocation16] sm:$0x1]
    %v4171 = vlaneseq
    %v4172 = vshrl.u32 %v4171, 7
    %v4173 = vsub.s32 0, %v4172
    %v4174 = vrot.slane %v4169, %v4173
    %v4192 = vunpack.c.l.b16 %v4153
    %v4193 = vunpack.c.l.b16 %v4154
    %v4194 = vunpack.c.l.b16 %v4155
    %v4195 = vunpack.c.l.b16 %v4156
    %v4196 = vunpack.c.l.b16 %v4157
    %v4197 = vunpack.c.l.b16 %v4158
    %v4198 = vunpack.c.l.b16 %v4159
    %v4199 = vunpack.c.l.b16 %v4160
    %v4200 = vunpack.c.l.b16 %v4161
    %v4201 = vunpack.c.l.b16 %v4162
    %v4202 = vunpack.c.l.b16 %v4163
    %v4203 = vunpack.c.l.b16 %v4164
    %v4204 = vunpack.c.l.b16 %v4165
    %v4205 = vunpack.c.l.b16 %v4166
    %v4206 = vunpack.c.l.b16 %v4167
    %v4207 = vunpack.c.l.b16 %v4168
    %v4208 = vpack.c.b16 %v4193, %v4192
    %v4209 = vpack.c.b16 %v4195, %v4194
    %v4210 = vpack.c.b16 %v4197, %v4196
    %v4211 = vpack.c.b16 %v4199, %v4198
    %v4212 = vpack.c.b16 %v4201, %v4200
    %v4213 = vpack.c.b16 %v4203, %v4202
    %v4214 = vpack.c.b16 %v4205, %v4204
    %v4215 = vpack.c.b16 %v4207, %v4206
    %4224 = vmatprep.subr.bf16.mxu0 0
    %4225 = vmatpush1.bf16.msra.mxu0 %v4208
    %4226 = vmatprep.subr.bf16.mxu0 0
    %4227 = vmatpush1.bf16.msra.mxu0 %v4209
    %4228 = vmatprep.subr.bf16.mxu0 0
    %4229 = vmatpush1.bf16.msra.mxu0 %v4210
    %4230 = vmatprep.subr.bf16.mxu0 0
    %4231 = vmatpush1.bf16.msra.mxu0 %v4211
    %4232 = vmatprep.subr.bf16.mxu0 0
    %4233 = vmatpush1.bf16.msra.mxu0 %v4212
    %4234 = vmatprep.subr.bf16.mxu0 0
    %4235 = vmatpush1.bf16.msra.mxu0 %v4213
    %4236 = vmatprep.subr.bf16.mxu0 0
    %4237 = vmatpush1.bf16.msra.mxu0 %v4214
    %4238 = vmatprep.subr.bf16.mxu0 0
    %4239 = vmatpush1.bf16.msra.mxu0 %v4215
    %4240 = vmatprep.subr.bf16.mxu0 0
    %4241 = vmatpush1.bf16.msra.mxu0 0
    %4242 = vmatprep.subr.bf16.mxu0 0
    %4243 = vmatpush1.bf16.msra.mxu0 0
    %4244 = vmatprep.subr.bf16.mxu0 0
    %4245 = vmatpush1.bf16.msra.mxu0 0
    %4246 = vmatprep.subr.bf16.mxu0 0
    %4247 = vmatpush1.bf16.msra.mxu0 0
    %4248 = vmatprep.subr.bf16.mxu0 0
    %4249 = vmatpush1.bf16.msra.mxu0 0
    %4250 = vmatprep.subr.bf16.mxu0 0
    %4251 = vmatpush1.bf16.msra.mxu0 0
    %4252 = vmatprep.subr.bf16.mxu0 0
    %4253 = vmatpush1.bf16.msra.mxu0 0
    %4254 = vmatprep.subr.bf16.mxu0 0
    %4255 = vmatpush1.bf16.msra.mxu0 0
    %4256 = vmatprep.mubr.bf16.mxu0 0
    %4257 = vmatmul.mubr.bf16.gmra.mrb[0].mxu0 %v4152
    %v4258 = vpop.f32.mrb[0].mxu0
    %v4259 = vadd.f32 %v4174, %v4258
    %v4260 = vpop.f32.mrb[0].mxu0
    %v4261 = vpop.f32.mrb[0].mxu0
    %v4262 = vpop.f32.mrb[0].mxu0
    %4263 = vdwg.mxu0
    %4264 = vst [vmem:[#allocation17] sm:$0xff] %v4259
    // Predicated region
    $region74: #{tpu_custom_call.1} parent=1 // pred_check
      _
    $region75: #{tpu_custom_call.1} parent=1 // pred_check_branch
      %4266 = sbr.rel (0) target = $region77
    $region76: #{tpu_custom_call.1} parent=1 // pred_region
      %s4268 = ssub.s32 128, 128
      %4269 = vsyncadd [#allocation4], %s4268
      %s4271 = sshll.u32 [#allocation17], 4
      %s4272 = int_to_ptr.vmem [resolvable:$true] %s4271
      %4274 = dma.vmem_to_hbm [thread:$0]  %s4272, 128, %s9, [#allocation4]
    $region77: #{tpu_custom_call.1} parent=1 // pred_fallthru
      _
    // Predicated region
    $region78: #{tpu_custom_call.1} parent=1 // pred_check
      _
    $region79: #{tpu_custom_call.1} parent=1 // pred_check_branch
      %4276 = sbr.rel (0) target = $region81
    $region80: #{tpu_custom_call.1} parent=1 // pred_region
      %4277 = dma.done [#allocation4], 128
    $region81: #{tpu_custom_call.1} parent=1 // pred_fallthru
      _
    %4278 = vsyncpa [#allocation3], 1
    %4279 = vsyncpa [#allocation6], 1
    %4280 = vsyncpa [#allocation9], 1
    %4281 = vsyncpa [#allocation12], 1
    %4282 = vsyncpa [#allocation15], 1
    %4283 = vsyncpa [#allocation4], 1

</llo_original>
